<compile_context>
chip_gen: v6e
topology: v6e:2x2x1
jax: 0.10.0
libtpu: 0.0.40
codegen_flags: <defaults>
</compile_context>

<pallas_src>
import functools

import jax
import jax.numpy as jnp
from jax import lax
from jax.experimental import pallas as pl
from jax.experimental.pallas import tpu as pltpu

BN_EPS = 1e-3


# ----------------------------------------------------------------------------
# Pallas kernels
# ----------------------------------------------------------------------------
def _mm_bn_kernel(x_ref, w_ref, s_ref, b_ref, o_ref, *, relu):
    """[optional ReLU] -> bf16 MXU matmul (block-diagonal weight) -> scale/bias."""
    x = x_ref[...]
    if relu:
        x = jnp.maximum(x, 0.0)
    y = jnp.dot(x.astype(jnp.bfloat16), w_ref[...],
                preferred_element_type=jnp.float32)
    o_ref[...] = y * s_ref[...] + b_ref[...]


def _matmul_bn(x, w, s, b, tm, relu):
    M, K = x.shape
    Kw, Nc = w.shape
    kern = functools.partial(_mm_bn_kernel, relu=relu)
    return pl.pallas_call(
        kern,
        out_shape=jax.ShapeDtypeStruct((M, Nc), jnp.float32),
        grid=(M // tm,),
        in_specs=[
            pl.BlockSpec((tm, K), lambda i: (i, 0)),
            pl.BlockSpec((Kw, Nc), lambda i: (0, 0)),
            pl.BlockSpec((1, Nc), lambda i: (0, 0)),
            pl.BlockSpec((1, Nc), lambda i: (0, 0)),
        ],
        out_specs=pl.BlockSpec((tm, Nc), lambda i: (i, 0)),
        compiler_params=pltpu.CompilerParams(dimension_semantics=("parallel",)),
    )(x, w, s, b)


def _dw_kernel(x_ref, w_ref, o_ref, pad_ref, *, H, W):
    """Fused ReLU + depthwise 5x5 stencil over all 5 branches (lane-packed).

    3x3 filters are zero-embedded in the 5x5 taps.  Zero padding is built in
    a VMEM scratch (no XLA pad round trip).  Accumulation in f32.
    """
    pad_ref[...] = jnp.zeros_like(pad_ref)
    pad_ref[2:2 + H, 2:2 + W, :] = jnp.maximum(x_ref[0], 0.0)
    acc = pad_ref[0:H, 0:W, :] * w_ref[0:1, :]
    for t in range(1, 25):
        dy, dx = t // 5, t % 5
        acc = acc + pad_ref[dy:dy + H, dx:dx + W, :] * w_ref[t:t + 1, :]
    o_ref[0] = acc


def _depthwise(src, taps, H, W):
    """src: (N, H, W, G*C) branch-lane-packed; taps: (25, G*C)."""
    N = src.shape[0]
    GC = src.shape[-1]
    kern = functools.partial(_dw_kernel, H=H, W=W)
    return pl.pallas_call(
        kern,
        out_shape=jax.ShapeDtypeStruct((N, H, W, GC), jnp.float32),
        grid=(N,),
        in_specs=[
            pl.BlockSpec((1, H, W, GC), lambda n: (n, 0, 0, 0)),
            pl.BlockSpec((25, GC), lambda n: (0, 0)),
        ],
        out_specs=pl.BlockSpec((1, H, W, GC), lambda n: (n, 0, 0, 0)),
        scratch_shapes=[pltpu.VMEM((H + 4, W + 4, GC), jnp.float32)],
        compiler_params=pltpu.CompilerParams(dimension_semantics=("parallel",)),
    )(src, taps)


def _final_kernel(y_ref, b_ref, inv_ref, o_ref, pad_ref, *, H, W, C):
    """Separable 3x3 avgpools (count_include_pad=False), residual adds, concat.

    y_ref: (1, H, W, 2C) = [x_right | x_left];  b_ref: (1, H, W, 5C) branches.
    Output stored once, full width 6C.
    """
    y = y_ref[0]
    pad_ref[...] = jnp.zeros_like(pad_ref)
    pad_ref[1:1 + H, 1:1 + W, :] = y
    # separable 3x3 sum: 3 row-sums then 3 column-sums
    rs = pad_ref[0:H, :, :] + pad_ref[1:1 + H, :, :] + pad_ref[2:2 + H, :, :]
    ap = (rs[:, 0:W, :] + rs[:, 1:1 + W, :] + rs[:, 2:2 + W, :]) * inv_ref[...]

    xr = y[:, :, 0:C]
    xl = y[:, :, C:2 * C]
    b = b_ref[0]
    out = jnp.concatenate([
        xl,                                          # x_left
        b[:, :, 0:C] + b[:, :, C:2 * C],             # comb_iter_0
        b[:, :, 2 * C:3 * C] + b[:, :, 3 * C:4 * C],  # comb_iter_1
        ap[:, :, 0:C] + xl,                          # comb_iter_2
        2.0 * ap[:, :, C:2 * C],                     # comb_iter_3 (two equal pools)
        b[:, :, 4 * C:5 * C] + xr,                   # comb_iter_4
    ], axis=-1)
    o_ref[0] = out


def _final(ysp, bsp, inv, C):
    N, H, W, _ = ysp.shape
    kern = functools.partial(_final_kernel, H=H, W=W, C=C)
    return pl.pallas_call(
        kern,
        out_shape=jax.ShapeDtypeStruct((N, H, W, 6 * C), jnp.float32),
        grid=(N,),
        in_specs=[
            pl.BlockSpec((1, H, W, 2 * C), lambda n: (n, 0, 0, 0)),
            pl.BlockSpec((1, H, W, 5 * C), lambda n: (n, 0, 0, 0)),
            pl.BlockSpec((H, W, 1), lambda n: (0, 0, 0)),
        ],
        out_specs=pl.BlockSpec((1, H, W, 6 * C), lambda n: (n, 0, 0, 0)),
        scratch_shapes=[pltpu.VMEM((H + 2, W + 2, 2 * C), jnp.float32)],
        compiler_params=pltpu.CompilerParams(dimension_semantics=("parallel",)),
    )(ysp, bsp, inv)


# ----------------------------------------------------------------------------
# Parameters (PyTorch layouts) + one-time TPU-friendly prep
# ----------------------------------------------------------------------------
def init_params(key, icl, ocl, icr, ocr):
    ks = iter(jax.random.split(key, 128))

    def conv_w(co, ci, kh, kw):
        return 0.3 * jax.random.normal(next(ks), (co, ci, kh, kw), jnp.float32)

    def bn(c):
        gamma = 1.0 + 0.1 * jax.random.normal(next(ks), (c,), jnp.float32)
        beta = 0.2 * jax.random.normal(next(ks), (c,), jnp.float32)
        mean = 0.2 * jax.random.normal(next(ks), (c,), jnp.float32)
        var = jax.random.uniform(next(ks), (c,), jnp.float32, minval=0.5, maxval=1.5)
        return (gamma, beta, mean, var)

    p = {
        "conv1x1_w": conv_w(ocr, icr, 1, 1), "conv1x1_bn": bn(ocr),
        "path1_w": conv_w(ocl, icl, 1, 1),
        "path2_w": conv_w(ocl, icl, 1, 1),
        "final_path_bn": bn(2 * ocl),
    }
    C = ocr
    branches = []
    # [comb0_left(5), comb0_right(3), comb1_left(5), comb1_right(3), comb4_left(3)]
    for k in (5, 3, 5, 3, 3):
        branches.append({
            "k": k, "pad": k // 2,
            "dw1": conv_w(C, 1, k, k), "pw1": conv_w(C, C, 1, 1), "bn1": bn(C),
            "dw2": conv_w(C, 1, k, k), "pw2": conv_w(C, C, 1, 1), "bn2": bn(C),
        })
    p["branches"] = branches
    return p


def _fold_bn(bn):
    gamma, beta, mean, var = bn
    s = gamma / jnp.sqrt(var + BN_EPS)
    return s.astype(jnp.float32), (beta - mean * s).astype(jnp.float32)


def prepare_params(p):
    C = p["conv1x1_w"].shape[0]          # out_channels_right
    ocl = p["path1_w"].shape[0]
    icr = p["conv1x1_w"].shape[1]
    icl = p["path1_w"].shape[1]
    bf = jnp.bfloat16
    assert 2 * ocl == C, "FirstCell requires out_channels_right == 2*out_channels_left"

    sr, br = _fold_bn(p["conv1x1_bn"])
    sl, bl = _fold_bn(p["final_path_bn"])

    # Fused stem: block-diagonal (icr + 2*icl, C + 2*ocl) weight.
    Kst, Nst = icr + 2 * icl, C + 2 * ocl
    w_stem = jnp.zeros((Kst, Nst), jnp.float32)
    w_stem = w_stem.at[0:icr, 0:C].set(p["conv1x1_w"][:, :, 0, 0].T)
    w_stem = w_stem.at[icr:icr + icl, C:C + ocl].set(p["path1_w"][:, :, 0, 0].T)
    w_stem = w_stem.at[icr + icl:Kst, C + ocl:Nst].set(p["path2_w"][:, :, 0, 0].T)
    s_stem = jnp.concatenate([sr, sl]).reshape(1, Nst)
    b_stem = jnp.concatenate([br, bl]).reshape(1, Nst)

    def dw_to_5x5(w, k):
        t = jnp.transpose(w[:, 0, :, :], (1, 2, 0))          # (k, k, C)
        off = (5 - k) // 2
        full = jnp.zeros((5, 5, C), jnp.float32).at[off:off + k, off:off + k, :].set(t)
        return full.reshape(25, C)

    G = len(p["branches"])
    dw1, dw2 = [], []
    pw1 = jnp.zeros((G * C, G * C), jnp.float32)
    pw2 = jnp.zeros((G * C, G * C), jnp.float32)
    s1, b1, s2, b2 = [], [], [], []
    for g, bp in enumerate(p["branches"]):
        dw1.append(dw_to_5x5(bp["dw1"], bp["k"]))
        dw2.append(dw_to_5x5(bp["dw2"], bp["k"]))
        pw1 = pw1.at[g * C:(g + 1) * C, g * C:(g + 1) * C].set(bp["pw1"][:, :, 0, 0].T)
        pw2 = pw2.at[g * C:(g + 1) * C, g * C:(g + 1) * C].set(bp["pw2"][:, :, 0, 0].T)
        s, b = _fold_bn(bp["bn1"]); s1.append(s); b1.append(b)
        s, b = _fold_bn(bp["bn2"]); s2.append(s); b2.append(b)

    return {
        "w_stem": w_stem.astype(bf), "s_stem": s_stem, "b_stem": b_stem,
        "dw1": jnp.concatenate(dw1, axis=1),   # (25, G*C)
        "dw2": jnp.concatenate(dw2, axis=1),
        "pw1": pw1.astype(bf), "pw2": pw2.astype(bf),
        "s1": jnp.concatenate(s1).reshape(1, G * C),
        "b1": jnp.concatenate(b1).reshape(1, G * C),
        "s2": jnp.concatenate(s2).reshape(1, G * C),
        "b2": jnp.concatenate(b2).reshape(1, G * C),
    }


def _avgpool_inv_count(H, W):
    ones = jnp.ones((H, W), jnp.float32)
    op = jnp.pad(ones, ((1, 1), (1, 1)))
    cnt = sum(op[dy:dy + H, dx:dx + W] for dy in range(3) for dx in range(3))
    return (1.0 / cnt).reshape(H, W, 1)


def _pick_tm(M, cap=2048):
    """Largest divisor of M (<=cap, multiple of 8 unless == M); prefer >=2 steps."""
    best = None
    for t in range(min(cap, M), 0, -1):
        if M % t:
            continue
        if t % 8 and t != M:
            continue
        if best is None:
            best = t
        if M // t >= 2:          # >=2 grid steps (v7x megacore)
            return t
    return best if best is not None else M


# ----------------------------------------------------------------------------
# FirstCell forward (Pallas)
# ----------------------------------------------------------------------------
def first_cell_forward(x_nchw, xprev_nchw, kp):
    x = jnp.transpose(x_nchw, (0, 2, 3, 1)).astype(jnp.float32)       # (N,H,W,icr)
    xp = jnp.transpose(xprev_nchw, (0, 2, 3, 1)).astype(jnp.float32)  # (N,2H,2W,icl)
    N, H, W, _ = x.shape
    C = kp["s1"].shape[1] // 5
    M = N * H * W
    tm = _pick_tm(M)

    # path_1 / path_2 "avgpool(1, stride=2)" == strided subsampling.
    xp1 = xp[:, ::2, ::2, :]
    xp2 = jnp.pad(xp, ((0, 0), (0, 1), (0, 1), (0, 0)))[:, 1:, 1:, :][:, ::2, ::2, :]
    x_stem = jnp.concatenate([x, xp1, xp2], axis=-1).reshape(M, -1)   # (M, icr+2*icl)

    # Fused stem: one matmul -> [x_right | x_left] (width 2C), ReLU in-kernel.
    y = _matmul_bn(x_stem, kp["w_stem"], kp["s_stem"], kp["b_stem"], tm, relu=True)
    ysp = y.reshape(N, H, W, 2 * C)
    xr, xl = ysp[..., :C], ysp[..., C:]

    # Stage 1: branch-lane-packed depthwise + one block-diagonal pointwise.
    src1 = jnp.concatenate([xr, xl, xl, xl, xr], axis=-1)             # (N,H,W,5C)
    d1 = _depthwise(src1, kp["dw1"], H, W)
    p1 = _matmul_bn(d1.reshape(M, 5 * C), kp["pw1"], kp["s1"], kp["b1"], tm, relu=False)

    # Stage 2 (each branch consumes its own stage-1 output: already lane-aligned).
    d2 = _depthwise(p1.reshape(N, H, W, 5 * C), kp["dw2"], H, W)
    p2 = _matmul_bn(d2.reshape(M, 5 * C), kp["pw2"], kp["s2"], kp["b2"], tm, relu=False)

    # Fused avgpools + residual adds + 6-way concat.
    out = _final(ysp, p2.reshape(N, H, W, 5 * C), _avgpool_inv_count(H, W), C)
    return jnp.transpose(out, (0, 3, 1, 2))                           # NCHW


# ----------------------------------------------------------------------------
# Pure-JAX reference (f32, lax convs, HIGHEST precision) for verification
# ----------------------------------------------------------------------------
def _bn_apply(y, bn):
    s, b = _fold_bn(bn)
    return y * s + b


def _ref_conv1x1(x, w_oihw):
    w = jnp.transpose(w_oihw, (2, 3, 1, 0))
    return lax.conv_general_dilated(x, w, (1, 1), [(0, 0), (0, 0)],
                                    dimension_numbers=("NHWC", "HWIO", "NHWC"),
                                    precision=lax.Precision.HIGHEST)


def _ref_dwconv(x, w_dw, pad):
    Cc = x.shape[-1]
    w = jnp.transpose(w_dw, (2, 3, 1, 0))   # (k, k, 1, C)
    return lax.conv_general_dilated(x, w, (1, 1), [(pad, pad), (pad, pad)],
                                    dimension_numbers=("NHWC", "HWIO", "NHWC"),
                                    feature_group_count=Cc,
                                    precision=lax.Precision.HIGHEST)


def _ref_branch_sep(x, bp):
    y = jnp.maximum(x, 0.0)
    y = _ref_dwconv(y, bp["dw1"], bp["pad"])
    y = _bn_apply(_ref_conv1x1(y, bp["pw1"]), bp["bn1"])
    y = jnp.maximum(y, 0.0)
    y = _ref_dwconv(y, bp["dw2"], bp["pad"])
    return _bn_apply(_ref_conv1x1(y, bp["pw2"]), bp["bn2"])


def _ref_avgpool3(x):
    pads = [(0, 0), (1, 1), (1, 1), (0, 0)]
    s = lax.reduce_window(x, 0.0, lax.add, (1, 3, 3, 1), (1, 1, 1, 1), pads)
    c = lax.reduce_window(jnp.ones_like(x), 0.0, lax.add, (1, 3, 3, 1), (1, 1, 1, 1), pads)
    return s / c


def first_cell_reference(x_nchw, xprev_nchw, p):
    x = jnp.transpose(x_nchw, (0, 2, 3, 1)).astype(jnp.float32)
    xp = jnp.transpose(xprev_nchw, (0, 2, 3, 1)).astype(jnp.float32)

    x_relu = jnp.maximum(xp, 0.0)
    x_path1 = _ref_conv1x1(x_relu[:, ::2, ::2, :], p["path1_w"])
    xp2 = jnp.pad(x_relu, ((0, 0), (0, 1), (0, 1), (0, 0)))[:, 1:, 1:, :][:, ::2, ::2, :]
    x_path2 = _ref_conv1x1(xp2, p["path2_w"])
    x_left = _bn_apply(jnp.concatenate([x_path1, x_path2], -1), p["final_path_bn"])

    x_right = _bn_apply(_ref_conv1x1(jnp.maximum(x, 0.0), p["conv1x1_w"]),
                        p["conv1x1_bn"])

    bs_in = [x_right, x_left, x_left, x_left, x_right]
    bs = [_ref_branch_sep(xi, p["branches"][i]) for i, xi in enumerate(bs_in)]

    c0 = bs[0] + bs[1]
    c1 = bs[2] + bs[3]
    c2 = _ref_avgpool3(x_right) + x_left
    c3 = _ref_avgpool3(x_left) + _ref_avgpool3(x_left)
    c4 = bs[4] + x_right
    out = jnp.concatenate([x_left, c0, c1, c2, c3, c4], -1)
    return jnp.transpose(out, (0, 3, 1, 2))


# ----------------------------------------------------------------------------
if __name__ == "__main__":
    key = jax.random.PRNGKey(0)
    k1, k2, k3 = jax.random.split(key, 3)

    # FirstCell(in_channels_left=16, out_channels_left=8,
    #           in_channels_right=16, out_channels_right=16)
    icl, ocl, icr, ocr = 16, 8, 16, 16
    N, H, W = 2, 8, 8
    x = jax.random.normal(k1, (N, icr, H, W), jnp.float32)
    x_prev = jax.random.normal(k2, (N, icl, 2 * H, 2 * W), jnp.float32)

    params = init_params(k3, icl, ocl, icr, ocr)
    kp = prepare_params(params)

    fwd = jax.jit(first_cell_forward)
    out = jax.block_until_ready(fwd(x, x_prev, kp))

    ref = jax.block_until_ready(first_cell_reference(x, x_prev, params))
    assert out.shape == (N, 6 * ocr, H, W), out.shape
    max_err = float(jnp.max(jnp.abs(out - ref)))
    assert jnp.allclose(out, ref, rtol=3e-2, atol=3e-2), max_err

    print("KERNEL_OK")
</pallas_src>

<mosaic_0001>
module attributes {stable_mosaic.version = 11 : i64} {
  func.func @_mm_bn_kernel(%arg0: i32, %arg1: memref<64x48xf32, #tpu.memory_space<vmem>>, %arg2: memref<48x32xbf16, #tpu.memory_space<vmem>>, %arg3: memref<1x32xf32, #tpu.memory_space<vmem>>, %arg4: memref<1x32xf32, #tpu.memory_space<vmem>>, %arg5: memref<64x32xf32, #tpu.memory_space<vmem>>) attributes {dimension_semantics = [#tpu.dimension_semantics<parallel>], iteration_bounds = array<i64: 2>, scalar_prefetch = 0 : i64, scratch_operands = 0 : i64, tpu.core_type = #tpu.core_type<tc>, window_params = [{transform_indices = @transform_0, window_bounds = array<i64: 64, 48>}, {pipeline_mode = #tpu.pipeline_mode<synchronous>, transform_indices = @transform_1, window_bounds = array<i64: 48, 32>}, {pipeline_mode = #tpu.pipeline_mode<synchronous>, transform_indices = @transform_2, window_bounds = array<i64: 1, 32>}, {pipeline_mode = #tpu.pipeline_mode<synchronous>, transform_indices = @transform_3, window_bounds = array<i64: 1, 32>}, {transform_indices = @transform_4, window_bounds = array<i64: 64, 32>}]} {
    %c0 = arith.constant 0 : index
    %c0_0 = arith.constant 0 : index
    %0 = vector.load %arg1[%c0, %c0_0] : memref<64x48xf32, #tpu.memory_space<vmem>>, vector<64x48xf32>
    %cst = arith.constant 0.000000e+00 : f32
    %1 = vector.broadcast %cst : f32 to vector<64x48xf32>
    %2 = arith.maximumf %0, %1 : vector<64x48xf32>
    %3 = arith.truncf %2 : vector<64x48xf32> to vector<64x48xbf16>
    %c0_1 = arith.constant 0 : index
    %c0_2 = arith.constant 0 : index
    %4 = vector.load %arg2[%c0_1, %c0_2] : memref<48x32xbf16, #tpu.memory_space<vmem>>, vector<48x32xbf16>
    %cst_3 = arith.constant dense<0.000000e+00> : vector<64x32xf32>
    %5 = tpu.matmul %3, %4, %cst_3 {dimension_numbers = #tpu.dot_dimension_numbers<[1], [0], [0], [1], [0, 0, 1, 1], [], []>} : vector<64x48xbf16>, vector<48x32xbf16>, vector<64x32xf32> -> vector<64x32xf32>
    %c0_4 = arith.constant 0 : index
    %c0_5 = arith.constant 0 : index
    %6 = vector.load %arg3[%c0_4, %c0_5] : memref<1x32xf32, #tpu.memory_space<vmem>>, vector<1x32xf32>
    %7 = vector.broadcast %6 : vector<1x32xf32> to vector<64x32xf32>
    %8 = arith.mulf %5, %7 : vector<64x32xf32>
    %c0_6 = arith.constant 0 : index
    %c0_7 = arith.constant 0 : index
    %9 = vector.load %arg4[%c0_6, %c0_7] : memref<1x32xf32, #tpu.memory_space<vmem>>, vector<1x32xf32>
    %10 = vector.broadcast %9 : vector<1x32xf32> to vector<64x32xf32>
    %11 = arith.addf %8, %10 : vector<64x32xf32>
    %c0_8 = arith.constant 0 : index
    %c0_9 = arith.constant 0 : index
    %12 = vector.load %arg5[%c0_8, %c0_9] : memref<64x32xf32, #tpu.memory_space<vmem>>, vector<64x32xf32>
    tpu.vector_store %arg5[%c0_8, %c0_9], %11 {strides = array<i32>} : memref<64x32xf32, #tpu.memory_space<vmem>>, vector<64x32xf32>,
    return
  }
  func.func @transform_0(%arg0: i32) -> (i32, i32) {
    %c0_i32 = arith.constant 0 : i32
    %c0_i32_0 = arith.constant 0 : i32
    return %arg0, %c0_i32 : i32, i32
  }
  func.func @transform_1(%arg0: i32) -> (i32, i32) {
    %c0_i32 = arith.constant 0 : i32
    %c0_i32_0 = arith.constant 0 : i32
    %c0_i32_1 = arith.constant 0 : i32
    return %c0_i32, %c0_i32_0 : i32, i32
  }
  func.func @transform_2(%arg0: i32) -> (i32, i32) {
    %c0_i32 = arith.constant 0 : i32
    %c0_i32_0 = arith.constant 0 : i32
    %c0_i32_1 = arith.constant 0 : i32
    return %c0_i32, %c0_i32_0 : i32, i32
  }
  func.func @transform_3(%arg0: i32) -> (i32, i32) {
    %c0_i32 = arith.constant 0 : i32
    %c0_i32_0 = arith.constant 0 : i32
    %c0_i32_1 = arith.constant 0 : i32
    return %c0_i32, %c0_i32_0 : i32, i32
  }
  func.func @transform_4(%arg0: i32) -> (i32, i32) {
    %c0_i32 = arith.constant 0 : i32
    %c0_i32_0 = arith.constant 0 : i32
    return %arg0, %c0_i32 : i32, i32
  }
}

module attributes {stable_mosaic.version = 11 : i64} {
  func.func @_mm_bn_kernel(%arg0: i32, %arg1: memref<64x80xf32, #tpu.memory_space<vmem>>, %arg2: memref<80x80xbf16, #tpu.memory_space<vmem>>, %arg3: memref<1x80xf32, #tpu.memory_space<vmem>>, %arg4: memref<1x80xf32, #tpu.memory_space<vmem>>, %arg5: memref<64x80xf32, #tpu.memory_space<vmem>>) attributes {dimension_semantics = [#tpu.dimension_semantics<parallel>], iteration_bounds = array<i64: 2>, scalar_prefetch = 0 : i64, scratch_operands = 0 : i64, tpu.core_type = #tpu.core_type<tc>, window_params = [{transform_indices = @transform_0, window_bounds = array<i64: 64, 80>}, {pipeline_mode = #tpu.pipeline_mode<synchronous>, transform_indices = @transform_1, window_bounds = array<i64: 80, 80>}, {pipeline_mode = #tpu.pipeline_mode<synchronous>, transform_indices = @transform_2, window_bounds = array<i64: 1, 80>}, {pipeline_mode = #tpu.pipeline_mode<synchronous>, transform_indices = @transform_3, window_bounds = array<i64: 1, 80>}, {transform_indices = @transform_4, window_bounds = array<i64: 64, 80>}]} {
    %c0 = arith.constant 0 : index
    %c0_0 = arith.constant 0 : index
    %0 = vector.load %arg1[%c0, %c0_0] : memref<64x80xf32, #tpu.memory_space<vmem>>, vector<64x80xf32>
    %1 = arith.truncf %0 : vector<64x80xf32> to vector<64x80xbf16>
    %c0_1 = arith.constant 0 : index
    %c0_2 = arith.constant 0 : index
    %2 = vector.load %arg2[%c0_1, %c0_2] : memref<80x80xbf16, #tpu.memory_space<vmem>>, vector<80x80xbf16>
    %cst = arith.constant dense<0.000000e+00> : vector<64x80xf32>
    %3 = tpu.matmul %1, %2, %cst {dimension_numbers = #tpu.dot_dimension_numbers<[1], [0], [0], [1], [0, 0, 1, 1], [], []>} : vector<64x80xbf16>, vector<80x80xbf16>, vector<64x80xf32> -> vector<64x80xf32>
    %c0_3 = arith.constant 0 : index
    %c0_4 = arith.constant 0 : index
    %4 = vector.load %arg3[%c0_3, %c0_4] : memref<1x80xf32, #tpu.memory_space<vmem>>, vector<1x80xf32>
    %5 = vector.broadcast %4 : vector<1x80xf32> to vector<64x80xf32>
    %6 = arith.mulf %3, %5 : vector<64x80xf32>
    %c0_5 = arith.constant 0 : index
    %c0_6 = arith.constant 0 : index
    %7 = vector.load %arg4[%c0_5, %c0_6] : memref<1x80xf32, #tpu.memory_space<vmem>>, vector<1x80xf32>
    %8 = vector.broadcast %7 : vector<1x80xf32> to vector<64x80xf32>
    %9 = arith.addf %6, %8 : vector<64x80xf32>
    %c0_7 = arith.constant 0 : index
    %c0_8 = arith.constant 0 : index
    %10 = vector.load %arg5[%c0_7, %c0_8] : memref<64x80xf32, #tpu.memory_space<vmem>>, vector<64x80xf32>
    tpu.vector_store %arg5[%c0_7, %c0_8], %9 {strides = array<i32>} : memref<64x80xf32, #tpu.memory_space<vmem>>, vector<64x80xf32>,
    return
  }
  func.func @transform_0(%arg0: i32) -> (i32, i32) {
    %c0_i32 = arith.constant 0 : i32
    %c0_i32_0 = arith.constant 0 : i32
    return %arg0, %c0_i32 : i32, i32
  }
  func.func @transform_1(%arg0: i32) -> (i32, i32) {
    %c0_i32 = arith.constant 0 : i32
    %c0_i32_0 = arith.constant 0 : i32
    %c0_i32_1 = arith.constant 0 : i32
    return %c0_i32, %c0_i32_0 : i32, i32
  }
  func.func @transform_2(%arg0: i32) -> (i32, i32) {
    %c0_i32 = arith.constant 0 : i32
    %c0_i32_0 = arith.constant 0 : i32
    %c0_i32_1 = arith.constant 0 : i32
    return %c0_i32, %c0_i32_0 : i32, i32
  }
  func.func @transform_3(%arg0: i32) -> (i32, i32) {
    %c0_i32 = arith.constant 0 : i32
    %c0_i32_0 = arith.constant 0 : i32
    %c0_i32_1 = arith.constant 0 : i32
    return %c0_i32, %c0_i32_0 : i32, i32
  }
  func.func @transform_4(%arg0: i32) -> (i32, i32) {
    %c0_i32 = arith.constant 0 : i32
    %c0_i32_0 = arith.constant 0 : i32
    return %arg0, %c0_i32 : i32, i32
  }
}

module attributes {stable_mosaic.version = 11 : i64} {
  func.func @_dw_kernel(%arg0: i32, %arg1: memref<1x8x8x80xf32, #tpu.memory_space<vmem>>, %arg2: memref<25x80xf32, #tpu.memory_space<vmem>>, %arg3: memref<1x8x8x80xf32, #tpu.memory_space<vmem>>, %arg4: memref<12x12x80xf32, #tpu.memory_space<vmem>>) attributes {dimension_semantics = [#tpu.dimension_semantics<parallel>], iteration_bounds = array<i64: 2>, scalar_prefetch = 0 : i64, scratch_operands = 1 : i64, tpu.core_type = #tpu.core_type<tc>, window_params = [{transform_indices = @transform_0, window_bounds = array<i64: 1, 8, 8, 80>}, {pipeline_mode = #tpu.pipeline_mode<synchronous>, transform_indices = @transform_1, window_bounds = array<i64: 25, 80>}, {transform_indices = @transform_2, window_bounds = array<i64: 1, 8, 8, 80>}]} {
    %cst = arith.constant 0.000000e+00 : f32
    %0 = vector.broadcast %cst : f32 to vector<12x12x80xf32>
    %c0 = arith.constant 0 : index
    %c0_0 = arith.constant 0 : index
    %c0_1 = arith.constant 0 : index
    %1 = vector.load %arg4[%c0, %c0_0, %c0_1] : memref<12x12x80xf32, #tpu.memory_space<vmem>>, vector<12x12x80xf32>
    tpu.vector_store %arg4[%c0, %c0_0, %c0_1], %0 {strides = array<i32>} : memref<12x12x80xf32, #tpu.memory_space<vmem>>, vector<12x12x80xf32>,
    %c0_2 = arith.constant 0 : index
    %c0_3 = arith.constant 0 : index
    %c0_4 = arith.constant 0 : index
    %c0_5 = arith.constant 0 : index
    %2 = vector.load %arg1[%c0_2, %c0_3, %c0_4, %c0_5] : memref<1x8x8x80xf32, #tpu.memory_space<vmem>>, vector<1x8x8x80xf32>
    %3 = vector.shape_cast %2 : vector<1x8x8x80xf32> to vector<8x8x80xf32>
    %cst_6 = arith.constant 0.000000e+00 : f32
    %4 = vector.broadcast %cst_6 : f32 to vector<8x8x80xf32>
    %5 = arith.maximumf %3, %4 : vector<8x8x80xf32>
    %c2 = arith.constant 2 : index
    %c2_7 = arith.constant 2 : index
    %c0_8 = arith.constant 0 : index
    %6 = vector.load %arg4[%c2, %c2_7, %c0_8] : memref<12x12x80xf32, #tpu.memory_space<vmem>>, vector<8x8x80xf32>
    tpu.vector_store %arg4[%c2, %c2_7, %c0_8], %5 {strides = array<i32>} : memref<12x12x80xf32, #tpu.memory_space<vmem>>, vector<8x8x80xf32>,
    %c0_9 = arith.constant 0 : index
    %c0_10 = arith.constant 0 : index
    %c0_11 = arith.constant 0 : index
    %7 = vector.load %arg4[%c0_9, %c0_10, %c0_11] : memref<12x12x80xf32, #tpu.memory_space<vmem>>, vector<8x8x80xf32>
    %c0_12 = arith.constant 0 : index
    %c0_13 = arith.constant 0 : index
    %8 = vector.load %arg2[%c0_12, %c0_13] : memref<25x80xf32, #tpu.memory_space<vmem>>, vector<1x80xf32>
    %9 = vector.shape_cast %8 : vector<1x80xf32> to vector<1x1x80xf32>
    %10 = vector.broadcast %9 : vector<1x1x80xf32> to vector<8x8x80xf32>
    %11 = arith.mulf %7, %10 : vector<8x8x80xf32>
    %c0_14 = arith.constant 0 : index
    %c1 = arith.constant 1 : index
    %c0_15 = arith.constant 0 : index
    %12 = vector.load %arg4[%c0_14, %c1, %c0_15] : memref<12x12x80xf32, #tpu.memory_space<vmem>>, vector<8x8x80xf32>
    %c1_16 = arith.constant 1 : index
    %c0_17 = arith.constant 0 : index
    %13 = vector.load %arg2[%c1_16, %c0_17] : memref<25x80xf32, #tpu.memory_space<vmem>>, vector<1x80xf32>
    %14 = vector.shape_cast %13 : vector<1x80xf32> to vector<1x1x80xf32>
    %15 = vector.broadcast %14 : vector<1x1x80xf32> to vector<8x8x80xf32>
    %16 = arith.mulf %12, %15 : vector<8x8x80xf32>
    %17 = arith.addf %11, %16 : vector<8x8x80xf32>
    %c0_18 = arith.constant 0 : index
    %c2_19 = arith.constant 2 : index
    %c0_20 = arith.constant 0 : index
    %18 = vector.load %arg4[%c0_18, %c2_19, %c0_20] : memref<12x12x80xf32, #tpu.memory_space<vmem>>, vector<8x8x80xf32>
    %c2_21 = arith.constant 2 : index
    %c0_22 = arith.constant 0 : index
    %19 = vector.load %arg2[%c2_21, %c0_22] : memref<25x80xf32, #tpu.memory_space<vmem>>, vector<1x80xf32>
    %20 = vector.shape_cast %19 : vector<1x80xf32> to vector<1x1x80xf32>
    %21 = vector.broadcast %20 : vector<1x1x80xf32> to vector<8x8x80xf32>
    %22 = arith.mulf %18, %21 : vector<8x8x80xf32>
    %23 = arith.addf %17, %22 : vector<8x8x80xf32>
    %c0_23 = arith.constant 0 : index
    %c3 = arith.constant 3 : index
    %c0_24 = arith.constant 0 : index
    %24 = vector.load %arg4[%c0_23, %c3, %c0_24] : memref<12x12x80xf32, #tpu.memory_space<vmem>>, vector<8x8x80xf32>
    %c3_25 = arith.constant 3 : index
    %c0_26 = arith.constant 0 : index
    %25 = vector.load %arg2[%c3_25, %c0_26] : memref<25x80xf32, #tpu.memory_space<vmem>>, vector<1x80xf32>
    %26 = vector.shape_cast %25 : vector<1x80xf32> to vector<1x1x80xf32>
    %27 = vector.broadcast %26 : vector<1x1x80xf32> to vector<8x8x80xf32>
    %28 = arith.mulf %24, %27 : vector<8x8x80xf32>
    %29 = arith.addf %23, %28 : vector<8x8x80xf32>
    %c0_27 = arith.constant 0 : index
    %c4 = arith.constant 4 : index
    %c0_28 = arith.constant 0 : index
    %30 = vector.load %arg4[%c0_27, %c4, %c0_28] : memref<12x12x80xf32, #tpu.memory_space<vmem>>, vector<8x8x80xf32>
    %c4_29 = arith.constant 4 : index
    %c0_30 = arith.constant 0 : index
    %31 = vector.load %arg2[%c4_29, %c0_30] : memref<25x80xf32, #tpu.memory_space<vmem>>, vector<1x80xf32>
    %32 = vector.shape_cast %31 : vector<1x80xf32> to vector<1x1x80xf32>
    %33 = vector.broadcast %32 : vector<1x1x80xf32> to vector<8x8x80xf32>
    %34 = arith.mulf %30, %33 : vector<8x8x80xf32>
    %35 = arith.addf %29, %34 : vector<8x8x80xf32>
    %c1_31 = arith.constant 1 : index
    %c0_32 = arith.constant 0 : index
    %c0_33 = arith.constant 0 : index
    %36 = vector.load %arg4[%c1_31, %c0_32, %c0_33] : memref<12x12x80xf32, #tpu.memory_space<vmem>>, vector<8x8x80xf32>
    %c5 = arith.constant 5 : index
    %c0_34 = arith.constant 0 : index
    %37 = vector.load %arg2[%c5, %c0_34] : memref<25x80xf32, #tpu.memory_space<vmem>>, vector<1x80xf32>
    %38 = vector.shape_cast %37 : vector<1x80xf32> to vector<1x1x80xf32>
    %39 = vector.broadcast %38 : vector<1x1x80xf32> to vector<8x8x80xf32>
    %40 = arith.mulf %36, %39 : vector<8x8x80xf32>
    %41 = arith.addf %35, %40 : vector<8x8x80xf32>
    %c1_35 = arith.constant 1 : index
    %c1_36 = arith.constant 1 : index
    %c0_37 = arith.constant 0 : index
    %42 = vector.load %arg4[%c1_35, %c1_36, %c0_37] : memref<12x12x80xf32, #tpu.memory_space<vmem>>, vector<8x8x80xf32>
    %c6 = arith.constant 6 : index
    %c0_38 = arith.constant 0 : index
    %43 = vector.load %arg2[%c6, %c0_38] : memref<25x80xf32, #tpu.memory_space<vmem>>, vector<1x80xf32>
    %44 = vector.shape_cast %43 : vector<1x80xf32> to vector<1x1x80xf32>
    %45 = vector.broadcast %44 : vector<1x1x80xf32> to vector<8x8x80xf32>
    %46 = arith.mulf %42, %45 : vector<8x8x80xf32>
    %47 = arith.addf %41, %46 : vector<8x8x80xf32>
    %c1_39 = arith.constant 1 : index
    %c2_40 = arith.constant 2 : index
    %c0_41 = arith.constant 0 : index
    %48 = vector.load %arg4[%c1_39, %c2_40, %c0_41] : memref<12x12x80xf32, #tpu.memory_space<vmem>>, vector<8x8x80xf32>
    %c7 = arith.constant 7 : index
    %c0_42 = arith.constant 0 : index
    %49 = vector.load %arg2[%c7, %c0_42] : memref<25x80xf32, #tpu.memory_space<vmem>>, vector<1x80xf32>
    %50 = vector.shape_cast %49 : vector<1x80xf32> to vector<1x1x80xf32>
    %51 = vector.broadcast %50 : vector<1x1x80xf32> to vector<8x8x80xf32>
    %52 = arith.mulf %48, %51 : vector<8x8x80xf32>
    %53 = arith.addf %47, %52 : vector<8x8x80xf32>
    %c1_43 = arith.constant 1 : index
    %c3_44 = arith.constant 3 : index
    %c0_45 = arith.constant 0 : index
    %54 = vector.load %arg4[%c1_43, %c3_44, %c0_45] : memref<12x12x80xf32, #tpu.memory_space<vmem>>, vector<8x8x80xf32>
    %c8 = arith.constant 8 : index
    %c0_46 = arith.constant 0 : index
    %55 = vector.load %arg2[%c8, %c0_46] : memref<25x80xf32, #tpu.memory_space<vmem>>, vector<1x80xf32>
    %56 = vector.shape_cast %55 : vector<1x80xf32> to vector<1x1x80xf32>
    %57 = vector.broadcast %56 : vector<1x1x80xf32> to vector<8x8x80xf32>
    %58 = arith.mulf %54, %57 : vector<8x8x80xf32>
    %59 = arith.addf %53, %58 : vector<8x8x80xf32>
    %c1_47 = arith.constant 1 : index
    %c4_48 = arith.constant 4 : index
    %c0_49 = arith.constant 0 : index
    %60 = vector.load %arg4[%c1_47, %c4_48, %c0_49] : memref<12x12x80xf32, #tpu.memory_space<vmem>>, vector<8x8x80xf32>
    %c9 = arith.constant 9 : index
    %c0_50 = arith.constant 0 : index
    %61 = vector.load %arg2[%c9, %c0_50] : memref<25x80xf32, #tpu.memory_space<vmem>>, vector<1x80xf32>
    %62 = vector.shape_cast %61 : vector<1x80xf32> to vector<1x1x80xf32>
    %63 = vector.broadcast %62 : vector<1x1x80xf32> to vector<8x8x80xf32>
    %64 = arith.mulf %60, %63 : vector<8x8x80xf32>
    %65 = arith.addf %59, %64 : vector<8x8x80xf32>
    %c2_51 = arith.constant 2 : index
    %c0_52 = arith.constant 0 : index
    %c0_53 = arith.constant 0 : index
    %66 = vector.load %arg4[%c2_51, %c0_52, %c0_53] : memref<12x12x80xf32, #tpu.memory_space<vmem>>, vector<8x8x80xf32>
    %c10 = arith.constant 10 : index
    %c0_54 = arith.constant 0 : index
    %67 = vector.load %arg2[%c10, %c0_54] : memref<25x80xf32, #tpu.memory_space<vmem>>, vector<1x80xf32>
    %68 = vector.shape_cast %67 : vector<1x80xf32> to vector<1x1x80xf32>
    %69 = vector.broadcast %68 : vector<1x1x80xf32> to vector<8x8x80xf32>
    %70 = arith.mulf %66, %69 : vector<8x8x80xf32>
    %71 = arith.addf %65, %70 : vector<8x8x80xf32>
    %c2_55 = arith.constant 2 : index
    %c1_56 = arith.constant 1 : index
    %c0_57 = arith.constant 0 : index
    %72 = vector.load %arg4[%c2_55, %c1_56, %c0_57] : memref<12x12x80xf32, #tpu.memory_space<vmem>>, vector<8x8x80xf32>
    %c11 = arith.constant 11 : index
    %c0_58 = arith.constant 0 : index
    %73 = vector.load %arg2[%c11, %c0_58] : memref<25x80xf32, #tpu.memory_space<vmem>>, vector<1x80xf32>
    %74 = vector.shape_cast %73 : vector<1x80xf32> to vector<1x1x80xf32>
    %75 = vector.broadcast %74 : vector<1x1x80xf32> to vector<8x8x80xf32>
    %76 = arith.mulf %72, %75 : vector<8x8x80xf32>
    %77 = arith.addf %71, %76 : vector<8x8x80xf32>
    %c2_59 = arith.constant 2 : index
    %c2_60 = arith.constant 2 : index
    %c0_61 = arith.constant 0 : index
    %78 = vector.load %arg4[%c2_59, %c2_60, %c0_61] : memref<12x12x80xf32, #tpu.memory_space<vmem>>, vector<8x8x80xf32>
    %c12 = arith.constant 12 : index
    %c0_62 = arith.constant 0 : index
    %79 = vector.load %arg2[%c12, %c0_62] : memref<25x80xf32, #tpu.memory_space<vmem>>, vector<1x80xf32>
    %80 = vector.shape_cast %79 : vector<1x80xf32> to vector<1x1x80xf32>
    %81 = vector.broadcast %80 : vector<1x1x80xf32> to vector<8x8x80xf32>
    %82 = arith.mulf %78, %81 : vector<8x8x80xf32>
    %83 = arith.addf %77, %82 : vector<8x8x80xf32>
    %c2_63 = arith.constant 2 : index
    %c3_64 = arith.constant 3 : index
    %c0_65 = arith.constant 0 : index
    %84 = vector.load %arg4[%c2_63, %c3_64, %c0_65] : memref<12x12x80xf32, #tpu.memory_space<vmem>>, vector<8x8x80xf32>
    %c13 = arith.constant 13 : index
    %c0_66 = arith.constant 0 : index
    %85 = vector.load %arg2[%c13, %c0_66] : memref<25x80xf32, #tpu.memory_space<vmem>>, vector<1x80xf32>
    %86 = vector.shape_cast %85 : vector<1x80xf32> to vector<1x1x80xf32>
    %87 = vector.broadcast %86 : vector<1x1x80xf32> to vector<8x8x80xf32>
    %88 = arith.mulf %84, %87 : vector<8x8x80xf32>
    %89 = arith.addf %83, %88 : vector<8x8x80xf32>
    %c2_67 = arith.constant 2 : index
    %c4_68 = arith.constant 4 : index
    %c0_69 = arith.constant 0 : index
    %90 = vector.load %arg4[%c2_67, %c4_68, %c0_69] : memref<12x12x80xf32, #tpu.memory_space<vmem>>, vector<8x8x80xf32>
    %c14 = arith.constant 14 : index
    %c0_70 = arith.constant 0 : index
    %91 = vector.load %arg2[%c14, %c0_70] : memref<25x80xf32, #tpu.memory_space<vmem>>, vector<1x80xf32>
    %92 = vector.shape_cast %91 : vector<1x80xf32> to vector<1x1x80xf32>
    %93 = vector.broadcast %92 : vector<1x1x80xf32> to vector<8x8x80xf32>
    %94 = arith.mulf %90, %93 : vector<8x8x80xf32>
    %95 = arith.addf %89, %94 : vector<8x8x80xf32>
    %c3_71 = arith.constant 3 : index
    %c0_72 = arith.constant 0 : index
    %c0_73 = arith.constant 0 : index
    %96 = vector.load %arg4[%c3_71, %c0_72, %c0_73] : memref<12x12x80xf32, #tpu.memory_space<vmem>>, vector<8x8x80xf32>
    %c15 = arith.constant 15 : index
    %c0_74 = arith.constant 0 : index
    %97 = vector.load %arg2[%c15, %c0_74] : memref<25x80xf32, #tpu.memory_space<vmem>>, vector<1x80xf32>
    %98 = vector.shape_cast %97 : vector<1x80xf32> to vector<1x1x80xf32>
    %99 = vector.broadcast %98 : vector<1x1x80xf32> to vector<8x8x80xf32>
    %100 = arith.mulf %96, %99 : vector<8x8x80xf32>
    %101 = arith.addf %95, %100 : vector<8x8x80xf32>
    %c3_75 = arith.constant 3 : index
    %c1_76 = arith.constant 1 : index
    %c0_77 = arith.constant 0 : index
    %102 = vector.load %arg4[%c3_75, %c1_76, %c0_77] : memref<12x12x80xf32, #tpu.memory_space<vmem>>, vector<8x8x80xf32>
    %c16 = arith.constant 16 : index
    %c0_78 = arith.constant 0 : index
    %103 = vector.load %arg2[%c16, %c0_78] : memref<25x80xf32, #tpu.memory_space<vmem>>, vector<1x80xf32>
    %104 = vector.shape_cast %103 : vector<1x80xf32> to vector<1x1x80xf32>
    %105 = vector.broadcast %104 : vector<1x1x80xf32> to vector<8x8x80xf32>
    %106 = arith.mulf %102, %105 : vector<8x8x80xf32>
    %107 = arith.addf %101, %106 : vector<8x8x80xf32>
    %c3_79 = arith.constant 3 : index
    %c2_80 = arith.constant 2 : index
    %c0_81 = arith.constant 0 : index
    %108 = vector.load %arg4[%c3_79, %c2_80, %c0_81] : memref<12x12x80xf32, #tpu.memory_space<vmem>>, vector<8x8x80xf32>
    %c17 = arith.constant 17 : index
    %c0_82 = arith.constant 0 : index
    %109 = vector.load %arg2[%c17, %c0_82] : memref<25x80xf32, #tpu.memory_space<vmem>>, vector<1x80xf32>
    %110 = vector.shape_cast %109 : vector<1x80xf32> to vector<1x1x80xf32>
    %111 = vector.broadcast %110 : vector<1x1x80xf32> to vector<8x8x80xf32>
    %112 = arith.mulf %108, %111 : vector<8x8x80xf32>
    %113 = arith.addf %107, %112 : vector<8x8x80xf32>
    %c3_83 = arith.constant 3 : index
    %c3_84 = arith.constant 3 : index
    %c0_85 = arith.constant 0 : index
    %114 = vector.load %arg4[%c3_83, %c3_84, %c0_85] : memref<12x12x80xf32, #tpu.memory_space<vmem>>, vector<8x8x80xf32>
    %c18 = arith.constant 18 : index
    %c0_86 = arith.constant 0 : index
    %115 = vector.load %arg2[%c18, %c0_86] : memref<25x80xf32, #tpu.memory_space<vmem>>, vector<1x80xf32>
    %116 = vector.shape_cast %115 : vector<1x80xf32> to vector<1x1x80xf32>
    %117 = vector.broadcast %116 : vector<1x1x80xf32> to vector<8x8x80xf32>
    %118 = arith.mulf %114, %117 : vector<8x8x80xf32>
    %119 = arith.addf %113, %118 : vector<8x8x80xf32>
    %c3_87 = arith.constant 3 : index
    %c4_88 = arith.constant 4 : index
    %c0_89 = arith.constant 0 : index
    %120 = vector.load %arg4[%c3_87, %c4_88, %c0_89] : memref<12x12x80xf32, #tpu.memory_space<vmem>>, vector<8x8x80xf32>
    %c19 = arith.constant 19 : index
    %c0_90 = arith.constant 0 : index
    %121 = vector.load %arg2[%c19, %c0_90] : memref<25x80xf32, #tpu.memory_space<vmem>>, vector<1x80xf32>
    %122 = vector.shape_cast %121 : vector<1x80xf32> to vector<1x1x80xf32>
    %123 = vector.broadcast %122 : vector<1x1x80xf32> to vector<8x8x80xf32>
    %124 = arith.mulf %120, %123 : vector<8x8x80xf32>
    %125 = arith.addf %119, %124 : vector<8x8x80xf32>
    %c4_91 = arith.constant 4 : index
    %c0_92 = arith.constant 0 : index
    %c0_93 = arith.constant 0 : index
    %126 = vector.load %arg4[%c4_91, %c0_92, %c0_93] : memref<12x12x80xf32, #tpu.memory_space<vmem>>, vector<8x8x80xf32>
    %c20 = arith.constant 20 : index
    %c0_94 = arith.constant 0 : index
    %127 = vector.load %arg2[%c20, %c0_94] : memref<25x80xf32, #tpu.memory_space<vmem>>, vector<1x80xf32>
    %128 = vector.shape_cast %127 : vector<1x80xf32> to vector<1x1x80xf32>
    %129 = vector.broadcast %128 : vector<1x1x80xf32> to vector<8x8x80xf32>
    %130 = arith.mulf %126, %129 : vector<8x8x80xf32>
    %131 = arith.addf %125, %130 : vector<8x8x80xf32>
    %c4_95 = arith.constant 4 : index
    %c1_96 = arith.constant 1 : index
    %c0_97 = arith.constant 0 : index
    %132 = vector.load %arg4[%c4_95, %c1_96, %c0_97] : memref<12x12x80xf32, #tpu.memory_space<vmem>>, vector<8x8x80xf32>
    %c21 = arith.constant 21 : index
    %c0_98 = arith.constant 0 : index
    %133 = vector.load %arg2[%c21, %c0_98] : memref<25x80xf32, #tpu.memory_space<vmem>>, vector<1x80xf32>
    %134 = vector.shape_cast %133 : vector<1x80xf32> to vector<1x1x80xf32>
    %135 = vector.broadcast %134 : vector<1x1x80xf32> to vector<8x8x80xf32>
    %136 = arith.mulf %132, %135 : vector<8x8x80xf32>
    %137 = arith.addf %131, %136 : vector<8x8x80xf32>
    %c4_99 = arith.constant 4 : index
    %c2_100 = arith.constant 2 : index
    %c0_101 = arith.constant 0 : index
    %138 = vector.load %arg4[%c4_99, %c2_100, %c0_101] : memref<12x12x80xf32, #tpu.memory_space<vmem>>, vector<8x8x80xf32>
    %c22 = arith.constant 22 : index
    %c0_102 = arith.constant 0 : index
    %139 = vector.load %arg2[%c22, %c0_102] : memref<25x80xf32, #tpu.memory_space<vmem>>, vector<1x80xf32>
    %140 = vector.shape_cast %139 : vector<1x80xf32> to vector<1x1x80xf32>
    %141 = vector.broadcast %140 : vector<1x1x80xf32> to vector<8x8x80xf32>
    %142 = arith.mulf %138, %141 : vector<8x8x80xf32>
    %143 = arith.addf %137, %142 : vector<8x8x80xf32>
    %c4_103 = arith.constant 4 : index
    %c3_104 = arith.constant 3 : index
    %c0_105 = arith.constant 0 : index
    %144 = vector.load %arg4[%c4_103, %c3_104, %c0_105] : memref<12x12x80xf32, #tpu.memory_space<vmem>>, vector<8x8x80xf32>
    %c23 = arith.constant 23 : index
    %c0_106 = arith.constant 0 : index
    %145 = vector.load %arg2[%c23, %c0_106] : memref<25x80xf32, #tpu.memory_space<vmem>>, vector<1x80xf32>
    %146 = vector.shape_cast %145 : vector<1x80xf32> to vector<1x1x80xf32>
    %147 = vector.broadcast %146 : vector<1x1x80xf32> to vector<8x8x80xf32>
    %148 = arith.mulf %144, %147 : vector<8x8x80xf32>
    %149 = arith.addf %143, %148 : vector<8x8x80xf32>
    %c4_107 = arith.constant 4 : index
    %c4_108 = arith.constant 4 : index
    %c0_109 = arith.constant 0 : index
    %150 = vector.load %arg4[%c4_107, %c4_108, %c0_109] : memref<12x12x80xf32, #tpu.memory_space<vmem>>, vector<8x8x80xf32>
    %c24 = arith.constant 24 : index
    %c0_110 = arith.constant 0 : index
    %151 = vector.load %arg2[%c24, %c0_110] : memref<25x80xf32, #tpu.memory_space<vmem>>, vector<1x80xf32>
    %152 = vector.shape_cast %151 : vector<1x80xf32> to vector<1x1x80xf32>
    %153 = vector.broadcast %152 : vector<1x1x80xf32> to vector<8x8x80xf32>
    %154 = arith.mulf %150, %153 : vector<8x8x80xf32>
    %155 = arith.addf %149, %154 : vector<8x8x80xf32>
    %c0_111 = arith.constant 0 : index
    %c0_112 = arith.constant 0 : index
    %c0_113 = arith.constant 0 : index
    %c0_114 = arith.constant 0 : index
    %156 = vector.load %arg3[%c0_111, %c0_112, %c0_113, %c0_114] : memref<1x8x8x80xf32, #tpu.memory_space<vmem>>, vector<1x8x8x80xf32>
    %157 = vector.shape_cast %156 : vector<1x8x8x80xf32> to vector<8x8x80xf32>
    %158 = vector.shape_cast %155 : vector<8x8x80xf32> to vector<1x8x8x80xf32>
    tpu.vector_store %arg3[%c0_111, %c0_112, %c0_113, %c0_114], %158 {strides = array<i32>} : memref<1x8x8x80xf32, #tpu.memory_space<vmem>>, vector<1x8x8x80xf32>,
    return
  }
  func.func @transform_0(%arg0: i32) -> (i32, i32, i32, i32) {
    %c0_i32 = arith.constant 0 : i32
    %c0_i32_0 = arith.constant 0 : i32
    %c0_i32_1 = arith.constant 0 : i32
    %c0_i32_2 = arith.constant 0 : i32
    return %arg0, %c0_i32, %c0_i32_0, %c0_i32_1 : i32, i32, i32, i32
  }
  func.func @transform_1(%arg0: i32) -> (i32, i32) {
    %c0_i32 = arith.constant 0 : i32
    %c0_i32_0 = arith.constant 0 : i32
    %c0_i32_1 = arith.constant 0 : i32
    return %c0_i32, %c0_i32_0 : i32, i32
  }
  func.func @transform_2(%arg0: i32) -> (i32, i32, i32, i32) {
    %c0_i32 = arith.constant 0 : i32
    %c0_i32_0 = arith.constant 0 : i32
    %c0_i32_1 = arith.constant 0 : i32
    %c0_i32_2 = arith.constant 0 : i32
    return %arg0, %c0_i32, %c0_i32_0, %c0_i32_1 : i32, i32, i32, i32
  }
}

module attributes {stable_mosaic.version = 11 : i64} {
  func.func @_final_kernel(%arg0: i32, %arg1: memref<1x8x8x32xf32, #tpu.memory_space<vmem>>, %arg2: memref<1x8x8x80xf32, #tpu.memory_space<vmem>>, %arg3: memref<8x8x1xf32, #tpu.memory_space<vmem>>, %arg4: memref<1x8x8x96xf32, #tpu.memory_space<vmem>>, %arg5: memref<10x10x32xf32, #tpu.memory_space<vmem>>) attributes {dimension_semantics = [#tpu.dimension_semantics<parallel>], iteration_bounds = array<i64: 2>, scalar_prefetch = 0 : i64, scratch_operands = 1 : i64, tpu.core_type = #tpu.core_type<tc>, window_params = [{transform_indices = @transform_0, window_bounds = array<i64: 1, 8, 8, 32>}, {transform_indices = @transform_1, window_bounds = array<i64: 1, 8, 8, 80>}, {pipeline_mode = #tpu.pipeline_mode<synchronous>, transform_indices = @transform_2, window_bounds = array<i64: 8, 8, 1>}, {transform_indices = @transform_3, window_bounds = array<i64: 1, 8, 8, 96>}]} {
    %c0 = arith.constant 0 : index
    %c0_0 = arith.constant 0 : index
    %c0_1 = arith.constant 0 : index
    %c0_2 = arith.constant 0 : index
    %0 = vector.load %arg1[%c0, %c0_0, %c0_1, %c0_2] : memref<1x8x8x32xf32, #tpu.memory_space<vmem>>, vector<1x8x8x32xf32>
    %1 = vector.shape_cast %0 : vector<1x8x8x32xf32> to vector<8x8x32xf32>
    %cst = arith.constant 0.000000e+00 : f32
    %2 = vector.broadcast %cst : f32 to vector<10x10x32xf32>
    %c0_3 = arith.constant 0 : index
    %c0_4 = arith.constant 0 : index
    %c0_5 = arith.constant 0 : index
    %3 = vector.load %arg5[%c0_3, %c0_4, %c0_5] : memref<10x10x32xf32, #tpu.memory_space<vmem>>, vector<10x10x32xf32>
    tpu.vector_store %arg5[%c0_3, %c0_4, %c0_5], %2 {strides = array<i32>} : memref<10x10x32xf32, #tpu.memory_space<vmem>>, vector<10x10x32xf32>,
    %c1 = arith.constant 1 : index
    %c1_6 = arith.constant 1 : index
    %c0_7 = arith.constant 0 : index
    %4 = vector.load %arg5[%c1, %c1_6, %c0_7] : memref<10x10x32xf32, #tpu.memory_space<vmem>>, vector<8x8x32xf32>
    tpu.vector_store %arg5[%c1, %c1_6, %c0_7], %1 {strides = array<i32>} : memref<10x10x32xf32, #tpu.memory_space<vmem>>, vector<8x8x32xf32>,
    %c0_8 = arith.constant 0 : index
    %c0_9 = arith.constant 0 : index
    %c0_10 = arith.constant 0 : index
    %5 = vector.load %arg5[%c0_8, %c0_9, %c0_10] : memref<10x10x32xf32, #tpu.memory_space<vmem>>, vector<8x10x32xf32>
    %c1_11 = arith.constant 1 : index
    %c0_12 = arith.constant 0 : index
    %c0_13 = arith.constant 0 : index
    %6 = vector.load %arg5[%c1_11, %c0_12, %c0_13] : memref<10x10x32xf32, #tpu.memory_space<vmem>>, vector<8x10x32xf32>
    %7 = arith.addf %5, %6 : vector<8x10x32xf32>
    %c2 = arith.constant 2 : index
    %c0_14 = arith.constant 0 : index
    %c0_15 = arith.constant 0 : index
    %8 = vector.load %arg5[%c2, %c0_14, %c0_15] : memref<10x10x32xf32, #tpu.memory_space<vmem>>, vector<8x10x32xf32>
    %9 = arith.addf %7, %8 : vector<8x10x32xf32>
    %10 = vector.extract_strided_slice %9 {offsets = [0, 0, 0], sizes = [8, 8, 32], strides = [1, 1, 1]} : vector<8x10x32xf32> to vector<8x8x32xf32>
    %11 = vector.extract_strided_slice %9 {offsets = [0, 1, 0], sizes = [8, 8, 32], strides = [1, 1, 1]} : vector<8x10x32xf32> to vector<8x8x32xf32>
    %12 = arith.addf %10, %11 : vector<8x8x32xf32>
    %13 = vector.extract_strided_slice %9 {offsets = [0, 2, 0], sizes = [8, 8, 32], strides = [1, 1, 1]} : vector<8x10x32xf32> to vector<8x8x32xf32>
    %14 = arith.addf %12, %13 : vector<8x8x32xf32>
    %c0_16 = arith.constant 0 : index
    %c0_17 = arith.constant 0 : index
    %c0_18 = arith.constant 0 : index
    %15 = vector.load %arg3[%c0_16, %c0_17, %c0_18] : memref<8x8x1xf32, #tpu.memory_space<vmem>>, vector<8x8x1xf32>
    %16 = vector.broadcast %15 : vector<8x8x1xf32> to vector<8x8x32xf32>
    %17 = arith.mulf %14, %16 : vector<8x8x32xf32>
    %18 = vector.extract_strided_slice %1 {offsets = [0, 0, 0], sizes = [8, 8, 16], strides = [1, 1, 1]} : vector<8x8x32xf32> to vector<8x8x16xf32>
    %19 = vector.extract_strided_slice %1 {offsets = [0, 0, 16], sizes = [8, 8, 16], strides = [1, 1, 1]} : vector<8x8x32xf32> to vector<8x8x16xf32>
    %c0_19 = arith.constant 0 : index
    %c0_20 = arith.constant 0 : index
    %c0_21 = arith.constant 0 : index
    %c0_22 = arith.constant 0 : index
    %20 = vector.load %arg2[%c0_19, %c0_20, %c0_21, %c0_22] : memref<1x8x8x80xf32, #tpu.memory_space<vmem>>, vector<1x8x8x80xf32>
    %21 = vector.shape_cast %20 : vector<1x8x8x80xf32> to vector<8x8x80xf32>
    %22 = vector.extract_strided_slice %21 {offsets = [0, 0, 0], sizes = [8, 8, 16], strides = [1, 1, 1]} : vector<8x8x80xf32> to vector<8x8x16xf32>
    %23 = vector.extract_strided_slice %21 {offsets = [0, 0, 16], sizes = [8, 8, 16], strides = [1, 1, 1]} : vector<8x8x80xf32> to vector<8x8x16xf32>
    %24 = arith.addf %22, %23 : vector<8x8x16xf32>
    %25 = vector.extract_strided_slice %21 {offsets = [0, 0, 32], sizes = [8, 8, 16], strides = [1, 1, 1]} : vector<8x8x80xf32> to vector<8x8x16xf32>
    %26 = vector.extract_strided_slice %21 {offsets = [0, 0, 48], sizes = [8, 8, 16], strides = [1, 1, 1]} : vector<8x8x80xf32> to vector<8x8x16xf32>
    %27 = arith.addf %25, %26 : vector<8x8x16xf32>
    %28 = vector.extract_strided_slice %17 {offsets = [0, 0, 0], sizes = [8, 8, 16], strides = [1, 1, 1]} : vector<8x8x32xf32> to vector<8x8x16xf32>
    %29 = arith.addf %28, %19 : vector<8x8x16xf32>
    %30 = vector.extract_strided_slice %17 {offsets = [0, 0, 16], sizes = [8, 8, 16], strides = [1, 1, 1]} : vector<8x8x32xf32> to vector<8x8x16xf32>
    %cst_23 = arith.constant 2.000000e+00 : f32
    %31 = vector.broadcast %cst_23 : f32 to vector<8x8x16xf32>
    %32 = arith.mulf %31, %30 : vector<8x8x16xf32>
    %33 = vector.extract_strided_slice %21 {offsets = [0, 0, 64], sizes = [8, 8, 16], strides = [1, 1, 1]} : vector<8x8x80xf32> to vector<8x8x16xf32>
    %34 = arith.addf %33, %18 : vector<8x8x16xf32>
    %35 = tpu.concatenate %19, %24, %27, %29, %32, %34 in 2 : vector<8x8x16xf32>, vector<8x8x16xf32>, vector<8x8x16xf32>, vector<8x8x16xf32>, vector<8x8x16xf32>, vector<8x8x16xf32> -> vector<8x8x96xf32>
    %c0_24 = arith.constant 0 : index
    %c0_25 = arith.constant 0 : index
    %c0_26 = arith.constant 0 : index
    %c0_27 = arith.constant 0 : index
    %36 = vector.load %arg4[%c0_24, %c0_25, %c0_26, %c0_27] : memref<1x8x8x96xf32, #tpu.memory_space<vmem>>, vector<1x8x8x96xf32>
    %37 = vector.shape_cast %36 : vector<1x8x8x96xf32> to vector<8x8x96xf32>
    %38 = vector.shape_cast %35 : vector<8x8x96xf32> to vector<1x8x8x96xf32>
    tpu.vector_store %arg4[%c0_24, %c0_25, %c0_26, %c0_27], %38 {strides = array<i32>} : memref<1x8x8x96xf32, #tpu.memory_space<vmem>>, vector<1x8x8x96xf32>,
    return
  }
  func.func @transform_0(%arg0: i32) -> (i32, i32, i32, i32) {
    %c0_i32 = arith.constant 0 : i32
    %c0_i32_0 = arith.constant 0 : i32
    %c0_i32_1 = arith.constant 0 : i32
    %c0_i32_2 = arith.constant 0 : i32
    return %arg0, %c0_i32, %c0_i32_0, %c0_i32_1 : i32, i32, i32, i32
  }
  func.func @transform_1(%arg0: i32) -> (i32, i32, i32, i32) {
    %c0_i32 = arith.constant 0 : i32
    %c0_i32_0 = arith.constant 0 : i32
    %c0_i32_1 = arith.constant 0 : i32
    %c0_i32_2 = arith.constant 0 : i32
    return %arg0, %c0_i32, %c0_i32_0, %c0_i32_1 : i32, i32, i32, i32
  }
  func.func @transform_2(%arg0: i32) -> (i32, i32, i32) {
    %c0_i32 = arith.constant 0 : i32
    %c0_i32_0 = arith.constant 0 : i32
    %c0_i32_1 = arith.constant 0 : i32
    %c0_i32_2 = arith.constant 0 : i32
    return %c0_i32, %c0_i32_0, %c0_i32_1 : i32, i32, i32
  }
  func.func @transform_3(%arg0: i32) -> (i32, i32, i32, i32) {
    %c0_i32 = arith.constant 0 : i32
    %c0_i32_0 = arith.constant 0 : i32
    %c0_i32_1 = arith.constant 0 : i32
    %c0_i32_2 = arith.constant 0 : i32
    return %arg0, %c0_i32, %c0_i32_0, %c0_i32_1 : i32, i32, i32, i32
  }
}

</mosaic_0001>

<llo_original>
// kernel: first_cell_forward.8
$region0: #{first_cell_forward.8}
  #allocation0 [shape = 'u32[]', space=smem, size = 0x4, offset = 0x4, fixed_abs, tag = 'smem constant byte address 0x4 - core index']
  #allocation1 [shape = 'u32[144,128]{1,0:T(1,128)}', space=vmem, size = 0x12000, scoped, tag = 'internal scratch']
  %s0 = inlined_call_operand.vmem [shape: f32[128,80], index: 0, kind: input, shape index: {}]
  %s1 = inlined_call_operand.vmem [shape: bf16[80,80], index: 1, kind: input, shape index: {}]
  %s2 = inlined_call_operand.vmem [shape: f32[1,80], index: 2, kind: input, shape index: {}]
  %s3 = inlined_call_operand.vmem [shape: f32[1,80], index: 3, kind: input, shape index: {}]
  %s4 = inlined_call_operand.vmem [shape: f32[128,80], index: 4, kind: output, shape index: {}]
  %s5 = sld [smem:[#allocation0]]
  $region49: #{first_cell_forward.8} parent=0
    _
  %s7 = ssub.s32 1, %s5
  %s8 = scalar_select 0, %s7, %s5
  loop: start=0, step=1, limit=4
  $region2: #{first_cell_forward.8} parent=0 // loop_pre_header
    _
  $region3: #{first_cell_forward.8} parent=0 // loop_header
    %s10 = sphi 0, %s14
    %p11 = scmp.ge.s32.totalorder %s10, 4
    %s20 = sphi 0, %s22
    %s23 = sphi 0, %s20
    %s24 = sphi 0, %s23
    %s40 = sphi 0, %s24
    %s44 = sphi 0, %s44
    %s46 = sphi 0, %s44
    %s47 = sphi 0, %s46
    %s61 = sphi 0, %s47
    %s65 = sphi 0, %s65
    %s67 = sphi 0, %s65
    %s68 = sphi 0, %s67
    %s82 = sphi 0, %s68
    %s86 = sphi 0, %s86
    %s88 = sphi 0, %s86
    %s89 = sphi 0, %s88
    %s103 = sphi 0, %s89
    %s109 = sphi 0, %s111
    %s112 = sphi 0, %s109
    %s113 = sphi 0, %s112
    %s129 = sphi 0, %s113
  $region4: #{first_cell_forward.8} parent=0 // loop_header_branch
    %13 = sbr.rel (%p11) target = $region8
  $region5: #{first_cell_forward.8} parent=0 // loop_body
    %s15 = ssub.s32 %s10, 1
    %s16 = ssub.s32 %s10, 2
    %s17 = sadd.s32 %s10, 1
    %s18 = ssub.s32 %s10, %s17
    %p19 = scmp.eq.s32.totalorder %s18, 0
    %s21 = sadd.s32 %s20, 1
    %s22 = scalar_select %p19, %s20, %s21
    %p25 = pneg %p19
    %p26 = scmp.eq.s32.totalorder %s10, 1
    %p27 = por %p25, %p26
    %p28 = scmp.ne.s32.totalorder %s20, %s23
    %p29 = scmp.eq.s32.totalorder %s10, 0
    %p30 = por %p28, %p29
    %p31 = scmp.ne.s32.totalorder %s20, %s23
    %p32 = scmp.eq.s32.totalorder %s15, 1
    %p33 = por %p31, %p32
    %p34 = scmp.ne.s32.totalorder %s23, %s24
    %p35 = scmp.eq.s32.totalorder %s15, 0
    %p36 = por %p34, %p35
    %p37 = scmp.ne.s32.totalorder %s23, %s24
    %p38 = scmp.eq.s32.totalorder %s16, 1
    %p39 = por %p37, %p38
    %p41 = scmp.ne.s32.totalorder %s24, %s40
    %p42 = scmp.eq.s32.totalorder %s16, 0
    %p43 = por %p41, %p42
    %s45 = sadd.s32 %s44, 1
    %p48 = scmp.eq.s32.totalorder %s10, 1
    %p49 = scmp.ne.s32.totalorder %s44, %s46
    %p50 = scmp.eq.s32.totalorder %s10, 0
    %p51 = por %p49, %p50
    %p52 = scmp.ne.s32.totalorder %s44, %s46
    %p53 = scmp.eq.s32.totalorder %s15, 1
    %p54 = por %p52, %p53
    %p55 = scmp.ne.s32.totalorder %s46, %s47
    %p56 = scmp.eq.s32.totalorder %s15, 0
    %p57 = por %p55, %p56
    %p58 = scmp.ne.s32.totalorder %s46, %s47
    %p59 = scmp.eq.s32.totalorder %s16, 1
    %p60 = por %p58, %p59
    %p62 = scmp.ne.s32.totalorder %s47, %s61
    %p63 = scmp.eq.s32.totalorder %s16, 0
    %p64 = por %p62, %p63
    %s66 = sadd.s32 %s65, 1
    %p69 = scmp.eq.s32.totalorder %s10, 1
    %p70 = scmp.ne.s32.totalorder %s65, %s67
    %p71 = scmp.eq.s32.totalorder %s10, 0
    %p72 = por %p70, %p71
    %p73 = scmp.ne.s32.totalorder %s65, %s67
    %p74 = scmp.eq.s32.totalorder %s15, 1
    %p75 = por %p73, %p74
    %p76 = scmp.ne.s32.totalorder %s67, %s68
    %p77 = scmp.eq.s32.totalorder %s15, 0
    %p78 = por %p76, %p77
    %p79 = scmp.ne.s32.totalorder %s67, %s68
    %p80 = scmp.eq.s32.totalorder %s16, 1
    %p81 = por %p79, %p80
    %p83 = scmp.ne.s32.totalorder %s68, %s82
    %p84 = scmp.eq.s32.totalorder %s16, 0
    %p85 = por %p83, %p84
    %s87 = sadd.s32 %s86, 1
    %p90 = scmp.eq.s32.totalorder %s10, 1
    %p91 = scmp.ne.s32.totalorder %s86, %s88
    %p92 = scmp.eq.s32.totalorder %s10, 0
    %p93 = por %p91, %p92
    %p94 = scmp.ne.s32.totalorder %s86, %s88
    %p95 = scmp.eq.s32.totalorder %s15, 1
    %p96 = por %p94, %p95
    %p97 = scmp.ne.s32.totalorder %s88, %s89
    %p98 = scmp.eq.s32.totalorder %s15, 0
    %p99 = por %p97, %p98
    %p100 = scmp.ne.s32.totalorder %s88, %s89
    %p101 = scmp.eq.s32.totalorder %s16, 1
    %p102 = por %p100, %p101
    %p104 = scmp.ne.s32.totalorder %s89, %s103
    %p105 = scmp.eq.s32.totalorder %s16, 0
    %p106 = por %p104, %p105
    %s107 = ssub.s32 %s10, %s17
    %p108 = scmp.eq.s32.totalorder %s107, 0
    %s110 = sadd.s32 %s109, 1
    %s111 = scalar_select %p108, %s109, %s110
    %p114 = pneg %p108
    %p115 = scmp.eq.s32.totalorder %s10, 1
    %p116 = por %p114, %p115
    %p117 = scmp.ne.s32.totalorder %s109, %s112
    %p118 = scmp.eq.s32.totalorder %s10, 0
    %p119 = por %p117, %p118
    %p120 = scmp.ne.s32.totalorder %s109, %s112
    %p121 = scmp.eq.s32.totalorder %s15, 1
    %p122 = por %p120, %p121
    %p123 = scmp.ne.s32.totalorder %s112, %s113
    %p124 = scmp.eq.s32.totalorder %s15, 0
    %p125 = por %p123, %p124
    %p126 = scmp.ne.s32.totalorder %s112, %s113
    %p127 = scmp.eq.s32.totalorder %s16, 1
    %p128 = por %p126, %p127
    %p130 = scmp.ne.s32.totalorder %s113, %s129
    %p131 = scmp.eq.s32.totalorder %s16, 0
    %p132 = por %p130, %p131
    %p133 = scmp.le.s32.totalorder 1, %s10
    %p134 = scmp.lt.s32.totalorder %s10, 3
    %p135 = pnand %p133, %p134
    %p136 = pneg %p135
    // Predicated region
    $region9: #{first_cell_forward.8} parent=5 // pred_check
      _
    $region10: #{first_cell_forward.8} parent=5 // pred_check_branch
      %138 = sbr.rel (%p135) target = $region12
    $region11: #{first_cell_forward.8} parent=5 // pred_region
      %s139 = ssub.s32 %s10, 1
      // Predicated region
      $region13: #{first_cell_forward.8} parent=11 // pred_check
        %p140 = pneg %p57
      $region14: #{first_cell_forward.8} parent=11 // pred_check_branch
        %142 = sbr.rel (%p140) target = $region16
      $region15: #{first_cell_forward.8} parent=11 // pred_region
        _
      $region16: #{first_cell_forward.8} parent=11 // pred_fallthru
        _
      // Predicated region
      $region17: #{first_cell_forward.8} parent=11 // pred_check
        %p143 = pneg %p78
      $region18: #{first_cell_forward.8} parent=11 // pred_check_branch
        %145 = sbr.rel (%p143) target = $region20
      $region19: #{first_cell_forward.8} parent=11 // pred_region
        _
      $region20: #{first_cell_forward.8} parent=11 // pred_fallthru
        _
      // Predicated region
      $region21: #{first_cell_forward.8} parent=11 // pred_check
        %p146 = pneg %p99
      $region22: #{first_cell_forward.8} parent=11 // pred_check_branch
        %148 = sbr.rel (%p146) target = $region24
      $region23: #{first_cell_forward.8} parent=11 // pred_region
        _
      $region24: #{first_cell_forward.8} parent=11 // pred_fallthru
        _
    $region12: #{first_cell_forward.8} parent=5 // pred_fallthru
      _
    %p149 = scmp.lt.s32.totalorder %s10, 2
    // Predicated region
    $region25: #{first_cell_forward.8} parent=5 // pred_check
      %p150 = pneg %p149
    $region26: #{first_cell_forward.8} parent=5 // pred_check_branch
      %152 = sbr.rel (%p150) target = $region28
    $region27: #{first_cell_forward.8} parent=5 // pred_region
      // Predicated region
      $region29: #{first_cell_forward.8} parent=27 // pred_check
        %p153 = pneg %p30
      $region30: #{first_cell_forward.8} parent=27 // pred_check_branch
        %155 = sbr.rel (%p153) target = $region32
      $region31: #{first_cell_forward.8} parent=27 // pred_region
        %s156 = smul.u32 8, %s10
        %p157 = scmp.lt.s32.totalorder %s156, 15
        %s158 = scalar_select %p157, %s156, 15
        %s159 = smul.addr %s158, 8
        %s160 = scalar_lea.vmem %s0, %s159
        %s161 = smul.u32 8, %s10
      $region32: #{first_cell_forward.8} parent=27 // pred_fallthru
        _
    $region28: #{first_cell_forward.8} parent=5 // pred_fallthru
      _
    %p162 = scmp.le.s32.totalorder 1, %s10
    %p163 = scmp.lt.s32.totalorder %s10, 3
    %p164 = pnand %p162, %p163
    %p165 = pneg %p164
    // Predicated region
    $region33: #{first_cell_forward.8} parent=5 // pred_check
      _
    $region34: #{first_cell_forward.8} parent=5 // pred_check_branch
      %167 = sbr.rel (%p164) target = $region36
    $region35: #{first_cell_forward.8} parent=5 // pred_region
      %s168 = ssub.s32 %s10, 1
      %s169 = smul.u32 8, %s15
      %p170 = scmp.lt.s32.totalorder %s169, 15
      %s171 = scalar_select %p170, %s169, 15
      %s172 = smul.addr %s171, 8
      %s173 = scalar_lea.vmem %s0, %s172
      %p174 = pneg %p36
      %p175 = pneg %p33
      %p176 = pneg %p57
      %p177 = pneg %p54
      %p178 = pneg %p78
      %p179 = pneg %p75
      %p180 = pneg %p99
      %p181 = pneg %p96
      %p182 = pneg %p125
      %p183 = pneg %p122
      %s184 = smul.u32 8, %s15
      %p185 = scmp.lt.s32.totalorder %s184, 15
      %s186 = scalar_select %p185, %s184, 15
      %s187 = smul.addr %s186, 8
      %s188 = scalar_lea.vmem %s4, %s187
      %s189 = smul.u32 8, %s15
      %p190 = scmp.lt.s32.totalorder %s189, 15
      %s191 = scalar_select %p190, %s189, 15
      %s192 = smul.addr %s191, 8
      %s193 = scalar_lea.vmem %s0, %s192
      %s194 = smul.u32 8, %s15
      %s195 = smul.u32 8, %s15
      %p196 = scmp.lt.s32.totalorder %s195, 15
      %s197 = scalar_select %p196, %s195, 15
      %s198 = smul.addr %s197, 8
      %s199 = scalar_lea.vmem %s4, %s198
      %s200 = smul.u32 8, %s15
      %v202 = vld [vmem:[%s193] sm:$0xff]
      %v203 = vld [vmem:[%s193 + $0x8] sm:$0xff]
      %v204 = vld [vmem:[%s193 + $0x10] sm:$0xff]
      %v205 = vld [vmem:[%s193 + $0x18] sm:$0xff]
      %v206 = vld [vmem:[%s193 + $0x20] sm:$0xff]
      %v207 = vld [vmem:[%s193 + $0x28] sm:$0xff]
      %v208 = vld [vmem:[%s193 + $0x30] sm:$0xff]
      %v209 = vld [vmem:[%s193 + $0x38] sm:$0xff]
      %v210 = vpack.c.bf16 %v203, %v202
      %v211 = vpack.c.bf16 %v205, %v204
      %v212 = vpack.c.bf16 %v207, %v206
      %v213 = vpack.c.bf16 %v209, %v208
      %v214 = vld [vmem:[%s1] sm:$0xf]
      %v215 = vld [vmem:[%s1 + $0x4] sm:$0xf]
      %v216 = vld [vmem:[%s1 + $0x8] sm:$0xf]
      %v217 = vld [vmem:[%s1 + $0xc] sm:$0xf]
      %v218 = vld [vmem:[%s1 + $0x10] sm:$0xf]
      %v219 = vld [vmem:[%s1 + $0x14] sm:$0xf]
      %v220 = vld [vmem:[%s1 + $0x18] sm:$0xf]
      %v221 = vld [vmem:[%s1 + $0x1c] sm:$0xf]
      %v222 = vld [vmem:[%s1 + $0x20] sm:$0xf]
      %v223 = vld [vmem:[%s1 + $0x24] sm:$0xf]
      %v234 = vunpack.c.l.b16 %v214
      %v235 = vunpack.c.l.b16 %v215
      %v236 = vunpack.c.l.b16 %v216
      %v237 = vunpack.c.l.b16 %v217
      %v238 = vunpack.c.l.b16 %v218
      %v239 = vunpack.c.l.b16 %v219
      %v240 = vunpack.c.l.b16 %v220
      %v241 = vunpack.c.l.b16 %v221
      %v242 = vunpack.c.l.b16 %v222
      %v243 = vunpack.c.l.b16 %v223
      %v244 = vpack.c.b16 %v235, %v234
      %v245 = vpack.c.b16 %v237, %v236
      %v246 = vpack.c.b16 %v239, %v238
      %v247 = vpack.c.b16 %v241, %v240
      %v248 = vpack.c.b16 %v243, %v242
      %vm254 = vcmask 654336
      %v256 = vsel %vm254, %v210, 0
      %v259 = vsel %vm254, %v211, 0
      %v262 = vsel %vm254, %v212, 0
      %v265 = vsel %vm254, %v213, 0
      %267 = vmatprep.subr.bf16.mxu0 0
      %268 = vmatpush1.bf16.msra.mxu0 0
      %269 = vmatprep.subr.bf16.mxu0 0
      %270 = vmatpush1.bf16.msra.mxu0 0
      %271 = vmatprep.subr.bf16.mxu0 0
      %272 = vmatpush1.bf16.msra.mxu0 0
      %273 = vmatprep.subr.bf16.mxu0 0
      %274 = vmatpush1.bf16.msra.mxu0 %v248
      %275 = vmatprep.subr.bf16.mxu0 0
      %276 = vmatpush1.bf16.msra.mxu0 %v247
      %277 = vmatprep.subr.bf16.mxu0 0
      %278 = vmatpush1.bf16.msra.mxu0 %v246
      %279 = vmatprep.subr.bf16.mxu0 0
      %280 = vmatpush1.bf16.msra.mxu0 %v245
      %281 = vmatprep.subr.bf16.mxu0 0
      %282 = vmatpush1.bf16.msra.mxu0 %v244
      %283 = vmatprep.subr.bf16.mxu0 0
      %284 = vmatpush2.bf16.msra.mxu0 0
      %285 = vmatprep.subr.bf16.mxu0 0
      %286 = vmatpush2.bf16.msra.mxu0 0
      %287 = vmatprep.subr.bf16.mxu0 0
      %288 = vmatpush2.bf16.msra.mxu0 0
      %289 = vmatprep.subr.bf16.mxu0 0
      %290 = vmatpush2.bf16.msra.mxu0 0
      %291 = vmatprep.subr.bf16.mxu0 0
      %292 = vmatpush2.bf16.msra.mxu0 0
      %293 = vmatprep.subr.bf16.mxu0 0
      %294 = vmatpush2.bf16.msra.mxu0 0
      %295 = vmatprep.subr.bf16.mxu0 0
      %296 = vmatpush2.bf16.msra.mxu0 0
      %297 = vmatprep.subr.bf16.mxu0 0
      %298 = vmatpush2.bf16.msra.mxu0 0
      %299 = vmatprep.mubr.bf16.mxu0 0
      %300 = vmatmul.mubr.bf16.gmra.mxu0 %v256
      %v301 = vpop.f32.mrf.mxu0
      %v302 = vadd.f32 0.0, %v301
      %v303 = vpop.f32.mrf.mxu0
      %v304 = vpop.f32.mrf.mxu0
      %v305 = vadd.f32 0.0, %v304
      %v306 = vpop.f32.mrf.mxu0
      %307 = vmatprep.mubr.bf16.mxu0 0
      %308 = vmatmul.mubr.bf16.gmra.mxu0 %v259
      %v309 = vpop.f32.mrf.mxu0
      %v310 = vadd.f32 0.0, %v309
      %v311 = vpop.f32.mrf.mxu0
      %v312 = vpop.f32.mrf.mxu0
      %v313 = vadd.f32 0.0, %v312
      %v314 = vpop.f32.mrf.mxu0
      %315 = vmatprep.mubr.bf16.mxu0 0
      %316 = vmatmul.mubr.bf16.gmra.mxu0 %v262
      %v317 = vpop.f32.mrf.mxu0
      %v318 = vadd.f32 0.0, %v317
      %v319 = vpop.f32.mrf.mxu0
      %v320 = vpop.f32.mrf.mxu0
      %v321 = vadd.f32 0.0, %v320
      %v322 = vpop.f32.mrf.mxu0
      %323 = vmatprep.mubr.bf16.mxu0 0
      %324 = vmatmul.mubr.bf16.gmra.mxu0 %v265
      %v325 = vpop.f32.mrf.mxu0
      %v326 = vadd.f32 0.0, %v325
      %v327 = vpop.f32.mrf.mxu0
      %v328 = vpop.f32.mrf.mxu0
      %v329 = vadd.f32 0.0, %v328
      %v330 = vpop.f32.mrf.mxu0
      %331 = vdwg.mxu0
      %v332 = vld [vmem:[%s2] sm:$0x1]
      %v334 = vlaneseq
      %v335 = vshrl.u32 %v334, 7
      %v336 = vsub.s32 0, %v335
      %v337 = vrot.slane %v332, %v336
      %v339 = vmul.f32 %v302, %v337
      %v340 = vmul.f32 %v305, %v337
      %v341 = vmul.f32 %v310, %v337
      %v342 = vmul.f32 %v313, %v337
      %v343 = vmul.f32 %v318, %v337
      %v344 = vmul.f32 %v321, %v337
      %v345 = vmul.f32 %v326, %v337
      %v346 = vmul.f32 %v329, %v337
      %v347 = vld [vmem:[%s3] sm:$0x1]
      %v349 = vlaneseq
      %v350 = vshrl.u32 %v349, 7
      %v351 = vsub.s32 0, %v350
      %v352 = vrot.slane %v347, %v351
      %v354 = vadd.f32 %v339, %v352
      %v355 = vadd.f32 %v340, %v352
      %v356 = vadd.f32 %v341, %v352
      %v357 = vadd.f32 %v342, %v352
      %v358 = vadd.f32 %v343, %v352
      %v359 = vadd.f32 %v344, %v352
      %v360 = vadd.f32 %v345, %v352
      %v361 = vadd.f32 %v346, %v352
      %362 = vst.msk [vmem:[%s199] sm:$0xff] %vm254, %v354
      %363 = vst.msk [vmem:[%s199 + $0x8] sm:$0xff] %vm254, %v355
      %364 = vst.msk [vmem:[%s199 + $0x10] sm:$0xff] %vm254, %v356
      %365 = vst.msk [vmem:[%s199 + $0x18] sm:$0xff] %vm254, %v357
      %366 = vst.msk [vmem:[%s199 + $0x20] sm:$0xff] %vm254, %v358
      %367 = vst.msk [vmem:[%s199 + $0x28] sm:$0xff] %vm254, %v359
      %368 = vst.msk [vmem:[%s199 + $0x30] sm:$0xff] %vm254, %v360
      %369 = vst.msk [vmem:[%s199 + $0x38] sm:$0xff] %vm254, %v361
      %s370 = smul.u32 8, %s15
      %p371 = scmp.lt.s32.totalorder %s370, 15
      %s372 = scalar_select %p371, %s370, 15
      %s373 = smul.addr %s372, 8
      %s374 = scalar_lea.vmem %s4, %s373
      // Predicated region
      $region37: #{first_cell_forward.8} parent=35 // pred_check
        %p375 = pneg %p122
      $region38: #{first_cell_forward.8} parent=35 // pred_check_branch
        %377 = sbr.rel (%p375) target = $region40
      $region39: #{first_cell_forward.8} parent=35 // pred_region
        %s378 = smul.u32 8, %s15
      $region40: #{first_cell_forward.8} parent=35 // pred_fallthru
        _
    $region36: #{first_cell_forward.8} parent=5 // pred_fallthru
      _
    %p379 = scmp.le.s32.totalorder 2, %s10
    // Predicated region
    $region41: #{first_cell_forward.8} parent=5 // pred_check
      %p380 = pneg %p379
    $region42: #{first_cell_forward.8} parent=5 // pred_check_branch
      %382 = sbr.rel (%p380) target = $region44
    $region43: #{first_cell_forward.8} parent=5 // pred_region
      %s383 = ssub.s32 %s10, 2
      // Predicated region
      $region45: #{first_cell_forward.8} parent=43 // pred_check
        %p384 = pneg %p128
      $region46: #{first_cell_forward.8} parent=43 // pred_check_branch
        %386 = sbr.rel (%p384) target = $region48
      $region47: #{first_cell_forward.8} parent=43 // pred_region
        %s387 = smul.u32 8, %s16
        %p388 = scmp.lt.s32.totalorder %s387, 15
        %s389 = scalar_select %p388, %s387, 15
        %s390 = smul.addr %s389, 8
        %s391 = scalar_lea.vmem %s4, %s390
      $region48: #{first_cell_forward.8} parent=43 // pred_fallthru
        _
    $region44: #{first_cell_forward.8} parent=5 // pred_fallthru
      _
  $region6: #{first_cell_forward.8} parent=0 // loop_footer
    %s14 = sadd.s32 1, %s10
  $region7: #{first_cell_forward.8} parent=0 // loop_footer_branch
    %9 = sbr.rel target = $region3
  $region8: #{first_cell_forward.8} parent=0 // loop_exit
    _

// kernel: first_cell_forward.6
$region0: #{first_cell_forward.6}
  #allocation0 [shape = 'u32[]', space=smem, size = 0x4, offset = 0x4, fixed_abs, tag = 'smem constant byte address 0x4 - core index']
  #allocation1 [shape = 'u32[144,128]{1,0:T(1,128)}', space=vmem, size = 0x12000, scoped, tag = 'internal scratch']
  %s0 = inlined_call_operand.vmem [shape: f32[128,48], index: 0, kind: input, shape index: {}]
  %s1 = inlined_call_operand.vmem [shape: bf16[48,32], index: 1, kind: input, shape index: {}]
  %s2 = inlined_call_operand.vmem [shape: f32[1,32], index: 2, kind: input, shape index: {}]
  %s3 = inlined_call_operand.vmem [shape: f32[1,32], index: 3, kind: input, shape index: {}]
  %s4 = inlined_call_operand.vmem [shape: f32[128,32], index: 4, kind: output, shape index: {}]
  %s5 = sld [smem:[#allocation0]]
  $region49: #{first_cell_forward.6} parent=0
    _
  %s7 = ssub.s32 1, %s5
  %s8 = scalar_select 0, %s7, %s5
  loop: start=0, step=1, limit=4
  $region2: #{first_cell_forward.6} parent=0 // loop_pre_header
    _
  $region3: #{first_cell_forward.6} parent=0 // loop_header
    %s10 = sphi 0, %s14
    %p11 = scmp.ge.s32.totalorder %s10, 4
    %s20 = sphi 0, %s22
    %s23 = sphi 0, %s20
    %s24 = sphi 0, %s23
    %s40 = sphi 0, %s24
    %s44 = sphi 0, %s44
    %s46 = sphi 0, %s44
    %s47 = sphi 0, %s46
    %s61 = sphi 0, %s47
    %s65 = sphi 0, %s65
    %s67 = sphi 0, %s65
    %s68 = sphi 0, %s67
    %s82 = sphi 0, %s68
    %s86 = sphi 0, %s86
    %s88 = sphi 0, %s86
    %s89 = sphi 0, %s88
    %s103 = sphi 0, %s89
    %s109 = sphi 0, %s111
    %s112 = sphi 0, %s109
    %s113 = sphi 0, %s112
    %s129 = sphi 0, %s113
  $region4: #{first_cell_forward.6} parent=0 // loop_header_branch
    %13 = sbr.rel (%p11) target = $region8
  $region5: #{first_cell_forward.6} parent=0 // loop_body
    %s15 = ssub.s32 %s10, 1
    %s16 = ssub.s32 %s10, 2
    %s17 = sadd.s32 %s10, 1
    %s18 = ssub.s32 %s10, %s17
    %p19 = scmp.eq.s32.totalorder %s18, 0
    %s21 = sadd.s32 %s20, 1
    %s22 = scalar_select %p19, %s20, %s21
    %p25 = pneg %p19
    %p26 = scmp.eq.s32.totalorder %s10, 1
    %p27 = por %p25, %p26
    %p28 = scmp.ne.s32.totalorder %s20, %s23
    %p29 = scmp.eq.s32.totalorder %s10, 0
    %p30 = por %p28, %p29
    %p31 = scmp.ne.s32.totalorder %s20, %s23
    %p32 = scmp.eq.s32.totalorder %s15, 1
    %p33 = por %p31, %p32
    %p34 = scmp.ne.s32.totalorder %s23, %s24
    %p35 = scmp.eq.s32.totalorder %s15, 0
    %p36 = por %p34, %p35
    %p37 = scmp.ne.s32.totalorder %s23, %s24
    %p38 = scmp.eq.s32.totalorder %s16, 1
    %p39 = por %p37, %p38
    %p41 = scmp.ne.s32.totalorder %s24, %s40
    %p42 = scmp.eq.s32.totalorder %s16, 0
    %p43 = por %p41, %p42
    %s45 = sadd.s32 %s44, 1
    %p48 = scmp.eq.s32.totalorder %s10, 1
    %p49 = scmp.ne.s32.totalorder %s44, %s46
    %p50 = scmp.eq.s32.totalorder %s10, 0
    %p51 = por %p49, %p50
    %p52 = scmp.ne.s32.totalorder %s44, %s46
    %p53 = scmp.eq.s32.totalorder %s15, 1
    %p54 = por %p52, %p53
    %p55 = scmp.ne.s32.totalorder %s46, %s47
    %p56 = scmp.eq.s32.totalorder %s15, 0
    %p57 = por %p55, %p56
    %p58 = scmp.ne.s32.totalorder %s46, %s47
    %p59 = scmp.eq.s32.totalorder %s16, 1
    %p60 = por %p58, %p59
    %p62 = scmp.ne.s32.totalorder %s47, %s61
    %p63 = scmp.eq.s32.totalorder %s16, 0
    %p64 = por %p62, %p63
    %s66 = sadd.s32 %s65, 1
    %p69 = scmp.eq.s32.totalorder %s10, 1
    %p70 = scmp.ne.s32.totalorder %s65, %s67
    %p71 = scmp.eq.s32.totalorder %s10, 0
    %p72 = por %p70, %p71
    %p73 = scmp.ne.s32.totalorder %s65, %s67
    %p74 = scmp.eq.s32.totalorder %s15, 1
    %p75 = por %p73, %p74
    %p76 = scmp.ne.s32.totalorder %s67, %s68
    %p77 = scmp.eq.s32.totalorder %s15, 0
    %p78 = por %p76, %p77
    %p79 = scmp.ne.s32.totalorder %s67, %s68
    %p80 = scmp.eq.s32.totalorder %s16, 1
    %p81 = por %p79, %p80
    %p83 = scmp.ne.s32.totalorder %s68, %s82
    %p84 = scmp.eq.s32.totalorder %s16, 0
    %p85 = por %p83, %p84
    %s87 = sadd.s32 %s86, 1
    %p90 = scmp.eq.s32.totalorder %s10, 1
    %p91 = scmp.ne.s32.totalorder %s86, %s88
    %p92 = scmp.eq.s32.totalorder %s10, 0
    %p93 = por %p91, %p92
    %p94 = scmp.ne.s32.totalorder %s86, %s88
    %p95 = scmp.eq.s32.totalorder %s15, 1
    %p96 = por %p94, %p95
    %p97 = scmp.ne.s32.totalorder %s88, %s89
    %p98 = scmp.eq.s32.totalorder %s15, 0
    %p99 = por %p97, %p98
    %p100 = scmp.ne.s32.totalorder %s88, %s89
    %p101 = scmp.eq.s32.totalorder %s16, 1
    %p102 = por %p100, %p101
    %p104 = scmp.ne.s32.totalorder %s89, %s103
    %p105 = scmp.eq.s32.totalorder %s16, 0
    %p106 = por %p104, %p105
    %s107 = ssub.s32 %s10, %s17
    %p108 = scmp.eq.s32.totalorder %s107, 0
    %s110 = sadd.s32 %s109, 1
    %s111 = scalar_select %p108, %s109, %s110
    %p114 = pneg %p108
    %p115 = scmp.eq.s32.totalorder %s10, 1
    %p116 = por %p114, %p115
    %p117 = scmp.ne.s32.totalorder %s109, %s112
    %p118 = scmp.eq.s32.totalorder %s10, 0
    %p119 = por %p117, %p118
    %p120 = scmp.ne.s32.totalorder %s109, %s112
    %p121 = scmp.eq.s32.totalorder %s15, 1
    %p122 = por %p120, %p121
    %p123 = scmp.ne.s32.totalorder %s112, %s113
    %p124 = scmp.eq.s32.totalorder %s15, 0
    %p125 = por %p123, %p124
    %p126 = scmp.ne.s32.totalorder %s112, %s113
    %p127 = scmp.eq.s32.totalorder %s16, 1
    %p128 = por %p126, %p127
    %p130 = scmp.ne.s32.totalorder %s113, %s129
    %p131 = scmp.eq.s32.totalorder %s16, 0
    %p132 = por %p130, %p131
    %p133 = scmp.le.s32.totalorder 1, %s10
    %p134 = scmp.lt.s32.totalorder %s10, 3
    %p135 = pnand %p133, %p134
    %p136 = pneg %p135
    // Predicated region
    $region9: #{first_cell_forward.6} parent=5 // pred_check
      _
    $region10: #{first_cell_forward.6} parent=5 // pred_check_branch
      %138 = sbr.rel (%p135) target = $region12
    $region11: #{first_cell_forward.6} parent=5 // pred_region
      %s139 = ssub.s32 %s10, 1
      // Predicated region
      $region13: #{first_cell_forward.6} parent=11 // pred_check
        %p140 = pneg %p57
      $region14: #{first_cell_forward.6} parent=11 // pred_check_branch
        %142 = sbr.rel (%p140) target = $region16
      $region15: #{first_cell_forward.6} parent=11 // pred_region
        _
      $region16: #{first_cell_forward.6} parent=11 // pred_fallthru
        _
      // Predicated region
      $region17: #{first_cell_forward.6} parent=11 // pred_check
        %p143 = pneg %p78
      $region18: #{first_cell_forward.6} parent=11 // pred_check_branch
        %145 = sbr.rel (%p143) target = $region20
      $region19: #{first_cell_forward.6} parent=11 // pred_region
        _
      $region20: #{first_cell_forward.6} parent=11 // pred_fallthru
        _
      // Predicated region
      $region21: #{first_cell_forward.6} parent=11 // pred_check
        %p146 = pneg %p99
      $region22: #{first_cell_forward.6} parent=11 // pred_check_branch
        %148 = sbr.rel (%p146) target = $region24
      $region23: #{first_cell_forward.6} parent=11 // pred_region
        _
      $region24: #{first_cell_forward.6} parent=11 // pred_fallthru
        _
    $region12: #{first_cell_forward.6} parent=5 // pred_fallthru
      _
    %p149 = scmp.lt.s32.totalorder %s10, 2
    // Predicated region
    $region25: #{first_cell_forward.6} parent=5 // pred_check
      %p150 = pneg %p149
    $region26: #{first_cell_forward.6} parent=5 // pred_check_branch
      %152 = sbr.rel (%p150) target = $region28
    $region27: #{first_cell_forward.6} parent=5 // pred_region
      // Predicated region
      $region29: #{first_cell_forward.6} parent=27 // pred_check
        %p153 = pneg %p30
      $region30: #{first_cell_forward.6} parent=27 // pred_check_branch
        %155 = sbr.rel (%p153) target = $region32
      $region31: #{first_cell_forward.6} parent=27 // pred_region
        %s156 = smul.u32 8, %s10
        %p157 = scmp.lt.s32.totalorder %s156, 15
        %s158 = scalar_select %p157, %s156, 15
        %s159 = smul.addr %s158, 8
        %s160 = scalar_lea.vmem %s0, %s159
        %s161 = smul.u32 8, %s10
      $region32: #{first_cell_forward.6} parent=27 // pred_fallthru
        _
    $region28: #{first_cell_forward.6} parent=5 // pred_fallthru
      _
    %p162 = scmp.le.s32.totalorder 1, %s10
    %p163 = scmp.lt.s32.totalorder %s10, 3
    %p164 = pnand %p162, %p163
    %p165 = pneg %p164
    // Predicated region
    $region33: #{first_cell_forward.6} parent=5 // pred_check
      _
    $region34: #{first_cell_forward.6} parent=5 // pred_check_branch
      %167 = sbr.rel (%p164) target = $region36
    $region35: #{first_cell_forward.6} parent=5 // pred_region
      %s168 = ssub.s32 %s10, 1
      %s169 = smul.u32 8, %s15
      %p170 = scmp.lt.s32.totalorder %s169, 15
      %s171 = scalar_select %p170, %s169, 15
      %s172 = smul.addr %s171, 8
      %s173 = scalar_lea.vmem %s0, %s172
      %p174 = pneg %p36
      %p175 = pneg %p33
      %p176 = pneg %p57
      %p177 = pneg %p54
      %p178 = pneg %p78
      %p179 = pneg %p75
      %p180 = pneg %p99
      %p181 = pneg %p96
      %p182 = pneg %p125
      %p183 = pneg %p122
      %s184 = smul.u32 8, %s15
      %p185 = scmp.lt.s32.totalorder %s184, 15
      %s186 = scalar_select %p185, %s184, 15
      %s187 = smul.addr %s186, 8
      %s188 = scalar_lea.vmem %s4, %s187
      %s189 = smul.u32 8, %s15
      %p190 = scmp.lt.s32.totalorder %s189, 15
      %s191 = scalar_select %p190, %s189, 15
      %s192 = smul.addr %s191, 8
      %s193 = scalar_lea.vmem %s0, %s192
      %s194 = smul.u32 8, %s15
      %s195 = smul.u32 8, %s15
      %p196 = scmp.lt.s32.totalorder %s195, 15
      %s197 = scalar_select %p196, %s195, 15
      %s198 = smul.addr %s197, 8
      %s199 = scalar_lea.vmem %s4, %s198
      %s200 = smul.u32 8, %s15
      %v202 = vld [vmem:[%s193] sm:$0xff]
      %v203 = vld [vmem:[%s193 + $0x8] sm:$0xff]
      %v204 = vld [vmem:[%s193 + $0x10] sm:$0xff]
      %v205 = vld [vmem:[%s193 + $0x18] sm:$0xff]
      %v206 = vld [vmem:[%s193 + $0x20] sm:$0xff]
      %v207 = vld [vmem:[%s193 + $0x28] sm:$0xff]
      %v208 = vld [vmem:[%s193 + $0x30] sm:$0xff]
      %v209 = vld [vmem:[%s193 + $0x38] sm:$0xff]
      %v210 = vmax.f32 %v202, 0.0
      %v211 = vmax.f32 %v203, 0.0
      %v212 = vmax.f32 %v204, 0.0
      %v213 = vmax.f32 %v205, 0.0
      %v214 = vmax.f32 %v206, 0.0
      %v215 = vmax.f32 %v207, 0.0
      %v216 = vmax.f32 %v208, 0.0
      %v217 = vmax.f32 %v209, 0.0
      %v218 = vpack.c.bf16 %v211, %v210
      %v219 = vpack.c.bf16 %v213, %v212
      %v220 = vpack.c.bf16 %v215, %v214
      %v221 = vpack.c.bf16 %v217, %v216
      %v222 = vld [vmem:[%s1] sm:$0xf]
      %v223 = vld [vmem:[%s1 + $0x4] sm:$0xf]
      %v224 = vld [vmem:[%s1 + $0x8] sm:$0xf]
      %v225 = vld [vmem:[%s1 + $0xc] sm:$0xf]
      %v226 = vld [vmem:[%s1 + $0x10] sm:$0xf]
      %v227 = vld [vmem:[%s1 + $0x14] sm:$0xf]
      %v234 = vunpack.c.l.b16 %v222
      %v235 = vunpack.c.l.b16 %v223
      %v236 = vunpack.c.l.b16 %v224
      %v237 = vunpack.c.l.b16 %v225
      %v238 = vunpack.c.l.b16 %v226
      %v239 = vunpack.c.l.b16 %v227
      %v240 = vpack.c.b16 %v235, %v234
      %v241 = vpack.c.b16 %v237, %v236
      %v242 = vpack.c.b16 %v239, %v238
      %vm246 = vcmask 392192
      %v248 = vsel %vm246, %v218, 0
      %v251 = vsel %vm246, %v219, 0
      %v254 = vsel %vm246, %v220, 0
      %v257 = vsel %vm246, %v221, 0
      %259 = vmatprep.subr.bf16.mxu0 0
      %260 = vmatpush1.bf16.msra.mxu0 0
      %261 = vmatprep.subr.bf16.mxu0 0
      %262 = vmatpush1.bf16.msra.mxu0 0
      %263 = vmatprep.subr.bf16.mxu0 0
      %264 = vmatpush1.bf16.msra.mxu0 0
      %265 = vmatprep.subr.bf16.mxu0 0
      %266 = vmatpush1.bf16.msra.mxu0 0
      %267 = vmatprep.subr.bf16.mxu0 0
      %268 = vmatpush1.bf16.msra.mxu0 0
      %269 = vmatprep.subr.bf16.mxu0 0
      %270 = vmatpush1.bf16.msra.mxu0 %v242
      %271 = vmatprep.subr.bf16.mxu0 0
      %272 = vmatpush1.bf16.msra.mxu0 %v241
      %273 = vmatprep.subr.bf16.mxu0 0
      %274 = vmatpush1.bf16.msra.mxu0 %v240
      %275 = vmatprep.subr.bf16.mxu0 0
      %276 = vmatpush2.bf16.msra.mxu0 0
      %277 = vmatprep.subr.bf16.mxu0 0
      %278 = vmatpush2.bf16.msra.mxu0 0
      %279 = vmatprep.subr.bf16.mxu0 0
      %280 = vmatpush2.bf16.msra.mxu0 0
      %281 = vmatprep.subr.bf16.mxu0 0
      %282 = vmatpush2.bf16.msra.mxu0 0
      %283 = vmatprep.subr.bf16.mxu0 0
      %284 = vmatpush2.bf16.msra.mxu0 0
      %285 = vmatprep.subr.bf16.mxu0 0
      %286 = vmatpush2.bf16.msra.mxu0 0
      %287 = vmatprep.subr.bf16.mxu0 0
      %288 = vmatpush2.bf16.msra.mxu0 0
      %289 = vmatprep.subr.bf16.mxu0 0
      %290 = vmatpush2.bf16.msra.mxu0 0
      %291 = vmatprep.mubr.bf16.mxu0 0
      %292 = vmatmul.mubr.bf16.gmra.mxu0 %v248
      %v293 = vpop.f32.mrf.mxu0
      %v294 = vadd.f32 0.0, %v293
      %v295 = vpop.f32.mrf.mxu0
      %v296 = vpop.f32.mrf.mxu0
      %v297 = vadd.f32 0.0, %v296
      %v298 = vpop.f32.mrf.mxu0
      %299 = vmatprep.mubr.bf16.mxu0 0
      %300 = vmatmul.mubr.bf16.gmra.mxu0 %v251
      %v301 = vpop.f32.mrf.mxu0
      %v302 = vadd.f32 0.0, %v301
      %v303 = vpop.f32.mrf.mxu0
      %v304 = vpop.f32.mrf.mxu0
      %v305 = vadd.f32 0.0, %v304
      %v306 = vpop.f32.mrf.mxu0
      %307 = vmatprep.mubr.bf16.mxu0 0
      %308 = vmatmul.mubr.bf16.gmra.mxu0 %v254
      %v309 = vpop.f32.mrf.mxu0
      %v310 = vadd.f32 0.0, %v309
      %v311 = vpop.f32.mrf.mxu0
      %v312 = vpop.f32.mrf.mxu0
      %v313 = vadd.f32 0.0, %v312
      %v314 = vpop.f32.mrf.mxu0
      %315 = vmatprep.mubr.bf16.mxu0 0
      %316 = vmatmul.mubr.bf16.gmra.mxu0 %v257
      %v317 = vpop.f32.mrf.mxu0
      %v318 = vadd.f32 0.0, %v317
      %v319 = vpop.f32.mrf.mxu0
      %v320 = vpop.f32.mrf.mxu0
      %v321 = vadd.f32 0.0, %v320
      %v322 = vpop.f32.mrf.mxu0
      %323 = vdwg.mxu0
      %v324 = vld [vmem:[%s2] sm:$0x1]
      %v326 = vlaneseq
      %v327 = vshrl.u32 %v326, 7
      %v328 = vsub.s32 0, %v327
      %v329 = vrot.slane %v324, %v328
      %v331 = vmul.f32 %v294, %v329
      %v332 = vmul.f32 %v297, %v329
      %v333 = vmul.f32 %v302, %v329
      %v334 = vmul.f32 %v305, %v329
      %v335 = vmul.f32 %v310, %v329
      %v336 = vmul.f32 %v313, %v329
      %v337 = vmul.f32 %v318, %v329
      %v338 = vmul.f32 %v321, %v329
      %v339 = vld [vmem:[%s3] sm:$0x1]
      %v341 = vlaneseq
      %v342 = vshrl.u32 %v341, 7
      %v343 = vsub.s32 0, %v342
      %v344 = vrot.slane %v339, %v343
      %v346 = vadd.f32 %v331, %v344
      %v347 = vadd.f32 %v332, %v344
      %v348 = vadd.f32 %v333, %v344
      %v349 = vadd.f32 %v334, %v344
      %v350 = vadd.f32 %v335, %v344
      %v351 = vadd.f32 %v336, %v344
      %v352 = vadd.f32 %v337, %v344
      %v353 = vadd.f32 %v338, %v344
      %vm354 = vcmask 261120
      %355 = vst.msk [vmem:[%s199] sm:$0xff] %vm354, %v346
      %356 = vst.msk [vmem:[%s199 + $0x8] sm:$0xff] %vm354, %v347
      %357 = vst.msk [vmem:[%s199 + $0x10] sm:$0xff] %vm354, %v348
      %358 = vst.msk [vmem:[%s199 + $0x18] sm:$0xff] %vm354, %v349
      %359 = vst.msk [vmem:[%s199 + $0x20] sm:$0xff] %vm354, %v350
      %360 = vst.msk [vmem:[%s199 + $0x28] sm:$0xff] %vm354, %v351
      %361 = vst.msk [vmem:[%s199 + $0x30] sm:$0xff] %vm354, %v352
      %362 = vst.msk [vmem:[%s199 + $0x38] sm:$0xff] %vm354, %v353
      %s363 = smul.u32 8, %s15
      %p364 = scmp.lt.s32.totalorder %s363, 15
      %s365 = scalar_select %p364, %s363, 15
      %s366 = smul.addr %s365, 8
      %s367 = scalar_lea.vmem %s4, %s366
      // Predicated region
      $region37: #{first_cell_forward.6} parent=35 // pred_check
        %p368 = pneg %p122
      $region38: #{first_cell_forward.6} parent=35 // pred_check_branch
        %370 = sbr.rel (%p368) target = $region40
      $region39: #{first_cell_forward.6} parent=35 // pred_region
        %s371 = smul.u32 8, %s15
      $region40: #{first_cell_forward.6} parent=35 // pred_fallthru
        _
    $region36: #{first_cell_forward.6} parent=5 // pred_fallthru
      _
    %p372 = scmp.le.s32.totalorder 2, %s10
    // Predicated region
    $region41: #{first_cell_forward.6} parent=5 // pred_check
      %p373 = pneg %p372
    $region42: #{first_cell_forward.6} parent=5 // pred_check_branch
      %375 = sbr.rel (%p373) target = $region44
    $region43: #{first_cell_forward.6} parent=5 // pred_region
      %s376 = ssub.s32 %s10, 2
      // Predicated region
      $region45: #{first_cell_forward.6} parent=43 // pred_check
        %p377 = pneg %p128
      $region46: #{first_cell_forward.6} parent=43 // pred_check_branch
        %379 = sbr.rel (%p377) target = $region48
      $region47: #{first_cell_forward.6} parent=43 // pred_region
        %s380 = smul.u32 8, %s16
        %p381 = scmp.lt.s32.totalorder %s380, 15
        %s382 = scalar_select %p381, %s380, 15
        %s383 = smul.addr %s382, 8
        %s384 = scalar_lea.vmem %s4, %s383
      $region48: #{first_cell_forward.6} parent=43 // pred_fallthru
        _
    $region44: #{first_cell_forward.6} parent=5 // pred_fallthru
      _
  $region6: #{first_cell_forward.6} parent=0 // loop_footer
    %s14 = sadd.s32 1, %s10
  $region7: #{first_cell_forward.6} parent=0 // loop_footer_branch
    %9 = sbr.rel target = $region3
  $region8: #{first_cell_forward.6} parent=0 // loop_exit
    _

// kernel: first_cell_forward.7
$region0: #{first_cell_forward.7}
  #allocation0 [shape = 'u32[]', space=smem, size = 0x4, offset = 0x4, fixed_abs, tag = 'smem constant byte address 0x4 - core index']
  #allocation1 [shape = 'u32[144,128]{1,0:T(1,128)}', space=vmem, size = 0x12000, scoped, tag = 'internal scratch']
  #allocation2 [shape = 'f32[12,12,80]{2,1,0:T(8,128)}', space=vmem, size = 0x18000, scoped, tag = 'scratch operand']
  %s0 = inlined_call_operand.vmem [shape: f32[2,8,8,80], index: 0, kind: input, shape index: {}]
  %s1 = inlined_call_operand.vmem [shape: f32[25,80], index: 1, kind: input, shape index: {}]
  %s2 = inlined_call_operand.vmem [shape: f32[2,8,8,80], index: 2, kind: output, shape index: {}]
  %s3 = sld [smem:[#allocation0]]
  $region41: #{first_cell_forward.7} parent=0
    _
  %s5 = ssub.s32 1, %s3
  %s6 = scalar_select 0, %s5, %s3
  loop: start=0, step=1, limit=4
  $region2: #{first_cell_forward.7} parent=0 // loop_pre_header
    _
  $region3: #{first_cell_forward.7} parent=0 // loop_header
    %s8 = sphi 0, %s12
    %p9 = scmp.ge.s32.totalorder %s8, 4
    %s18 = sphi 0, %s20
    %s21 = sphi 0, %s18
    %s22 = sphi 0, %s21
    %s38 = sphi 0, %s22
    %s42 = sphi 0, %s42
    %s44 = sphi 0, %s42
    %s45 = sphi 0, %s44
    %s59 = sphi 0, %s45
    %s65 = sphi 0, %s67
    %s68 = sphi 0, %s65
    %s69 = sphi 0, %s68
    %s85 = sphi 0, %s69
  $region4: #{first_cell_forward.7} parent=0 // loop_header_branch
    %11 = sbr.rel (%p9) target = $region8
  $region5: #{first_cell_forward.7} parent=0 // loop_body
    %s13 = ssub.s32 %s8, 1
    %s14 = ssub.s32 %s8, 2
    %s15 = sadd.s32 %s8, 1
    %s16 = ssub.s32 %s8, %s15
    %p17 = scmp.eq.s32.totalorder %s16, 0
    %s19 = sadd.s32 %s18, 1
    %s20 = scalar_select %p17, %s18, %s19
    %p23 = pneg %p17
    %p24 = scmp.eq.s32.totalorder %s8, 1
    %p25 = por %p23, %p24
    %p26 = scmp.ne.s32.totalorder %s18, %s21
    %p27 = scmp.eq.s32.totalorder %s8, 0
    %p28 = por %p26, %p27
    %p29 = scmp.ne.s32.totalorder %s18, %s21
    %p30 = scmp.eq.s32.totalorder %s13, 1
    %p31 = por %p29, %p30
    %p32 = scmp.ne.s32.totalorder %s21, %s22
    %p33 = scmp.eq.s32.totalorder %s13, 0
    %p34 = por %p32, %p33
    %p35 = scmp.ne.s32.totalorder %s21, %s22
    %p36 = scmp.eq.s32.totalorder %s14, 1
    %p37 = por %p35, %p36
    %p39 = scmp.ne.s32.totalorder %s22, %s38
    %p40 = scmp.eq.s32.totalorder %s14, 0
    %p41 = por %p39, %p40
    %s43 = sadd.s32 %s42, 1
    %p46 = scmp.eq.s32.totalorder %s8, 1
    %p47 = scmp.ne.s32.totalorder %s42, %s44
    %p48 = scmp.eq.s32.totalorder %s8, 0
    %p49 = por %p47, %p48
    %p50 = scmp.ne.s32.totalorder %s42, %s44
    %p51 = scmp.eq.s32.totalorder %s13, 1
    %p52 = por %p50, %p51
    %p53 = scmp.ne.s32.totalorder %s44, %s45
    %p54 = scmp.eq.s32.totalorder %s13, 0
    %p55 = por %p53, %p54
    %p56 = scmp.ne.s32.totalorder %s44, %s45
    %p57 = scmp.eq.s32.totalorder %s14, 1
    %p58 = por %p56, %p57
    %p60 = scmp.ne.s32.totalorder %s45, %s59
    %p61 = scmp.eq.s32.totalorder %s14, 0
    %p62 = por %p60, %p61
    %s63 = ssub.s32 %s8, %s15
    %p64 = scmp.eq.s32.totalorder %s63, 0
    %s66 = sadd.s32 %s65, 1
    %s67 = scalar_select %p64, %s65, %s66
    %p70 = pneg %p64
    %p71 = scmp.eq.s32.totalorder %s8, 1
    %p72 = por %p70, %p71
    %p73 = scmp.ne.s32.totalorder %s65, %s68
    %p74 = scmp.eq.s32.totalorder %s8, 0
    %p75 = por %p73, %p74
    %p76 = scmp.ne.s32.totalorder %s65, %s68
    %p77 = scmp.eq.s32.totalorder %s13, 1
    %p78 = por %p76, %p77
    %p79 = scmp.ne.s32.totalorder %s68, %s69
    %p80 = scmp.eq.s32.totalorder %s13, 0
    %p81 = por %p79, %p80
    %p82 = scmp.ne.s32.totalorder %s68, %s69
    %p83 = scmp.eq.s32.totalorder %s14, 1
    %p84 = por %p82, %p83
    %p86 = scmp.ne.s32.totalorder %s69, %s85
    %p87 = scmp.eq.s32.totalorder %s14, 0
    %p88 = por %p86, %p87
    %p89 = scmp.le.s32.totalorder 1, %s8
    %p90 = scmp.lt.s32.totalorder %s8, 3
    %p91 = pnand %p89, %p90
    %p92 = pneg %p91
    // Predicated region
    $region9: #{first_cell_forward.7} parent=5 // pred_check
      _
    $region10: #{first_cell_forward.7} parent=5 // pred_check_branch
      %94 = sbr.rel (%p91) target = $region12
    $region11: #{first_cell_forward.7} parent=5 // pred_region
      %s95 = ssub.s32 %s8, 1
      // Predicated region
      $region13: #{first_cell_forward.7} parent=11 // pred_check
        %p96 = pneg %p55
      $region14: #{first_cell_forward.7} parent=11 // pred_check_branch
        %98 = sbr.rel (%p96) target = $region16
      $region15: #{first_cell_forward.7} parent=11 // pred_region
        _
      $region16: #{first_cell_forward.7} parent=11 // pred_fallthru
        _
    $region12: #{first_cell_forward.7} parent=5 // pred_fallthru
      _
    %p99 = scmp.lt.s32.totalorder %s8, 2
    // Predicated region
    $region17: #{first_cell_forward.7} parent=5 // pred_check
      %p100 = pneg %p99
    $region18: #{first_cell_forward.7} parent=5 // pred_check_branch
      %102 = sbr.rel (%p100) target = $region20
    $region19: #{first_cell_forward.7} parent=5 // pred_region
      // Predicated region
      $region21: #{first_cell_forward.7} parent=19 // pred_check
        %p103 = pneg %p28
      $region22: #{first_cell_forward.7} parent=19 // pred_check_branch
        %105 = sbr.rel (%p103) target = $region24
      $region23: #{first_cell_forward.7} parent=19 // pred_region
        %p106 = scmp.lt.s32.totalorder %s8, 1
        %s107 = scalar_select %p106, %s8, 1
        %s108 = smul.addr %s107, 8
        %s109 = smul.addr %s108, 8
        %s110 = scalar_lea.vmem %s0, %s109
      $region24: #{first_cell_forward.7} parent=19 // pred_fallthru
        _
    $region20: #{first_cell_forward.7} parent=5 // pred_fallthru
      _
    %p111 = scmp.le.s32.totalorder 1, %s8
    %p112 = scmp.lt.s32.totalorder %s8, 3
    %p113 = pnand %p111, %p112
    %p114 = pneg %p113
    // Predicated region
    $region25: #{first_cell_forward.7} parent=5 // pred_check
      _
    $region26: #{first_cell_forward.7} parent=5 // pred_check_branch
      %116 = sbr.rel (%p113) target = $region28
    $region27: #{first_cell_forward.7} parent=5 // pred_region
      %s117 = ssub.s32 %s8, 1
      %p118 = scmp.lt.s32.totalorder %s13, 1
      %s119 = scalar_select %p118, %s13, 1
      %s120 = smul.addr %s119, 8
      %s121 = smul.addr %s120, 8
      %s122 = scalar_lea.vmem %s0, %s121
      %p123 = pneg %p34
      %p124 = pneg %p31
      %p125 = pneg %p55
      %p126 = pneg %p52
      %p127 = pneg %p81
      %p128 = pneg %p78
      %p129 = scmp.lt.s32.totalorder %s13, 1
      %s130 = scalar_select %p129, %s13, 1
      %s131 = smul.addr %s130, 8
      %s132 = smul.addr %s131, 8
      %s133 = scalar_lea.vmem %s2, %s132
      %p134 = scmp.lt.s32.totalorder %s13, 1
      %s135 = scalar_select %p134, %s13, 1
      %s136 = smul.addr %s135, 8
      %s137 = smul.addr %s136, 8
      %s138 = scalar_lea.vmem %s0, %s137
      %p139 = scmp.lt.s32.totalorder %s13, 1
      %s140 = scalar_select %p139, %s13, 1
      %s141 = smul.addr %s140, 8
      %s142 = smul.addr %s141, 8
      %s143 = scalar_lea.vmem %s2, %s142
      %vm144 = vcmask 654336
      %145 = vst.msk [vmem:[#allocation2] sm:$0xff] %vm144, 0.0
      %vm146 = vcmask 650240
      %147 = vst.msk [vmem:[#allocation2 + $0x8] sm:$0xf] %vm146, 0.0
      %148 = vst.msk [vmem:[#allocation2 + $0x10] sm:$0xff] %vm144, 0.0
      %149 = vst.msk [vmem:[#allocation2 + $0x18] sm:$0xf] %vm146, 0.0
      %150 = vst.msk [vmem:[#allocation2 + $0x20] sm:$0xff] %vm144, 0.0
      %151 = vst.msk [vmem:[#allocation2 + $0x28] sm:$0xf] %vm146, 0.0
      %152 = vst.msk [vmem:[#allocation2 + $0x30] sm:$0xff] %vm144, 0.0
      %153 = vst.msk [vmem:[#allocation2 + $0x38] sm:$0xf] %vm146, 0.0
      %154 = vst.msk [vmem:[#allocation2 + $0x40] sm:$0xff] %vm144, 0.0
      %155 = vst.msk [vmem:[#allocation2 + $0x48] sm:$0xf] %vm146, 0.0
      %156 = vst.msk [vmem:[#allocation2 + $0x50] sm:$0xff] %vm144, 0.0
      %157 = vst.msk [vmem:[#allocation2 + $0x58] sm:$0xf] %vm146, 0.0
      %158 = vst.msk [vmem:[#allocation2 + $0x60] sm:$0xff] %vm144, 0.0
      %159 = vst.msk [vmem:[#allocation2 + $0x68] sm:$0xf] %vm146, 0.0
      %160 = vst.msk [vmem:[#allocation2 + $0x70] sm:$0xff] %vm144, 0.0
      %161 = vst.msk [vmem:[#allocation2 + $0x78] sm:$0xf] %vm146, 0.0
      %162 = vst.msk [vmem:[#allocation2 + $0x80] sm:$0xff] %vm144, 0.0
      %163 = vst.msk [vmem:[#allocation2 + $0x88] sm:$0xf] %vm146, 0.0
      %164 = vst.msk [vmem:[#allocation2 + $0x90] sm:$0xff] %vm144, 0.0
      %165 = vst.msk [vmem:[#allocation2 + $0x98] sm:$0xf] %vm146, 0.0
      %166 = vst.msk [vmem:[#allocation2 + $0xa0] sm:$0xff] %vm144, 0.0
      %167 = vst.msk [vmem:[#allocation2 + $0xa8] sm:$0xf] %vm146, 0.0
      %168 = vst.msk [vmem:[#allocation2 + $0xb0] sm:$0xff] %vm144, 0.0
      %169 = vst.msk [vmem:[#allocation2 + $0xb8] sm:$0xf] %vm146, 0.0
      %v170 = vld [vmem:[%s138] sm:$0xff]
      %v171 = vld [vmem:[%s138 + $0x8] sm:$0xff]
      %v172 = vld [vmem:[%s138 + $0x10] sm:$0xff]
      %v173 = vld [vmem:[%s138 + $0x18] sm:$0xff]
      %v174 = vld [vmem:[%s138 + $0x20] sm:$0xff]
      %v175 = vld [vmem:[%s138 + $0x28] sm:$0xff]
      %v176 = vld [vmem:[%s138 + $0x30] sm:$0xff]
      %v177 = vld [vmem:[%s138 + $0x38] sm:$0xff]
      %v178 = vmax.f32 %v170, 0.0
      %v179 = vmax.f32 %v171, 0.0
      %v180 = vmax.f32 %v172, 0.0
      %v181 = vmax.f32 %v173, 0.0
      %v182 = vmax.f32 %v174, 0.0
      %v183 = vmax.f32 %v175, 0.0
      %v184 = vmax.f32 %v176, 0.0
      %v185 = vmax.f32 %v177, 0.0
      %s186 = scalar_lea.vmem [#allocation2], 32
      %187 = vst.msk [vmem:[%s186 + $0x2] sm:$0xff] %vm144, %v178
      %188 = vst.msk [vmem:[%s186 + $0x12] sm:$0xff] %vm144, %v179
      %189 = vst.msk [vmem:[%s186 + $0x22] sm:$0xff] %vm144, %v180
      %190 = vst.msk [vmem:[%s186 + $0x32] sm:$0xff] %vm144, %v181
      %191 = vst.msk [vmem:[%s186 + $0x42] sm:$0xff] %vm144, %v182
      %192 = vst.msk [vmem:[%s186 + $0x52] sm:$0xff] %vm144, %v183
      %193 = vst.msk [vmem:[%s186 + $0x62] sm:$0xff] %vm144, %v184
      %194 = vst.msk [vmem:[%s186 + $0x72] sm:$0xff] %vm144, %v185
      %v195 = vld [vmem:[#allocation2] sm:$0xff]
      %v196 = vld [vmem:[#allocation2 + $0x10] sm:$0xff]
      %v197 = vld [vmem:[#allocation2 + $0x20] sm:$0xff]
      %v198 = vld [vmem:[#allocation2 + $0x30] sm:$0xff]
      %v199 = vld [vmem:[#allocation2 + $0x40] sm:$0xff]
      %v200 = vld [vmem:[#allocation2 + $0x50] sm:$0xff]
      %v201 = vld [vmem:[#allocation2 + $0x60] sm:$0xff]
      %v202 = vld [vmem:[#allocation2 + $0x70] sm:$0xff]
      %v203 = vld [vmem:[%s1] sm:$0x1]
      %v204 = vlaneseq
      %v205 = vshrl.u32 %v204, 7
      %v206 = vsub.s32 0, %v205
      %v207 = vrot.slane %v203, %v206
      %v208 = vmul.f32 %v195, %v207
      %v209 = vmul.f32 %v196, %v207
      %v210 = vmul.f32 %v197, %v207
      %v211 = vmul.f32 %v198, %v207
      %v212 = vmul.f32 %v199, %v207
      %v213 = vmul.f32 %v200, %v207
      %v214 = vmul.f32 %v201, %v207
      %v215 = vmul.f32 %v202, %v207
      %v216 = vld [vmem:[#allocation2 + $0x1] sm:$0xff]
      %v217 = vld [vmem:[#allocation2 + $0x11] sm:$0xff]
      %v218 = vld [vmem:[#allocation2 + $0x21] sm:$0xff]
      %v219 = vld [vmem:[#allocation2 + $0x31] sm:$0xff]
      %v220 = vld [vmem:[#allocation2 + $0x41] sm:$0xff]
      %v221 = vld [vmem:[#allocation2 + $0x51] sm:$0xff]
      %v222 = vld [vmem:[#allocation2 + $0x61] sm:$0xff]
      %v223 = vld [vmem:[#allocation2 + $0x71] sm:$0xff]
      %v224 = vld [vmem:[%s1 + $0x1] sm:$0x1]
      %v225 = vlaneseq
      %v226 = vshrl.u32 %v225, 7
      %v227 = vsub.s32 0, %v226
      %v228 = vrot.slane %v224, %v227
      %v229 = vmul.f32 %v216, %v228
      %v230 = vmul.f32 %v217, %v228
      %v231 = vmul.f32 %v218, %v228
      %v232 = vmul.f32 %v219, %v228
      %v233 = vmul.f32 %v220, %v228
      %v234 = vmul.f32 %v221, %v228
      %v235 = vmul.f32 %v222, %v228
      %v236 = vmul.f32 %v223, %v228
      %v237 = vadd.f32 %v208, %v229
      %v238 = vadd.f32 %v209, %v230
      %v239 = vadd.f32 %v210, %v231
      %v240 = vadd.f32 %v211, %v232
      %v241 = vadd.f32 %v212, %v233
      %v242 = vadd.f32 %v213, %v234
      %v243 = vadd.f32 %v214, %v235
      %v244 = vadd.f32 %v215, %v236
      %v245 = vld [vmem:[#allocation2 + $0x2] sm:$0xff]
      %v246 = vld [vmem:[#allocation2 + $0x12] sm:$0xff]
      %v247 = vld [vmem:[#allocation2 + $0x22] sm:$0xff]
      %v248 = vld [vmem:[#allocation2 + $0x32] sm:$0xff]
      %v249 = vld [vmem:[#allocation2 + $0x42] sm:$0xff]
      %v250 = vld [vmem:[#allocation2 + $0x52] sm:$0xff]
      %v251 = vld [vmem:[#allocation2 + $0x62] sm:$0xff]
      %v252 = vld [vmem:[#allocation2 + $0x72] sm:$0xff]
      %v253 = vld [vmem:[%s1 + $0x2] sm:$0x1]
      %v254 = vlaneseq
      %v255 = vshrl.u32 %v254, 7
      %v256 = vsub.s32 0, %v255
      %v257 = vrot.slane %v253, %v256
      %v258 = vmul.f32 %v245, %v257
      %v259 = vmul.f32 %v246, %v257
      %v260 = vmul.f32 %v247, %v257
      %v261 = vmul.f32 %v248, %v257
      %v262 = vmul.f32 %v249, %v257
      %v263 = vmul.f32 %v250, %v257
      %v264 = vmul.f32 %v251, %v257
      %v265 = vmul.f32 %v252, %v257
      %v266 = vadd.f32 %v237, %v258
      %v267 = vadd.f32 %v238, %v259
      %v268 = vadd.f32 %v239, %v260
      %v269 = vadd.f32 %v240, %v261
      %v270 = vadd.f32 %v241, %v262
      %v271 = vadd.f32 %v242, %v263
      %v272 = vadd.f32 %v243, %v264
      %v273 = vadd.f32 %v244, %v265
      %v274 = vld [vmem:[#allocation2 + $0x3] sm:$0xff]
      %v275 = vld [vmem:[#allocation2 + $0x13] sm:$0xff]
      %v276 = vld [vmem:[#allocation2 + $0x23] sm:$0xff]
      %v277 = vld [vmem:[#allocation2 + $0x33] sm:$0xff]
      %v278 = vld [vmem:[#allocation2 + $0x43] sm:$0xff]
      %v279 = vld [vmem:[#allocation2 + $0x53] sm:$0xff]
      %v280 = vld [vmem:[#allocation2 + $0x63] sm:$0xff]
      %v281 = vld [vmem:[#allocation2 + $0x73] sm:$0xff]
      %v282 = vld [vmem:[%s1 + $0x3] sm:$0x1]
      %v283 = vlaneseq
      %v284 = vshrl.u32 %v283, 7
      %v285 = vsub.s32 0, %v284
      %v286 = vrot.slane %v282, %v285
      %v287 = vmul.f32 %v274, %v286
      %v288 = vmul.f32 %v275, %v286
      %v289 = vmul.f32 %v276, %v286
      %v290 = vmul.f32 %v277, %v286
      %v291 = vmul.f32 %v278, %v286
      %v292 = vmul.f32 %v279, %v286
      %v293 = vmul.f32 %v280, %v286
      %v294 = vmul.f32 %v281, %v286
      %v295 = vadd.f32 %v266, %v287
      %v296 = vadd.f32 %v267, %v288
      %v297 = vadd.f32 %v268, %v289
      %v298 = vadd.f32 %v269, %v290
      %v299 = vadd.f32 %v270, %v291
      %v300 = vadd.f32 %v271, %v292
      %v301 = vadd.f32 %v272, %v293
      %v302 = vadd.f32 %v273, %v294
      %v303 = vld [vmem:[#allocation2 + $0x4] sm:$0xff]
      %v304 = vld [vmem:[#allocation2 + $0x14] sm:$0xff]
      %v305 = vld [vmem:[#allocation2 + $0x24] sm:$0xff]
      %v306 = vld [vmem:[#allocation2 + $0x34] sm:$0xff]
      %v307 = vld [vmem:[#allocation2 + $0x44] sm:$0xff]
      %v308 = vld [vmem:[#allocation2 + $0x54] sm:$0xff]
      %v309 = vld [vmem:[#allocation2 + $0x64] sm:$0xff]
      %v310 = vld [vmem:[#allocation2 + $0x74] sm:$0xff]
      %v311 = vld [vmem:[%s1 + $0x4] sm:$0x1]
      %v312 = vlaneseq
      %v313 = vshrl.u32 %v312, 7
      %v314 = vsub.s32 0, %v313
      %v315 = vrot.slane %v311, %v314
      %v316 = vmul.f32 %v303, %v315
      %v317 = vmul.f32 %v304, %v315
      %v318 = vmul.f32 %v305, %v315
      %v319 = vmul.f32 %v306, %v315
      %v320 = vmul.f32 %v307, %v315
      %v321 = vmul.f32 %v308, %v315
      %v322 = vmul.f32 %v309, %v315
      %v323 = vmul.f32 %v310, %v315
      %v324 = vadd.f32 %v295, %v316
      %v325 = vadd.f32 %v296, %v317
      %v326 = vadd.f32 %v297, %v318
      %v327 = vadd.f32 %v298, %v319
      %v328 = vadd.f32 %v299, %v320
      %v329 = vadd.f32 %v300, %v321
      %v330 = vadd.f32 %v301, %v322
      %v331 = vadd.f32 %v302, %v323
      %s332 = scalar_lea.vmem [#allocation2], 16
      %v333 = vld [vmem:[%s332] sm:$0xff]
      %v334 = vld [vmem:[%s332 + $0x10] sm:$0xff]
      %v335 = vld [vmem:[%s332 + $0x20] sm:$0xff]
      %v336 = vld [vmem:[%s332 + $0x30] sm:$0xff]
      %v337 = vld [vmem:[%s332 + $0x40] sm:$0xff]
      %v338 = vld [vmem:[%s332 + $0x50] sm:$0xff]
      %v339 = vld [vmem:[%s332 + $0x60] sm:$0xff]
      %v340 = vld [vmem:[%s332 + $0x70] sm:$0xff]
      %v341 = vld [vmem:[%s1 + $0x5] sm:$0x1]
      %v342 = vlaneseq
      %v343 = vshrl.u32 %v342, 7
      %v344 = vsub.s32 0, %v343
      %v345 = vrot.slane %v341, %v344
      %v346 = vmul.f32 %v333, %v345
      %v347 = vmul.f32 %v334, %v345
      %v348 = vmul.f32 %v335, %v345
      %v349 = vmul.f32 %v336, %v345
      %v350 = vmul.f32 %v337, %v345
      %v351 = vmul.f32 %v338, %v345
      %v352 = vmul.f32 %v339, %v345
      %v353 = vmul.f32 %v340, %v345
      %v354 = vadd.f32 %v324, %v346
      %v355 = vadd.f32 %v325, %v347
      %v356 = vadd.f32 %v326, %v348
      %v357 = vadd.f32 %v327, %v349
      %v358 = vadd.f32 %v328, %v350
      %v359 = vadd.f32 %v329, %v351
      %v360 = vadd.f32 %v330, %v352
      %v361 = vadd.f32 %v331, %v353
      %v362 = vld [vmem:[%s332 + $0x1] sm:$0xff]
      %v363 = vld [vmem:[%s332 + $0x11] sm:$0xff]
      %v364 = vld [vmem:[%s332 + $0x21] sm:$0xff]
      %v365 = vld [vmem:[%s332 + $0x31] sm:$0xff]
      %v366 = vld [vmem:[%s332 + $0x41] sm:$0xff]
      %v367 = vld [vmem:[%s332 + $0x51] sm:$0xff]
      %v368 = vld [vmem:[%s332 + $0x61] sm:$0xff]
      %v369 = vld [vmem:[%s332 + $0x71] sm:$0xff]
      %v370 = vld [vmem:[%s1 + $0x6] sm:$0x1]
      %v371 = vlaneseq
      %v372 = vshrl.u32 %v371, 7
      %v373 = vsub.s32 0, %v372
      %v374 = vrot.slane %v370, %v373
      %v375 = vmul.f32 %v362, %v374
      %v376 = vmul.f32 %v363, %v374
      %v377 = vmul.f32 %v364, %v374
      %v378 = vmul.f32 %v365, %v374
      %v379 = vmul.f32 %v366, %v374
      %v380 = vmul.f32 %v367, %v374
      %v381 = vmul.f32 %v368, %v374
      %v382 = vmul.f32 %v369, %v374
      %v383 = vadd.f32 %v354, %v375
      %v384 = vadd.f32 %v355, %v376
      %v385 = vadd.f32 %v356, %v377
      %v386 = vadd.f32 %v357, %v378
      %v387 = vadd.f32 %v358, %v379
      %v388 = vadd.f32 %v359, %v380
      %v389 = vadd.f32 %v360, %v381
      %v390 = vadd.f32 %v361, %v382
      %v391 = vld [vmem:[%s332 + $0x2] sm:$0xff]
      %v392 = vld [vmem:[%s332 + $0x12] sm:$0xff]
      %v393 = vld [vmem:[%s332 + $0x22] sm:$0xff]
      %v394 = vld [vmem:[%s332 + $0x32] sm:$0xff]
      %v395 = vld [vmem:[%s332 + $0x42] sm:$0xff]
      %v396 = vld [vmem:[%s332 + $0x52] sm:$0xff]
      %v397 = vld [vmem:[%s332 + $0x62] sm:$0xff]
      %v398 = vld [vmem:[%s332 + $0x72] sm:$0xff]
      %v399 = vld [vmem:[%s1 + $0x7] sm:$0x1]
      %v400 = vlaneseq
      %v401 = vshrl.u32 %v400, 7
      %v402 = vsub.s32 0, %v401
      %v403 = vrot.slane %v399, %v402
      %v404 = vmul.f32 %v391, %v403
      %v405 = vmul.f32 %v392, %v403
      %v406 = vmul.f32 %v393, %v403
      %v407 = vmul.f32 %v394, %v403
      %v408 = vmul.f32 %v395, %v403
      %v409 = vmul.f32 %v396, %v403
      %v410 = vmul.f32 %v397, %v403
      %v411 = vmul.f32 %v398, %v403
      %v412 = vadd.f32 %v383, %v404
      %v413 = vadd.f32 %v384, %v405
      %v414 = vadd.f32 %v385, %v406
      %v415 = vadd.f32 %v386, %v407
      %v416 = vadd.f32 %v387, %v408
      %v417 = vadd.f32 %v388, %v409
      %v418 = vadd.f32 %v389, %v410
      %v419 = vadd.f32 %v390, %v411
      %v420 = vld [vmem:[%s332 + $0x3] sm:$0xff]
      %v421 = vld [vmem:[%s332 + $0x13] sm:$0xff]
      %v422 = vld [vmem:[%s332 + $0x23] sm:$0xff]
      %v423 = vld [vmem:[%s332 + $0x33] sm:$0xff]
      %v424 = vld [vmem:[%s332 + $0x43] sm:$0xff]
      %v425 = vld [vmem:[%s332 + $0x53] sm:$0xff]
      %v426 = vld [vmem:[%s332 + $0x63] sm:$0xff]
      %v427 = vld [vmem:[%s332 + $0x73] sm:$0xff]
      %v428 = vld [vmem:[%s1 + $0x8] sm:$0x1]
      %v429 = vlaneseq
      %v430 = vshrl.u32 %v429, 7
      %v431 = vsub.s32 0, %v430
      %v432 = vrot.slane %v428, %v431
      %v433 = vmul.f32 %v420, %v432
      %v434 = vmul.f32 %v421, %v432
      %v435 = vmul.f32 %v422, %v432
      %v436 = vmul.f32 %v423, %v432
      %v437 = vmul.f32 %v424, %v432
      %v438 = vmul.f32 %v425, %v432
      %v439 = vmul.f32 %v426, %v432
      %v440 = vmul.f32 %v427, %v432
      %v441 = vadd.f32 %v412, %v433
      %v442 = vadd.f32 %v413, %v434
      %v443 = vadd.f32 %v414, %v435
      %v444 = vadd.f32 %v415, %v436
      %v445 = vadd.f32 %v416, %v437
      %v446 = vadd.f32 %v417, %v438
      %v447 = vadd.f32 %v418, %v439
      %v448 = vadd.f32 %v419, %v440
      %v449 = vld [vmem:[%s332 + $0x4] sm:$0xff]
      %v450 = vld [vmem:[%s332 + $0x14] sm:$0xff]
      %v451 = vld [vmem:[%s332 + $0x24] sm:$0xff]
      %v452 = vld [vmem:[%s332 + $0x34] sm:$0xff]
      %v453 = vld [vmem:[%s332 + $0x44] sm:$0xff]
      %v454 = vld [vmem:[%s332 + $0x54] sm:$0xff]
      %v455 = vld [vmem:[%s332 + $0x64] sm:$0xff]
      %v456 = vld [vmem:[%s332 + $0x74] sm:$0xff]
      %v457 = vld [vmem:[%s1 + $0x9] sm:$0x1]
      %v458 = vlaneseq
      %v459 = vshrl.u32 %v458, 7
      %v460 = vsub.s32 0, %v459
      %v461 = vrot.slane %v457, %v460
      %v462 = vmul.f32 %v449, %v461
      %v463 = vmul.f32 %v450, %v461
      %v464 = vmul.f32 %v451, %v461
      %v465 = vmul.f32 %v452, %v461
      %v466 = vmul.f32 %v453, %v461
      %v467 = vmul.f32 %v454, %v461
      %v468 = vmul.f32 %v455, %v461
      %v469 = vmul.f32 %v456, %v461
      %v470 = vadd.f32 %v441, %v462
      %v471 = vadd.f32 %v442, %v463
      %v472 = vadd.f32 %v443, %v464
      %v473 = vadd.f32 %v444, %v465
      %v474 = vadd.f32 %v445, %v466
      %v475 = vadd.f32 %v446, %v467
      %v476 = vadd.f32 %v447, %v468
      %v477 = vadd.f32 %v448, %v469
      %v478 = vld [vmem:[%s186] sm:$0xff]
      %v479 = vld [vmem:[%s186 + $0x10] sm:$0xff]
      %v480 = vld [vmem:[%s186 + $0x20] sm:$0xff]
      %v481 = vld [vmem:[%s186 + $0x30] sm:$0xff]
      %v482 = vld [vmem:[%s186 + $0x40] sm:$0xff]
      %v483 = vld [vmem:[%s186 + $0x50] sm:$0xff]
      %v484 = vld [vmem:[%s186 + $0x60] sm:$0xff]
      %v485 = vld [vmem:[%s186 + $0x70] sm:$0xff]
      %v486 = vld [vmem:[%s1 + $0xa] sm:$0x1]
      %v487 = vlaneseq
      %v488 = vshrl.u32 %v487, 7
      %v489 = vsub.s32 0, %v488
      %v490 = vrot.slane %v486, %v489
      %v491 = vmul.f32 %v478, %v490
      %v492 = vmul.f32 %v479, %v490
      %v493 = vmul.f32 %v480, %v490
      %v494 = vmul.f32 %v481, %v490
      %v495 = vmul.f32 %v482, %v490
      %v496 = vmul.f32 %v483, %v490
      %v497 = vmul.f32 %v484, %v490
      %v498 = vmul.f32 %v485, %v490
      %v499 = vadd.f32 %v470, %v491
      %v500 = vadd.f32 %v471, %v492
      %v501 = vadd.f32 %v472, %v493
      %v502 = vadd.f32 %v473, %v494
      %v503 = vadd.f32 %v474, %v495
      %v504 = vadd.f32 %v475, %v496
      %v505 = vadd.f32 %v476, %v497
      %v506 = vadd.f32 %v477, %v498
      %v507 = vld [vmem:[%s186 + $0x1] sm:$0xff]
      %v508 = vld [vmem:[%s186 + $0x11] sm:$0xff]
      %v509 = vld [vmem:[%s186 + $0x21] sm:$0xff]
      %v510 = vld [vmem:[%s186 + $0x31] sm:$0xff]
      %v511 = vld [vmem:[%s186 + $0x41] sm:$0xff]
      %v512 = vld [vmem:[%s186 + $0x51] sm:$0xff]
      %v513 = vld [vmem:[%s186 + $0x61] sm:$0xff]
      %v514 = vld [vmem:[%s186 + $0x71] sm:$0xff]
      %v515 = vld [vmem:[%s1 + $0xb] sm:$0x1]
      %v516 = vlaneseq
      %v517 = vshrl.u32 %v516, 7
      %v518 = vsub.s32 0, %v517
      %v519 = vrot.slane %v515, %v518
      %v520 = vmul.f32 %v507, %v519
      %v521 = vmul.f32 %v508, %v519
      %v522 = vmul.f32 %v509, %v519
      %v523 = vmul.f32 %v510, %v519
      %v524 = vmul.f32 %v511, %v519
      %v525 = vmul.f32 %v512, %v519
      %v526 = vmul.f32 %v513, %v519
      %v527 = vmul.f32 %v514, %v519
      %v528 = vadd.f32 %v499, %v520
      %v529 = vadd.f32 %v500, %v521
      %v530 = vadd.f32 %v501, %v522
      %v531 = vadd.f32 %v502, %v523
      %v532 = vadd.f32 %v503, %v524
      %v533 = vadd.f32 %v504, %v525
      %v534 = vadd.f32 %v505, %v526
      %v535 = vadd.f32 %v506, %v527
      %v536 = vld [vmem:[%s186 + $0x2] sm:$0xff]
      %v537 = vld [vmem:[%s186 + $0x12] sm:$0xff]
      %v538 = vld [vmem:[%s186 + $0x22] sm:$0xff]
      %v539 = vld [vmem:[%s186 + $0x32] sm:$0xff]
      %v540 = vld [vmem:[%s186 + $0x42] sm:$0xff]
      %v541 = vld [vmem:[%s186 + $0x52] sm:$0xff]
      %v542 = vld [vmem:[%s186 + $0x62] sm:$0xff]
      %v543 = vld [vmem:[%s186 + $0x72] sm:$0xff]
      %v544 = vld [vmem:[%s1 + $0xc] sm:$0x1]
      %v545 = vlaneseq
      %v546 = vshrl.u32 %v545, 7
      %v547 = vsub.s32 0, %v546
      %v548 = vrot.slane %v544, %v547
      %v549 = vmul.f32 %v536, %v548
      %v550 = vmul.f32 %v537, %v548
      %v551 = vmul.f32 %v538, %v548
      %v552 = vmul.f32 %v539, %v548
      %v553 = vmul.f32 %v540, %v548
      %v554 = vmul.f32 %v541, %v548
      %v555 = vmul.f32 %v542, %v548
      %v556 = vmul.f32 %v543, %v548
      %v557 = vadd.f32 %v528, %v549
      %v558 = vadd.f32 %v529, %v550
      %v559 = vadd.f32 %v530, %v551
      %v560 = vadd.f32 %v531, %v552
      %v561 = vadd.f32 %v532, %v553
      %v562 = vadd.f32 %v533, %v554
      %v563 = vadd.f32 %v534, %v555
      %v564 = vadd.f32 %v535, %v556
      %v565 = vld [vmem:[%s186 + $0x3] sm:$0xff]
      %v566 = vld [vmem:[%s186 + $0x13] sm:$0xff]
      %v567 = vld [vmem:[%s186 + $0x23] sm:$0xff]
      %v568 = vld [vmem:[%s186 + $0x33] sm:$0xff]
      %v569 = vld [vmem:[%s186 + $0x43] sm:$0xff]
      %v570 = vld [vmem:[%s186 + $0x53] sm:$0xff]
      %v571 = vld [vmem:[%s186 + $0x63] sm:$0xff]
      %v572 = vld [vmem:[%s186 + $0x73] sm:$0xff]
      %v573 = vld [vmem:[%s1 + $0xd] sm:$0x1]
      %v574 = vlaneseq
      %v575 = vshrl.u32 %v574, 7
      %v576 = vsub.s32 0, %v575
      %v577 = vrot.slane %v573, %v576
      %v578 = vmul.f32 %v565, %v577
      %v579 = vmul.f32 %v566, %v577
      %v580 = vmul.f32 %v567, %v577
      %v581 = vmul.f32 %v568, %v577
      %v582 = vmul.f32 %v569, %v577
      %v583 = vmul.f32 %v570, %v577
      %v584 = vmul.f32 %v571, %v577
      %v585 = vmul.f32 %v572, %v577
      %v586 = vadd.f32 %v557, %v578
      %v587 = vadd.f32 %v558, %v579
      %v588 = vadd.f32 %v559, %v580
      %v589 = vadd.f32 %v560, %v581
      %v590 = vadd.f32 %v561, %v582
      %v591 = vadd.f32 %v562, %v583
      %v592 = vadd.f32 %v563, %v584
      %v593 = vadd.f32 %v564, %v585
      %v594 = vld [vmem:[%s186 + $0x4] sm:$0xff]
      %v595 = vld [vmem:[%s186 + $0x14] sm:$0xff]
      %v596 = vld [vmem:[%s186 + $0x24] sm:$0xff]
      %v597 = vld [vmem:[%s186 + $0x34] sm:$0xff]
      %v598 = vld [vmem:[%s186 + $0x44] sm:$0xff]
      %v599 = vld [vmem:[%s186 + $0x54] sm:$0xff]
      %v600 = vld [vmem:[%s186 + $0x64] sm:$0xff]
      %v601 = vld [vmem:[%s186 + $0x74] sm:$0xff]
      %v602 = vld [vmem:[%s1 + $0xe] sm:$0x1]
      %v603 = vlaneseq
      %v604 = vshrl.u32 %v603, 7
      %v605 = vsub.s32 0, %v604
      %v606 = vrot.slane %v602, %v605
      %v607 = vmul.f32 %v594, %v606
      %v608 = vmul.f32 %v595, %v606
      %v609 = vmul.f32 %v596, %v606
      %v610 = vmul.f32 %v597, %v606
      %v611 = vmul.f32 %v598, %v606
      %v612 = vmul.f32 %v599, %v606
      %v613 = vmul.f32 %v600, %v606
      %v614 = vmul.f32 %v601, %v606
      %v615 = vadd.f32 %v586, %v607
      %v616 = vadd.f32 %v587, %v608
      %v617 = vadd.f32 %v588, %v609
      %v618 = vadd.f32 %v589, %v610
      %v619 = vadd.f32 %v590, %v611
      %v620 = vadd.f32 %v591, %v612
      %v621 = vadd.f32 %v592, %v613
      %v622 = vadd.f32 %v593, %v614
      %s623 = scalar_lea.vmem [#allocation2], 48
      %v624 = vld [vmem:[%s623] sm:$0xff]
      %v625 = vld [vmem:[%s623 + $0x10] sm:$0xff]
      %v626 = vld [vmem:[%s623 + $0x20] sm:$0xff]
      %v627 = vld [vmem:[%s623 + $0x30] sm:$0xff]
      %v628 = vld [vmem:[%s623 + $0x40] sm:$0xff]
      %v629 = vld [vmem:[%s623 + $0x50] sm:$0xff]
      %v630 = vld [vmem:[%s623 + $0x60] sm:$0xff]
      %v631 = vld [vmem:[%s623 + $0x70] sm:$0xff]
      %v632 = vld [vmem:[%s1 + $0xf] sm:$0x1]
      %v633 = vlaneseq
      %v634 = vshrl.u32 %v633, 7
      %v635 = vsub.s32 0, %v634
      %v636 = vrot.slane %v632, %v635
      %v637 = vmul.f32 %v624, %v636
      %v638 = vmul.f32 %v625, %v636
      %v639 = vmul.f32 %v626, %v636
      %v640 = vmul.f32 %v627, %v636
      %v641 = vmul.f32 %v628, %v636
      %v642 = vmul.f32 %v629, %v636
      %v643 = vmul.f32 %v630, %v636
      %v644 = vmul.f32 %v631, %v636
      %v645 = vadd.f32 %v615, %v637
      %v646 = vadd.f32 %v616, %v638
      %v647 = vadd.f32 %v617, %v639
      %v648 = vadd.f32 %v618, %v640
      %v649 = vadd.f32 %v619, %v641
      %v650 = vadd.f32 %v620, %v642
      %v651 = vadd.f32 %v621, %v643
      %v652 = vadd.f32 %v622, %v644
      %v653 = vld [vmem:[%s623 + $0x1] sm:$0xff]
      %v654 = vld [vmem:[%s623 + $0x11] sm:$0xff]
      %v655 = vld [vmem:[%s623 + $0x21] sm:$0xff]
      %v656 = vld [vmem:[%s623 + $0x31] sm:$0xff]
      %v657 = vld [vmem:[%s623 + $0x41] sm:$0xff]
      %v658 = vld [vmem:[%s623 + $0x51] sm:$0xff]
      %v659 = vld [vmem:[%s623 + $0x61] sm:$0xff]
      %v660 = vld [vmem:[%s623 + $0x71] sm:$0xff]
      %v661 = vld [vmem:[%s1 + $0x10] sm:$0x1]
      %v662 = vlaneseq
      %v663 = vshrl.u32 %v662, 7
      %v664 = vsub.s32 0, %v663
      %v665 = vrot.slane %v661, %v664
      %v666 = vmul.f32 %v653, %v665
      %v667 = vmul.f32 %v654, %v665
      %v668 = vmul.f32 %v655, %v665
      %v669 = vmul.f32 %v656, %v665
      %v670 = vmul.f32 %v657, %v665
      %v671 = vmul.f32 %v658, %v665
      %v672 = vmul.f32 %v659, %v665
      %v673 = vmul.f32 %v660, %v665
      %v674 = vadd.f32 %v645, %v666
      %v675 = vadd.f32 %v646, %v667
      %v676 = vadd.f32 %v647, %v668
      %v677 = vadd.f32 %v648, %v669
      %v678 = vadd.f32 %v649, %v670
      %v679 = vadd.f32 %v650, %v671
      %v680 = vadd.f32 %v651, %v672
      %v681 = vadd.f32 %v652, %v673
      %v682 = vld [vmem:[%s623 + $0x2] sm:$0xff]
      %v683 = vld [vmem:[%s623 + $0x12] sm:$0xff]
      %v684 = vld [vmem:[%s623 + $0x22] sm:$0xff]
      %v685 = vld [vmem:[%s623 + $0x32] sm:$0xff]
      %v686 = vld [vmem:[%s623 + $0x42] sm:$0xff]
      %v687 = vld [vmem:[%s623 + $0x52] sm:$0xff]
      %v688 = vld [vmem:[%s623 + $0x62] sm:$0xff]
      %v689 = vld [vmem:[%s623 + $0x72] sm:$0xff]
      %v690 = vld [vmem:[%s1 + $0x11] sm:$0x1]
      %v691 = vlaneseq
      %v692 = vshrl.u32 %v691, 7
      %v693 = vsub.s32 0, %v692
      %v694 = vrot.slane %v690, %v693
      %v695 = vmul.f32 %v682, %v694
      %v696 = vmul.f32 %v683, %v694
      %v697 = vmul.f32 %v684, %v694
      %v698 = vmul.f32 %v685, %v694
      %v699 = vmul.f32 %v686, %v694
      %v700 = vmul.f32 %v687, %v694
      %v701 = vmul.f32 %v688, %v694
      %v702 = vmul.f32 %v689, %v694
      %v703 = vadd.f32 %v674, %v695
      %v704 = vadd.f32 %v675, %v696
      %v705 = vadd.f32 %v676, %v697
      %v706 = vadd.f32 %v677, %v698
      %v707 = vadd.f32 %v678, %v699
      %v708 = vadd.f32 %v679, %v700
      %v709 = vadd.f32 %v680, %v701
      %v710 = vadd.f32 %v681, %v702
      %v711 = vld [vmem:[%s623 + $0x3] sm:$0xff]
      %v712 = vld [vmem:[%s623 + $0x13] sm:$0xff]
      %v713 = vld [vmem:[%s623 + $0x23] sm:$0xff]
      %v714 = vld [vmem:[%s623 + $0x33] sm:$0xff]
      %v715 = vld [vmem:[%s623 + $0x43] sm:$0xff]
      %v716 = vld [vmem:[%s623 + $0x53] sm:$0xff]
      %v717 = vld [vmem:[%s623 + $0x63] sm:$0xff]
      %v718 = vld [vmem:[%s623 + $0x73] sm:$0xff]
      %v719 = vld [vmem:[%s1 + $0x12] sm:$0x1]
      %v720 = vlaneseq
      %v721 = vshrl.u32 %v720, 7
      %v722 = vsub.s32 0, %v721
      %v723 = vrot.slane %v719, %v722
      %v724 = vmul.f32 %v711, %v723
      %v725 = vmul.f32 %v712, %v723
      %v726 = vmul.f32 %v713, %v723
      %v727 = vmul.f32 %v714, %v723
      %v728 = vmul.f32 %v715, %v723
      %v729 = vmul.f32 %v716, %v723
      %v730 = vmul.f32 %v717, %v723
      %v731 = vmul.f32 %v718, %v723
      %v732 = vadd.f32 %v703, %v724
      %v733 = vadd.f32 %v704, %v725
      %v734 = vadd.f32 %v705, %v726
      %v735 = vadd.f32 %v706, %v727
      %v736 = vadd.f32 %v707, %v728
      %v737 = vadd.f32 %v708, %v729
      %v738 = vadd.f32 %v709, %v730
      %v739 = vadd.f32 %v710, %v731
      %v740 = vld [vmem:[%s623 + $0x4] sm:$0xff]
      %v741 = vld [vmem:[%s623 + $0x14] sm:$0xff]
      %v742 = vld [vmem:[%s623 + $0x24] sm:$0xff]
      %v743 = vld [vmem:[%s623 + $0x34] sm:$0xff]
      %v744 = vld [vmem:[%s623 + $0x44] sm:$0xff]
      %v745 = vld [vmem:[%s623 + $0x54] sm:$0xff]
      %v746 = vld [vmem:[%s623 + $0x64] sm:$0xff]
      %v747 = vld [vmem:[%s623 + $0x74] sm:$0xff]
      %v748 = vld [vmem:[%s1 + $0x13] sm:$0x1]
      %v749 = vlaneseq
      %v750 = vshrl.u32 %v749, 7
      %v751 = vsub.s32 0, %v750
      %v752 = vrot.slane %v748, %v751
      %v753 = vmul.f32 %v740, %v752
      %v754 = vmul.f32 %v741, %v752
      %v755 = vmul.f32 %v742, %v752
      %v756 = vmul.f32 %v743, %v752
      %v757 = vmul.f32 %v744, %v752
      %v758 = vmul.f32 %v745, %v752
      %v759 = vmul.f32 %v746, %v752
      %v760 = vmul.f32 %v747, %v752
      %v761 = vadd.f32 %v732, %v753
      %v762 = vadd.f32 %v733, %v754
      %v763 = vadd.f32 %v734, %v755
      %v764 = vadd.f32 %v735, %v756
      %v765 = vadd.f32 %v736, %v757
      %v766 = vadd.f32 %v737, %v758
      %v767 = vadd.f32 %v738, %v759
      %v768 = vadd.f32 %v739, %v760
      %s769 = scalar_lea.vmem [#allocation2], 64
      %v770 = vld [vmem:[%s769] sm:$0xff]
      %v771 = vld [vmem:[%s769 + $0x10] sm:$0xff]
      %v772 = vld [vmem:[%s769 + $0x20] sm:$0xff]
      %v773 = vld [vmem:[%s769 + $0x30] sm:$0xff]
      %v774 = vld [vmem:[%s769 + $0x40] sm:$0xff]
      %v775 = vld [vmem:[%s769 + $0x50] sm:$0xff]
      %v776 = vld [vmem:[%s769 + $0x60] sm:$0xff]
      %v777 = vld [vmem:[%s769 + $0x70] sm:$0xff]
      %v778 = vld [vmem:[%s1 + $0x14] sm:$0x1]
      %v779 = vlaneseq
      %v780 = vshrl.u32 %v779, 7
      %v781 = vsub.s32 0, %v780
      %v782 = vrot.slane %v778, %v781
      %v783 = vmul.f32 %v770, %v782
      %v784 = vmul.f32 %v771, %v782
      %v785 = vmul.f32 %v772, %v782
      %v786 = vmul.f32 %v773, %v782
      %v787 = vmul.f32 %v774, %v782
      %v788 = vmul.f32 %v775, %v782
      %v789 = vmul.f32 %v776, %v782
      %v790 = vmul.f32 %v777, %v782
      %v791 = vadd.f32 %v761, %v783
      %v792 = vadd.f32 %v762, %v784
      %v793 = vadd.f32 %v763, %v785
      %v794 = vadd.f32 %v764, %v786
      %v795 = vadd.f32 %v765, %v787
      %v796 = vadd.f32 %v766, %v788
      %v797 = vadd.f32 %v767, %v789
      %v798 = vadd.f32 %v768, %v790
      %v799 = vld [vmem:[%s769 + $0x1] sm:$0xff]
      %v800 = vld [vmem:[%s769 + $0x11] sm:$0xff]
      %v801 = vld [vmem:[%s769 + $0x21] sm:$0xff]
      %v802 = vld [vmem:[%s769 + $0x31] sm:$0xff]
      %v803 = vld [vmem:[%s769 + $0x41] sm:$0xff]
      %v804 = vld [vmem:[%s769 + $0x51] sm:$0xff]
      %v805 = vld [vmem:[%s769 + $0x61] sm:$0xff]
      %v806 = vld [vmem:[%s769 + $0x71] sm:$0xff]
      %v807 = vld [vmem:[%s1 + $0x15] sm:$0x1]
      %v808 = vlaneseq
      %v809 = vshrl.u32 %v808, 7
      %v810 = vsub.s32 0, %v809
      %v811 = vrot.slane %v807, %v810
      %v812 = vmul.f32 %v799, %v811
      %v813 = vmul.f32 %v800, %v811
      %v814 = vmul.f32 %v801, %v811
      %v815 = vmul.f32 %v802, %v811
      %v816 = vmul.f32 %v803, %v811
      %v817 = vmul.f32 %v804, %v811
      %v818 = vmul.f32 %v805, %v811
      %v819 = vmul.f32 %v806, %v811
      %v820 = vadd.f32 %v791, %v812
      %v821 = vadd.f32 %v792, %v813
      %v822 = vadd.f32 %v793, %v814
      %v823 = vadd.f32 %v794, %v815
      %v824 = vadd.f32 %v795, %v816
      %v825 = vadd.f32 %v796, %v817
      %v826 = vadd.f32 %v797, %v818
      %v827 = vadd.f32 %v798, %v819
      %v828 = vld [vmem:[%s769 + $0x2] sm:$0xff]
      %v829 = vld [vmem:[%s769 + $0x12] sm:$0xff]
      %v830 = vld [vmem:[%s769 + $0x22] sm:$0xff]
      %v831 = vld [vmem:[%s769 + $0x32] sm:$0xff]
      %v832 = vld [vmem:[%s769 + $0x42] sm:$0xff]
      %v833 = vld [vmem:[%s769 + $0x52] sm:$0xff]
      %v834 = vld [vmem:[%s769 + $0x62] sm:$0xff]
      %v835 = vld [vmem:[%s769 + $0x72] sm:$0xff]
      %v836 = vld [vmem:[%s1 + $0x16] sm:$0x1]
      %v837 = vlaneseq
      %v838 = vshrl.u32 %v837, 7
      %v839 = vsub.s32 0, %v838
      %v840 = vrot.slane %v836, %v839
      %v841 = vmul.f32 %v828, %v840
      %v842 = vmul.f32 %v829, %v840
      %v843 = vmul.f32 %v830, %v840
      %v844 = vmul.f32 %v831, %v840
      %v845 = vmul.f32 %v832, %v840
      %v846 = vmul.f32 %v833, %v840
      %v847 = vmul.f32 %v834, %v840
      %v848 = vmul.f32 %v835, %v840
      %v849 = vadd.f32 %v820, %v841
      %v850 = vadd.f32 %v821, %v842
      %v851 = vadd.f32 %v822, %v843
      %v852 = vadd.f32 %v823, %v844
      %v853 = vadd.f32 %v824, %v845
      %v854 = vadd.f32 %v825, %v846
      %v855 = vadd.f32 %v826, %v847
      %v856 = vadd.f32 %v827, %v848
      %v857 = vld [vmem:[%s769 + $0x3] sm:$0xff]
      %v858 = vld [vmem:[%s769 + $0x13] sm:$0xff]
      %v859 = vld [vmem:[%s769 + $0x23] sm:$0xff]
      %v860 = vld [vmem:[%s769 + $0x33] sm:$0xff]
      %v861 = vld [vmem:[%s769 + $0x43] sm:$0xff]
      %v862 = vld [vmem:[%s769 + $0x53] sm:$0xff]
      %v863 = vld [vmem:[%s769 + $0x63] sm:$0xff]
      %v864 = vld [vmem:[%s769 + $0x73] sm:$0xff]
      %v865 = vld [vmem:[%s1 + $0x17] sm:$0x1]
      %v866 = vlaneseq
      %v867 = vshrl.u32 %v866, 7
      %v868 = vsub.s32 0, %v867
      %v869 = vrot.slane %v865, %v868
      %v870 = vmul.f32 %v857, %v869
      %v871 = vmul.f32 %v858, %v869
      %v872 = vmul.f32 %v859, %v869
      %v873 = vmul.f32 %v860, %v869
      %v874 = vmul.f32 %v861, %v869
      %v875 = vmul.f32 %v862, %v869
      %v876 = vmul.f32 %v863, %v869
      %v877 = vmul.f32 %v864, %v869
      %v878 = vadd.f32 %v849, %v870
      %v879 = vadd.f32 %v850, %v871
      %v880 = vadd.f32 %v851, %v872
      %v881 = vadd.f32 %v852, %v873
      %v882 = vadd.f32 %v853, %v874
      %v883 = vadd.f32 %v854, %v875
      %v884 = vadd.f32 %v855, %v876
      %v885 = vadd.f32 %v856, %v877
      %v886 = vld [vmem:[%s769 + $0x4] sm:$0xff]
      %v887 = vld [vmem:[%s769 + $0x14] sm:$0xff]
      %v888 = vld [vmem:[%s769 + $0x24] sm:$0xff]
      %v889 = vld [vmem:[%s769 + $0x34] sm:$0xff]
      %v890 = vld [vmem:[%s769 + $0x44] sm:$0xff]
      %v891 = vld [vmem:[%s769 + $0x54] sm:$0xff]
      %v892 = vld [vmem:[%s769 + $0x64] sm:$0xff]
      %v893 = vld [vmem:[%s769 + $0x74] sm:$0xff]
      %v894 = vld [vmem:[%s1 + $0x18] sm:$0x1]
      %v895 = vlaneseq
      %v896 = vshrl.u32 %v895, 7
      %v897 = vsub.s32 0, %v896
      %v898 = vrot.slane %v894, %v897
      %v899 = vmul.f32 %v886, %v898
      %v900 = vmul.f32 %v887, %v898
      %v901 = vmul.f32 %v888, %v898
      %v902 = vmul.f32 %v889, %v898
      %v903 = vmul.f32 %v890, %v898
      %v904 = vmul.f32 %v891, %v898
      %v905 = vmul.f32 %v892, %v898
      %v906 = vmul.f32 %v893, %v898
      %v907 = vadd.f32 %v878, %v899
      %v908 = vadd.f32 %v879, %v900
      %v909 = vadd.f32 %v880, %v901
      %v910 = vadd.f32 %v881, %v902
      %v911 = vadd.f32 %v882, %v903
      %v912 = vadd.f32 %v883, %v904
      %v913 = vadd.f32 %v884, %v905
      %v914 = vadd.f32 %v885, %v906
      %915 = vst.msk [vmem:[%s143] sm:$0xff] %vm144, %v907
      %916 = vst.msk [vmem:[%s143 + $0x8] sm:$0xff] %vm144, %v908
      %917 = vst.msk [vmem:[%s143 + $0x10] sm:$0xff] %vm144, %v909
      %918 = vst.msk [vmem:[%s143 + $0x18] sm:$0xff] %vm144, %v910
      %919 = vst.msk [vmem:[%s143 + $0x20] sm:$0xff] %vm144, %v911
      %920 = vst.msk [vmem:[%s143 + $0x28] sm:$0xff] %vm144, %v912
      %921 = vst.msk [vmem:[%s143 + $0x30] sm:$0xff] %vm144, %v913
      %922 = vst.msk [vmem:[%s143 + $0x38] sm:$0xff] %vm144, %v914
      %p923 = scmp.lt.s32.totalorder %s13, 1
      %s924 = scalar_select %p923, %s13, 1
      %s925 = smul.addr %s924, 8
      %s926 = smul.addr %s925, 8
      %s927 = scalar_lea.vmem %s2, %s926
      // Predicated region
      $region29: #{first_cell_forward.7} parent=27 // pred_check
        %p928 = pneg %p78
      $region30: #{first_cell_forward.7} parent=27 // pred_check_branch
        %930 = sbr.rel (%p928) target = $region32
      $region31: #{first_cell_forward.7} parent=27 // pred_region
        _
      $region32: #{first_cell_forward.7} parent=27 // pred_fallthru
        _
    $region28: #{first_cell_forward.7} parent=5 // pred_fallthru
      _
    %p931 = scmp.le.s32.totalorder 2, %s8
    // Predicated region
    $region33: #{first_cell_forward.7} parent=5 // pred_check
      %p932 = pneg %p931
    $region34: #{first_cell_forward.7} parent=5 // pred_check_branch
      %934 = sbr.rel (%p932) target = $region36
    $region35: #{first_cell_forward.7} parent=5 // pred_region
      %s935 = ssub.s32 %s8, 2
      // Predicated region
      $region37: #{first_cell_forward.7} parent=35 // pred_check
        %p936 = pneg %p84
      $region38: #{first_cell_forward.7} parent=35 // pred_check_branch
        %938 = sbr.rel (%p936) target = $region40
      $region39: #{first_cell_forward.7} parent=35 // pred_region
        %p939 = scmp.lt.s32.totalorder %s14, 1
        %s940 = scalar_select %p939, %s14, 1
        %s941 = smul.addr %s940, 8
        %s942 = smul.addr %s941, 8
        %s943 = scalar_lea.vmem %s2, %s942
      $region40: #{first_cell_forward.7} parent=35 // pred_fallthru
        _
    $region36: #{first_cell_forward.7} parent=5 // pred_fallthru
      _
  $region6: #{first_cell_forward.7} parent=0 // loop_footer
    %s12 = sadd.s32 1, %s8
  $region7: #{first_cell_forward.7} parent=0 // loop_footer_branch
    %7 = sbr.rel target = $region3
  $region8: #{first_cell_forward.7} parent=0 // loop_exit
    _

// kernel: first_cell_forward.11
$region0: #{first_cell_forward.11}
  #allocation0 [shape = 'u32[]', space=smem, size = 0x4, offset = 0x4, fixed_abs, tag = 'smem constant byte address 0x4 - core index']
  #allocation1 [shape = 'u32[144,128]{1,0:T(1,128)}', space=vmem, size = 0x12000, scoped, tag = 'internal scratch']
  #allocation2 [shape = 'f32[10,10,32]{2,1,0:T(8,128)}', space=vmem, size = 0x14000, scoped, tag = 'scratch operand']
  %s0 = inlined_call_operand.vmem [shape: f32[2,8,8,32], index: 0, kind: input, shape index: {}]
  %s1 = inlined_call_operand.vmem [shape: f32[2,8,8,80], index: 1, kind: input, shape index: {}]
  %s2 = inlined_call_operand.vmem [shape: f32[8,8,1], index: 2, kind: input, shape index: {}]
  %s3 = inlined_call_operand.hbm [shape: f32[2,8,8,96], index: 3, kind: output, shape index: {}]
  %s4 = sld [smem:[#allocation0]]
  $region45: #{first_cell_forward.11} parent=0
    _
  %s6 = ssub.s32 1, %s4
  %s7 = scalar_select 0, %s6, %s4
  $region1: #{first_cell_forward.11} parent=0
    #allocation3 [shape = 'u8[65536]{0}', space=vmem, size = 0x10000, scoped, tag = 'output window, operand 0']
    #allocation4 [shape = 's32[2]{0}', space=sflag, size = 0x8, scoped, tag = 'scoped memory for first_cell_forward.11']
    %8 = vsyncpa [#allocation4], 0
    %s9 = scalar_lea.sflag [#allocation4], 1
    %10 = vsyncpa %s9, 0
    loop: start=0, step=1, limit=4
    $region2: #{first_cell_forward.11} parent=1 // loop_pre_header
      _
    $region3: #{first_cell_forward.11} parent=1 // loop_header
      %s12 = sphi 0, %s16
      %p13 = scmp.ge.s32.totalorder %s12, 4
      %s22 = sphi 0, %s24
      %s25 = sphi 0, %s22
      %s26 = sphi 0, %s25
      %s42 = sphi 0, %s26
      %s48 = sphi 0, %s50
      %s51 = sphi 0, %s48
      %s52 = sphi 0, %s51
      %s68 = sphi 0, %s52
      %s72 = sphi 0, %s72
      %s74 = sphi 0, %s72
      %s75 = sphi 0, %s74
      %s89 = sphi 0, %s75
      %s95 = sphi 0, %s97
      %s98 = sphi 0, %s95
      %s99 = sphi 0, %s98
      %s115 = sphi 0, %s99
    $region4: #{first_cell_forward.11} parent=1 // loop_header_branch
      %15 = sbr.rel (%p13) target = $region8
    $region5: #{first_cell_forward.11} parent=1 // loop_body
      %s17 = ssub.s32 %s12, 1
      %s18 = ssub.s32 %s12, 2
      %s19 = sadd.s32 %s12, 1
      %s20 = ssub.s32 %s12, %s19
      %p21 = scmp.eq.s32.totalorder %s20, 0
      %s23 = sadd.s32 %s22, 1
      %s24 = scalar_select %p21, %s22, %s23
      %p27 = pneg %p21
      %p28 = scmp.eq.s32.totalorder %s12, 1
      %p29 = por %p27, %p28
      %p30 = scmp.ne.s32.totalorder %s22, %s25
      %p31 = scmp.eq.s32.totalorder %s12, 0
      %p32 = por %p30, %p31
      %p33 = scmp.ne.s32.totalorder %s22, %s25
      %p34 = scmp.eq.s32.totalorder %s17, 1
      %p35 = por %p33, %p34
      %p36 = scmp.ne.s32.totalorder %s25, %s26
      %p37 = scmp.eq.s32.totalorder %s17, 0
      %p38 = por %p36, %p37
      %p39 = scmp.ne.s32.totalorder %s25, %s26
      %p40 = scmp.eq.s32.totalorder %s18, 1
      %p41 = por %p39, %p40
      %p43 = scmp.ne.s32.totalorder %s26, %s42
      %p44 = scmp.eq.s32.totalorder %s18, 0
      %p45 = por %p43, %p44
      %s46 = ssub.s32 %s12, %s19
      %p47 = scmp.eq.s32.totalorder %s46, 0
      %s49 = sadd.s32 %s48, 1
      %s50 = scalar_select %p47, %s48, %s49
      %p53 = pneg %p47
      %p54 = scmp.eq.s32.totalorder %s12, 1
      %p55 = por %p53, %p54
      %p56 = scmp.ne.s32.totalorder %s48, %s51
      %p57 = scmp.eq.s32.totalorder %s12, 0
      %p58 = por %p56, %p57
      %p59 = scmp.ne.s32.totalorder %s48, %s51
      %p60 = scmp.eq.s32.totalorder %s17, 1
      %p61 = por %p59, %p60
      %p62 = scmp.ne.s32.totalorder %s51, %s52
      %p63 = scmp.eq.s32.totalorder %s17, 0
      %p64 = por %p62, %p63
      %p65 = scmp.ne.s32.totalorder %s51, %s52
      %p66 = scmp.eq.s32.totalorder %s18, 1
      %p67 = por %p65, %p66
      %p69 = scmp.ne.s32.totalorder %s52, %s68
      %p70 = scmp.eq.s32.totalorder %s18, 0
      %p71 = por %p69, %p70
      %s73 = sadd.s32 %s72, 1
      %p76 = scmp.eq.s32.totalorder %s12, 1
      %p77 = scmp.ne.s32.totalorder %s72, %s74
      %p78 = scmp.eq.s32.totalorder %s12, 0
      %p79 = por %p77, %p78
      %p80 = scmp.ne.s32.totalorder %s72, %s74
      %p81 = scmp.eq.s32.totalorder %s17, 1
      %p82 = por %p80, %p81
      %p83 = scmp.ne.s32.totalorder %s74, %s75
      %p84 = scmp.eq.s32.totalorder %s17, 0
      %p85 = por %p83, %p84
      %p86 = scmp.ne.s32.totalorder %s74, %s75
      %p87 = scmp.eq.s32.totalorder %s18, 1
      %p88 = por %p86, %p87
      %p90 = scmp.ne.s32.totalorder %s75, %s89
      %p91 = scmp.eq.s32.totalorder %s18, 0
      %p92 = por %p90, %p91
      %s93 = ssub.s32 %s12, %s19
      %p94 = scmp.eq.s32.totalorder %s93, 0
      %s96 = sadd.s32 %s95, 1
      %s97 = scalar_select %p94, %s95, %s96
      %p100 = pneg %p94
      %p101 = scmp.eq.s32.totalorder %s12, 1
      %p102 = por %p100, %p101
      %p103 = scmp.ne.s32.totalorder %s95, %s98
      %p104 = scmp.eq.s32.totalorder %s12, 0
      %p105 = por %p103, %p104
      %p106 = scmp.ne.s32.totalorder %s95, %s98
      %p107 = scmp.eq.s32.totalorder %s17, 1
      %p108 = por %p106, %p107
      %p109 = scmp.ne.s32.totalorder %s98, %s99
      %p110 = scmp.eq.s32.totalorder %s17, 0
      %p111 = por %p109, %p110
      %p112 = scmp.ne.s32.totalorder %s98, %s99
      %p113 = scmp.eq.s32.totalorder %s18, 1
      %p114 = por %p112, %p113
      %p116 = scmp.ne.s32.totalorder %s99, %s115
      %p117 = scmp.eq.s32.totalorder %s18, 0
      %p118 = por %p116, %p117
      %p119 = scmp.le.s32.totalorder 1, %s12
      %p120 = scmp.lt.s32.totalorder %s12, 3
      %p121 = pnand %p119, %p120
      %p122 = pneg %p121
      // Predicated region
      $region9: #{first_cell_forward.11} parent=5 // pred_check
        _
      $region10: #{first_cell_forward.11} parent=5 // pred_check_branch
        %124 = sbr.rel (%p121) target = $region12
      $region11: #{first_cell_forward.11} parent=5 // pred_region
        %s125 = ssub.s32 %s12, 1
        // Predicated region
        $region13: #{first_cell_forward.11} parent=11 // pred_check
          %p126 = pneg %p85
        $region14: #{first_cell_forward.11} parent=11 // pred_check_branch
          %128 = sbr.rel (%p126) target = $region16
        $region15: #{first_cell_forward.11} parent=11 // pred_region
          _
        $region16: #{first_cell_forward.11} parent=11 // pred_fallthru
          _
      $region12: #{first_cell_forward.11} parent=5 // pred_fallthru
        _
      %p129 = scmp.lt.s32.totalorder %s12, 2
      // Predicated region
      $region17: #{first_cell_forward.11} parent=5 // pred_check
        %p130 = pneg %p129
      $region18: #{first_cell_forward.11} parent=5 // pred_check_branch
        %132 = sbr.rel (%p130) target = $region20
      $region19: #{first_cell_forward.11} parent=5 // pred_region
        // Predicated region
        $region21: #{first_cell_forward.11} parent=19 // pred_check
          %p133 = pneg %p32
        $region22: #{first_cell_forward.11} parent=19 // pred_check_branch
          %135 = sbr.rel (%p133) target = $region24
        $region23: #{first_cell_forward.11} parent=19 // pred_region
          %p136 = scmp.lt.s32.totalorder %s12, 1
          %s137 = scalar_select %p136, %s12, 1
          %s138 = smul.addr %s137, 8
          %s139 = smul.addr %s138, 8
          %s140 = scalar_lea.vmem %s0, %s139
        $region24: #{first_cell_forward.11} parent=19 // pred_fallthru
          _
        // Predicated region
        $region25: #{first_cell_forward.11} parent=19 // pred_check
          %p141 = pneg %p58
        $region26: #{first_cell_forward.11} parent=19 // pred_check_branch
          %143 = sbr.rel (%p141) target = $region28
        $region27: #{first_cell_forward.11} parent=19 // pred_region
          %p144 = scmp.lt.s32.totalorder %s12, 1
          %s145 = scalar_select %p144, %s12, 1
          %s146 = smul.addr %s145, 8
          %s147 = smul.addr %s146, 8
          %s148 = scalar_lea.vmem %s1, %s147
        $region28: #{first_cell_forward.11} parent=19 // pred_fallthru
          _
      $region20: #{first_cell_forward.11} parent=5 // pred_fallthru
        _
      %p149 = scmp.le.s32.totalorder 1, %s12
      %p150 = scmp.lt.s32.totalorder %s12, 3
      %p151 = pnand %p149, %p150
      %p152 = pneg %p151
      // Predicated region
      $region29: #{first_cell_forward.11} parent=5 // pred_check
        _
      $region30: #{first_cell_forward.11} parent=5 // pred_check_branch
        %154 = sbr.rel (%p151) target = $region32
      $region31: #{first_cell_forward.11} parent=5 // pred_region
        %s155 = ssub.s32 %s12, 1
        %p156 = scmp.lt.s32.totalorder %s17, 1
        %s157 = scalar_select %p156, %s17, 1
        %s158 = smul.addr %s157, 8
        %s159 = smul.addr %s158, 8
        %s160 = scalar_lea.vmem %s0, %s159
        %p161 = pneg %p38
        %p162 = pneg %p35
        %p163 = scmp.lt.s32.totalorder %s17, 1
        %s164 = scalar_select %p163, %s17, 1
        %s165 = smul.addr %s164, 8
        %s166 = smul.addr %s165, 8
        %s167 = scalar_lea.vmem %s1, %s166
        %p168 = pneg %p64
        %p169 = pneg %p61
        %p170 = pneg %p85
        %p171 = pneg %p82
        %p172 = pneg %p111
        %p173 = pneg %p108
        %s174 = sand.u32 %s98, 1
        %s175 = scalar_lea.sflag [#allocation4], %s174
        %s176 = sand.u32 %s98, 1
        %s177 = smul.addr %s176, 64
        %s178 = scalar_lea.vmem [#allocation3], %s177
        %p179 = scmp.lt.s32.totalorder %s17, 1
        %s180 = scalar_select %p179, %s17, 1
        %s181 = smul.addr %s180, 8
        %s182 = smul.addr %s181, 8
        %s183 = scalar_lea.vmem %s0, %s182
        %p184 = scmp.lt.s32.totalorder %s17, 1
        %s185 = scalar_select %p184, %s17, 1
        %s186 = smul.addr %s185, 8
        %s187 = smul.addr %s186, 8
        %s188 = scalar_lea.vmem %s1, %s187
        %v189 = vld [vmem:[%s183] sm:$0xff]
        %v190 = vld [vmem:[%s183 + $0x8] sm:$0xff]
        %v191 = vld [vmem:[%s183 + $0x10] sm:$0xff]
        %v192 = vld [vmem:[%s183 + $0x18] sm:$0xff]
        %v193 = vld [vmem:[%s183 + $0x20] sm:$0xff]
        %v194 = vld [vmem:[%s183 + $0x28] sm:$0xff]
        %v195 = vld [vmem:[%s183 + $0x30] sm:$0xff]
        %v196 = vld [vmem:[%s183 + $0x38] sm:$0xff]
        %vm197 = vcmask 261120
        %198 = vst.msk [vmem:[#allocation2] sm:$0xff] %vm197, 0.0
        %vm199 = vcmask 254976
        %200 = vst.msk [vmem:[#allocation2 + $0x8] sm:$0x3] %vm199, 0.0
        %201 = vst.msk [vmem:[#allocation2 + $0x10] sm:$0xff] %vm197, 0.0
        %202 = vst.msk [vmem:[#allocation2 + $0x18] sm:$0x3] %vm199, 0.0
        %203 = vst.msk [vmem:[#allocation2 + $0x20] sm:$0xff] %vm197, 0.0
        %204 = vst.msk [vmem:[#allocation2 + $0x28] sm:$0x3] %vm199, 0.0
        %205 = vst.msk [vmem:[#allocation2 + $0x30] sm:$0xff] %vm197, 0.0
        %206 = vst.msk [vmem:[#allocation2 + $0x38] sm:$0x3] %vm199, 0.0
        %207 = vst.msk [vmem:[#allocation2 + $0x40] sm:$0xff] %vm197, 0.0
        %208 = vst.msk [vmem:[#allocation2 + $0x48] sm:$0x3] %vm199, 0.0
        %209 = vst.msk [vmem:[#allocation2 + $0x50] sm:$0xff] %vm197, 0.0
        %210 = vst.msk [vmem:[#allocation2 + $0x58] sm:$0x3] %vm199, 0.0
        %211 = vst.msk [vmem:[#allocation2 + $0x60] sm:$0xff] %vm197, 0.0
        %212 = vst.msk [vmem:[#allocation2 + $0x68] sm:$0x3] %vm199, 0.0
        %213 = vst.msk [vmem:[#allocation2 + $0x70] sm:$0xff] %vm197, 0.0
        %214 = vst.msk [vmem:[#allocation2 + $0x78] sm:$0x3] %vm199, 0.0
        %215 = vst.msk [vmem:[#allocation2 + $0x80] sm:$0xff] %vm197, 0.0
        %216 = vst.msk [vmem:[#allocation2 + $0x88] sm:$0x3] %vm199, 0.0
        %217 = vst.msk [vmem:[#allocation2 + $0x90] sm:$0xff] %vm197, 0.0
        %218 = vst.msk [vmem:[#allocation2 + $0x98] sm:$0x3] %vm199, 0.0
        %s219 = scalar_lea.vmem [#allocation2], 16
        %220 = vst.msk [vmem:[%s219 + $0x1] sm:$0xff] %vm197, %v189
        %221 = vst.msk [vmem:[%s219 + $0x11] sm:$0xff] %vm197, %v190
        %222 = vst.msk [vmem:[%s219 + $0x21] sm:$0xff] %vm197, %v191
        %223 = vst.msk [vmem:[%s219 + $0x31] sm:$0xff] %vm197, %v192
        %224 = vst.msk [vmem:[%s219 + $0x41] sm:$0xff] %vm197, %v193
        %225 = vst.msk [vmem:[%s219 + $0x51] sm:$0xff] %vm197, %v194
        %226 = vst.msk [vmem:[%s219 + $0x61] sm:$0xff] %vm197, %v195
        %227 = vst.msk [vmem:[%s219 + $0x71] sm:$0xff] %vm197, %v196
        %v228 = vld [vmem:[#allocation2] sm:$0xff]
        %v229 = vld [vmem:[#allocation2 + $0x8] sm:$0x3]
        %v230 = vld [vmem:[#allocation2 + $0x10] sm:$0xff]
        %v231 = vld [vmem:[#allocation2 + $0x18] sm:$0x3]
        %v232 = vld [vmem:[#allocation2 + $0x20] sm:$0xff]
        %v233 = vld [vmem:[#allocation2 + $0x28] sm:$0x3]
        %v234 = vld [vmem:[#allocation2 + $0x30] sm:$0xff]
        %v235 = vld [vmem:[#allocation2 + $0x38] sm:$0x3]
        %v236 = vld [vmem:[#allocation2 + $0x40] sm:$0xff]
        %v237 = vld [vmem:[#allocation2 + $0x48] sm:$0x3]
        %v238 = vld [vmem:[#allocation2 + $0x50] sm:$0xff]
        %v239 = vld [vmem:[#allocation2 + $0x58] sm:$0x3]
        %v240 = vld [vmem:[#allocation2 + $0x60] sm:$0xff]
        %v241 = vld [vmem:[#allocation2 + $0x68] sm:$0x3]
        %v242 = vld [vmem:[#allocation2 + $0x70] sm:$0xff]
        %v243 = vld [vmem:[#allocation2 + $0x78] sm:$0x3]
        %v244 = vld [vmem:[%s219] sm:$0xff]
        %v245 = vld [vmem:[%s219 + $0x8] sm:$0x3]
        %v246 = vld [vmem:[%s219 + $0x10] sm:$0xff]
        %v247 = vld [vmem:[%s219 + $0x18] sm:$0x3]
        %v248 = vld [vmem:[%s219 + $0x20] sm:$0xff]
        %v249 = vld [vmem:[%s219 + $0x28] sm:$0x3]
        %v250 = vld [vmem:[%s219 + $0x30] sm:$0xff]
        %v251 = vld [vmem:[%s219 + $0x38] sm:$0x3]
        %v252 = vld [vmem:[%s219 + $0x40] sm:$0xff]
        %v253 = vld [vmem:[%s219 + $0x48] sm:$0x3]
        %v254 = vld [vmem:[%s219 + $0x50] sm:$0xff]
        %v255 = vld [vmem:[%s219 + $0x58] sm:$0x3]
        %v256 = vld [vmem:[%s219 + $0x60] sm:$0xff]
        %v257 = vld [vmem:[%s219 + $0x68] sm:$0x3]
        %v258 = vld [vmem:[%s219 + $0x70] sm:$0xff]
        %v259 = vld [vmem:[%s219 + $0x78] sm:$0x3]
        %v260 = vadd.f32 %v228, %v244
        %v261 = vadd.f32 %v229, %v245
        %v262 = vadd.f32 %v230, %v246
        %v263 = vadd.f32 %v231, %v247
        %v264 = vadd.f32 %v232, %v248
        %v265 = vadd.f32 %v233, %v249
        %v266 = vadd.f32 %v234, %v250
        %v267 = vadd.f32 %v235, %v251
        %v268 = vadd.f32 %v236, %v252
        %v269 = vadd.f32 %v237, %v253
        %v270 = vadd.f32 %v238, %v254
        %v271 = vadd.f32 %v239, %v255
        %v272 = vadd.f32 %v240, %v256
        %v273 = vadd.f32 %v241, %v257
        %v274 = vadd.f32 %v242, %v258
        %v275 = vadd.f32 %v243, %v259
        %s276 = scalar_lea.vmem [#allocation2], 32
        %v277 = vld [vmem:[%s276] sm:$0xff]
        %v278 = vld [vmem:[%s276 + $0x8] sm:$0x3]
        %v279 = vld [vmem:[%s276 + $0x10] sm:$0xff]
        %v280 = vld [vmem:[%s276 + $0x18] sm:$0x3]
        %v281 = vld [vmem:[%s276 + $0x20] sm:$0xff]
        %v282 = vld [vmem:[%s276 + $0x28] sm:$0x3]
        %v283 = vld [vmem:[%s276 + $0x30] sm:$0xff]
        %v284 = vld [vmem:[%s276 + $0x38] sm:$0x3]
        %v285 = vld [vmem:[%s276 + $0x40] sm:$0xff]
        %v286 = vld [vmem:[%s276 + $0x48] sm:$0x3]
        %v287 = vld [vmem:[%s276 + $0x50] sm:$0xff]
        %v288 = vld [vmem:[%s276 + $0x58] sm:$0x3]
        %v289 = vld [vmem:[%s276 + $0x60] sm:$0xff]
        %v290 = vld [vmem:[%s276 + $0x68] sm:$0x3]
        %v291 = vld [vmem:[%s276 + $0x70] sm:$0xff]
        %v292 = vld [vmem:[%s276 + $0x78] sm:$0x3]
        %v293 = vadd.f32 %v260, %v277
        %v294 = vadd.f32 %v261, %v278
        %v295 = vadd.f32 %v262, %v279
        %v296 = vadd.f32 %v263, %v280
        %v297 = vadd.f32 %v264, %v281
        %v298 = vadd.f32 %v265, %v282
        %v299 = vadd.f32 %v266, %v283
        %v300 = vadd.f32 %v267, %v284
        %v301 = vadd.f32 %v268, %v285
        %v302 = vadd.f32 %v269, %v286
        %v303 = vadd.f32 %v270, %v287
        %v304 = vadd.f32 %v271, %v288
        %v305 = vadd.f32 %v272, %v289
        %v306 = vadd.f32 %v273, %v290
        %v307 = vadd.f32 %v274, %v291
        %v308 = vadd.f32 %v275, %v292
        %vm325 = vcmask 1046528
        %v326 = vrot.slane %v293, 1
        %v327 = vrot.slane %v294, 1
        %v328 = vsel %vm325, %v326, %v327
        %v329 = vrot.slane %v295, 1
        %v330 = vrot.slane %v296, 1
        %v331 = vsel %vm325, %v329, %v330
        %v332 = vrot.slane %v297, 1
        %v333 = vrot.slane %v298, 1
        %v334 = vsel %vm325, %v332, %v333
        %v335 = vrot.slane %v299, 1
        %v336 = vrot.slane %v300, 1
        %v337 = vsel %vm325, %v335, %v336
        %v338 = vrot.slane %v301, 1
        %v339 = vrot.slane %v302, 1
        %v340 = vsel %vm325, %v338, %v339
        %v341 = vrot.slane %v303, 1
        %v342 = vrot.slane %v304, 1
        %v343 = vsel %vm325, %v341, %v342
        %v344 = vrot.slane %v305, 1
        %v345 = vrot.slane %v306, 1
        %v346 = vsel %vm325, %v344, %v345
        %v347 = vrot.slane %v307, 1
        %v348 = vrot.slane %v308, 1
        %v349 = vsel %vm325, %v347, %v348
        %v358 = vadd.f32 %v293, %v328
        %v359 = vadd.f32 %v295, %v331
        %v360 = vadd.f32 %v297, %v334
        %v361 = vadd.f32 %v299, %v337
        %v362 = vadd.f32 %v301, %v340
        %v363 = vadd.f32 %v303, %v343
        %v364 = vadd.f32 %v305, %v346
        %v365 = vadd.f32 %v307, %v349
        %vm366 = vcmask 1045504
        %v367 = vrot.slane %v293, 2
        %v368 = vrot.slane %v294, 2
        %v369 = vsel %vm366, %v367, %v368
        %v370 = vrot.slane %v295, 2
        %v371 = vrot.slane %v296, 2
        %v372 = vsel %vm366, %v370, %v371
        %v373 = vrot.slane %v297, 2
        %v374 = vrot.slane %v298, 2
        %v375 = vsel %vm366, %v373, %v374
        %v376 = vrot.slane %v299, 2
        %v377 = vrot.slane %v300, 2
        %v378 = vsel %vm366, %v376, %v377
        %v379 = vrot.slane %v301, 2
        %v380 = vrot.slane %v302, 2
        %v381 = vsel %vm366, %v379, %v380
        %v382 = vrot.slane %v303, 2
        %v383 = vrot.slane %v304, 2
        %v384 = vsel %vm366, %v382, %v383
        %v385 = vrot.slane %v305, 2
        %v386 = vrot.slane %v306, 2
        %v387 = vsel %vm366, %v385, %v386
        %v388 = vrot.slane %v307, 2
        %v389 = vrot.slane %v308, 2
        %v390 = vsel %vm366, %v388, %v389
        %v399 = vadd.f32 %v358, %v369
        %v400 = vadd.f32 %v359, %v372
        %v401 = vadd.f32 %v360, %v375
        %v402 = vadd.f32 %v361, %v378
        %v403 = vadd.f32 %v362, %v381
        %v404 = vadd.f32 %v363, %v384
        %v405 = vadd.f32 %v364, %v387
        %v406 = vadd.f32 %v365, %v390
        %v407 = vld [vmem:[%s2] sm:$0xff]
        %v408 = vld [vmem:[%s2 + $0x8] sm:$0xff]
        %v409 = vld [vmem:[%s2 + $0x10] sm:$0xff]
        %v410 = vld [vmem:[%s2 + $0x18] sm:$0xff]
        %v411 = vld [vmem:[%s2 + $0x20] sm:$0xff]
        %v412 = vld [vmem:[%s2 + $0x28] sm:$0xff]
        %v413 = vld [vmem:[%s2 + $0x30] sm:$0xff]
        %v414 = vld [vmem:[%s2 + $0x38] sm:$0xff]
        %416 = vset.pattern.permute.xlu0 0
        %417 = vperm.xlu0 %416, %v407
        %v418 = vpop.permute.xlu0 %417
        %421 = vset.pattern.permute.xlu0 0
        %422 = vperm.xlu0 %421, %v408
        %v423 = vpop.permute.xlu0 %422
        %426 = vset.pattern.permute.xlu0 0
        %427 = vperm.xlu0 %426, %v409
        %v428 = vpop.permute.xlu0 %427
        %431 = vset.pattern.permute.xlu0 0
        %432 = vperm.xlu0 %431, %v410
        %v433 = vpop.permute.xlu0 %432
        %436 = vset.pattern.permute.xlu0 0
        %437 = vperm.xlu0 %436, %v411
        %v438 = vpop.permute.xlu0 %437
        %441 = vset.pattern.permute.xlu0 0
        %442 = vperm.xlu0 %441, %v412
        %v443 = vpop.permute.xlu0 %442
        %446 = vset.pattern.permute.xlu0 0
        %447 = vperm.xlu0 %446, %v413
        %v448 = vpop.permute.xlu0 %447
        %451 = vset.pattern.permute.xlu0 0
        %452 = vperm.xlu0 %451, %v414
        %v453 = vpop.permute.xlu0 %452
        %v455 = vmul.f32 %v399, %v418
        %v456 = vmul.f32 %v400, %v423
        %v457 = vmul.f32 %v401, %v428
        %v458 = vmul.f32 %v402, %v433
        %v459 = vmul.f32 %v403, %v438
        %v460 = vmul.f32 %v404, %v443
        %v461 = vmul.f32 %v405, %v448
        %v462 = vmul.f32 %v406, %v453
        %v463 = vld [vmem:[%s188] sm:$0xff]
        %v464 = vld [vmem:[%s188 + $0x8] sm:$0xff]
        %v465 = vld [vmem:[%s188 + $0x10] sm:$0xff]
        %v466 = vld [vmem:[%s188 + $0x18] sm:$0xff]
        %v467 = vld [vmem:[%s188 + $0x20] sm:$0xff]
        %v468 = vld [vmem:[%s188 + $0x28] sm:$0xff]
        %v469 = vld [vmem:[%s188 + $0x30] sm:$0xff]
        %v470 = vld [vmem:[%s188 + $0x38] sm:$0xff]
        %479 = vrot.lane.b32.xlu0 %v463, 112
        %v480 = vpop.permute.xlu0 %479
        %481 = vrot.lane.b32.xlu0 %v464, 112
        %v482 = vpop.permute.xlu0 %481
        %483 = vrot.lane.b32.xlu0 %v465, 112
        %v484 = vpop.permute.xlu0 %483
        %485 = vrot.lane.b32.xlu0 %v466, 112
        %v486 = vpop.permute.xlu0 %485
        %487 = vrot.lane.b32.xlu0 %v467, 112
        %v488 = vpop.permute.xlu0 %487
        %489 = vrot.lane.b32.xlu0 %v468, 112
        %v490 = vpop.permute.xlu0 %489
        %491 = vrot.lane.b32.xlu0 %v469, 112
        %v492 = vpop.permute.xlu0 %491
        %493 = vrot.lane.b32.xlu0 %v470, 112
        %v494 = vpop.permute.xlu0 %493
        %v503 = vadd.f32 %v463, %v480
        %v504 = vadd.f32 %v464, %v482
        %v505 = vadd.f32 %v465, %v484
        %v506 = vadd.f32 %v466, %v486
        %v507 = vadd.f32 %v467, %v488
        %v508 = vadd.f32 %v468, %v490
        %v509 = vadd.f32 %v469, %v492
        %v510 = vadd.f32 %v470, %v494
        %519 = vrot.lane.b32.xlu0 %v189, 112
        %v520 = vpop.permute.xlu0 %519
        %521 = vrot.lane.b32.xlu0 %v190, 112
        %v522 = vpop.permute.xlu0 %521
        %523 = vrot.lane.b32.xlu0 %v191, 112
        %v524 = vpop.permute.xlu0 %523
        %525 = vrot.lane.b32.xlu0 %v192, 112
        %v526 = vpop.permute.xlu0 %525
        %527 = vrot.lane.b32.xlu0 %v193, 112
        %v528 = vpop.permute.xlu0 %527
        %529 = vrot.lane.b32.xlu0 %v194, 112
        %v530 = vpop.permute.xlu0 %529
        %531 = vrot.lane.b32.xlu0 %v195, 112
        %v532 = vpop.permute.xlu0 %531
        %533 = vrot.lane.b32.xlu0 %v196, 112
        %v534 = vpop.permute.xlu0 %533
        %v543 = vadd.f32 %v455, %v520
        %v544 = vadd.f32 %v456, %v522
        %v545 = vadd.f32 %v457, %v524
        %v546 = vadd.f32 %v458, %v526
        %v547 = vadd.f32 %v459, %v528
        %v548 = vadd.f32 %v460, %v530
        %v549 = vadd.f32 %v461, %v532
        %v550 = vadd.f32 %v462, %v534
        %v551 = vmul.f32 %v455, 2.0
        %v552 = vmul.f32 %v456, 2.0
        %v553 = vmul.f32 %v457, 2.0
        %v554 = vmul.f32 %v458, 2.0
        %v555 = vmul.f32 %v459, 2.0
        %v556 = vmul.f32 %v460, 2.0
        %v557 = vmul.f32 %v461, 2.0
        %v558 = vmul.f32 %v462, 2.0
        %559 = vrot.lane.b32.xlu0 %v189, 64
        %v560 = vpop.permute.xlu0 %559
        %561 = vrot.lane.b32.xlu0 %v190, 64
        %v562 = vpop.permute.xlu0 %561
        %563 = vrot.lane.b32.xlu0 %v191, 64
        %v564 = vpop.permute.xlu0 %563
        %565 = vrot.lane.b32.xlu0 %v192, 64
        %v566 = vpop.permute.xlu0 %565
        %567 = vrot.lane.b32.xlu0 %v193, 64
        %v568 = vpop.permute.xlu0 %567
        %569 = vrot.lane.b32.xlu0 %v194, 64
        %v570 = vpop.permute.xlu0 %569
        %571 = vrot.lane.b32.xlu0 %v195, 64
        %v572 = vpop.permute.xlu0 %571
        %573 = vrot.lane.b32.xlu0 %v196, 64
        %v574 = vpop.permute.xlu0 %573
        %v583 = vadd.f32 %v463, %v560
        %v584 = vadd.f32 %v464, %v562
        %v585 = vadd.f32 %v465, %v564
        %v586 = vadd.f32 %v466, %v566
        %v587 = vadd.f32 %v467, %v568
        %v588 = vadd.f32 %v468, %v570
        %v589 = vadd.f32 %v469, %v572
        %v590 = vadd.f32 %v470, %v574
        %599 = vrot.lane.b32.xlu0 %v503, 16
        %v600 = vpop.permute.xlu0 %599
        %601 = vrot.lane.b32.xlu0 %v504, 16
        %v602 = vpop.permute.xlu0 %601
        %603 = vrot.lane.b32.xlu0 %v505, 16
        %v604 = vpop.permute.xlu0 %603
        %605 = vrot.lane.b32.xlu0 %v506, 16
        %v606 = vpop.permute.xlu0 %605
        %607 = vrot.lane.b32.xlu0 %v507, 16
        %v608 = vpop.permute.xlu0 %607
        %609 = vrot.lane.b32.xlu0 %v508, 16
        %v610 = vpop.permute.xlu0 %609
        %611 = vrot.lane.b32.xlu0 %v509, 16
        %v612 = vpop.permute.xlu0 %611
        %613 = vrot.lane.b32.xlu0 %v510, 16
        %v614 = vpop.permute.xlu0 %613
        %631 = vrot.lane.b32.xlu0 %v543, 48
        %v632 = vpop.permute.xlu0 %631
        %633 = vrot.lane.b32.xlu0 %v544, 48
        %v634 = vpop.permute.xlu0 %633
        %635 = vrot.lane.b32.xlu0 %v545, 48
        %v636 = vpop.permute.xlu0 %635
        %637 = vrot.lane.b32.xlu0 %v546, 48
        %v638 = vpop.permute.xlu0 %637
        %639 = vrot.lane.b32.xlu0 %v547, 48
        %v640 = vpop.permute.xlu0 %639
        %641 = vrot.lane.b32.xlu0 %v548, 48
        %v642 = vpop.permute.xlu0 %641
        %643 = vrot.lane.b32.xlu0 %v549, 48
        %v644 = vpop.permute.xlu0 %643
        %645 = vrot.lane.b32.xlu0 %v550, 48
        %v646 = vpop.permute.xlu0 %645
        %663 = vrot.lane.b32.xlu0 %v551, 48
        %v664 = vpop.permute.xlu0 %663
        %665 = vrot.lane.b32.xlu0 %v552, 48
        %v666 = vpop.permute.xlu0 %665
        %667 = vrot.lane.b32.xlu0 %v553, 48
        %v668 = vpop.permute.xlu0 %667
        %669 = vrot.lane.b32.xlu0 %v554, 48
        %v670 = vpop.permute.xlu0 %669
        %671 = vrot.lane.b32.xlu0 %v555, 48
        %v672 = vpop.permute.xlu0 %671
        %673 = vrot.lane.b32.xlu0 %v556, 48
        %v674 = vpop.permute.xlu0 %673
        %675 = vrot.lane.b32.xlu0 %v557, 48
        %v676 = vpop.permute.xlu0 %675
        %677 = vrot.lane.b32.xlu0 %v558, 48
        %v678 = vpop.permute.xlu0 %677
        %695 = vrot.lane.b32.xlu0 %v583, 16
        %v696 = vpop.permute.xlu0 %695
        %697 = vrot.lane.b32.xlu0 %v584, 16
        %v698 = vpop.permute.xlu0 %697
        %699 = vrot.lane.b32.xlu0 %v585, 16
        %v700 = vpop.permute.xlu0 %699
        %701 = vrot.lane.b32.xlu0 %v586, 16
        %v702 = vpop.permute.xlu0 %701
        %703 = vrot.lane.b32.xlu0 %v587, 16
        %v704 = vpop.permute.xlu0 %703
        %705 = vrot.lane.b32.xlu0 %v588, 16
        %v706 = vpop.permute.xlu0 %705
        %707 = vrot.lane.b32.xlu0 %v589, 16
        %v708 = vpop.permute.xlu0 %707
        %709 = vrot.lane.b32.xlu0 %v590, 16
        %v710 = vpop.permute.xlu0 %709
        %vm719 = vcmask 130048
        %v720 = vsel %vm719, %v520, %v600
        %v721 = vsel %vm719, %v522, %v602
        %v722 = vsel %vm719, %v524, %v604
        %v723 = vsel %vm719, %v526, %v606
        %v724 = vsel %vm719, %v528, %v608
        %v725 = vsel %vm719, %v530, %v610
        %v726 = vsel %vm719, %v532, %v612
        %v727 = vsel %vm719, %v534, %v614
        %v728 = vsel %vm197, %v720, %v503
        %v729 = vsel %vm197, %v721, %v504
        %v730 = vsel %vm197, %v722, %v505
        %v731 = vsel %vm197, %v723, %v506
        %v732 = vsel %vm197, %v724, %v507
        %v733 = vsel %vm197, %v725, %v508
        %v734 = vsel %vm197, %v726, %v509
        %v735 = vsel %vm197, %v727, %v510
        %vm736 = vcmask 392192
        %v737 = vsel %vm736, %v728, %v632
        %v738 = vsel %vm736, %v729, %v634
        %v739 = vsel %vm736, %v730, %v636
        %v740 = vsel %vm736, %v731, %v638
        %v741 = vsel %vm736, %v732, %v640
        %v742 = vsel %vm736, %v733, %v642
        %v743 = vsel %vm736, %v734, %v644
        %v744 = vsel %vm736, %v735, %v646
        %vm745 = vcmask 523264
        %v746 = vsel %vm745, %v737, %v664
        %v747 = vsel %vm745, %v738, %v666
        %v748 = vsel %vm745, %v739, %v668
        %v749 = vsel %vm745, %v740, %v670
        %v750 = vsel %vm745, %v741, %v672
        %v751 = vsel %vm745, %v742, %v674
        %v752 = vsel %vm745, %v743, %v676
        %v753 = vsel %vm745, %v744, %v678
        %vm754 = vcmask 654336
        %v755 = vsel %vm754, %v746, %v696
        %v756 = vsel %vm754, %v747, %v698
        %v757 = vsel %vm754, %v748, %v700
        %v758 = vsel %vm754, %v749, %v702
        %v759 = vsel %vm754, %v750, %v704
        %v760 = vsel %vm754, %v751, %v706
        %v761 = vsel %vm754, %v752, %v708
        %v762 = vsel %vm754, %v753, %v710
        %vm763 = vcmask 785408
        %764 = vst.msk [vmem:[%s178] sm:$0xff] %vm763, %v755
        %765 = vst.msk [vmem:[%s178 + $0x8] sm:$0xff] %vm763, %v756
        %766 = vst.msk [vmem:[%s178 + $0x10] sm:$0xff] %vm763, %v757
        %767 = vst.msk [vmem:[%s178 + $0x18] sm:$0xff] %vm763, %v758
        %768 = vst.msk [vmem:[%s178 + $0x20] sm:$0xff] %vm763, %v759
        %769 = vst.msk [vmem:[%s178 + $0x28] sm:$0xff] %vm763, %v760
        %770 = vst.msk [vmem:[%s178 + $0x30] sm:$0xff] %vm763, %v761
        %771 = vst.msk [vmem:[%s178 + $0x38] sm:$0xff] %vm763, %v762
        %s772 = sand.u32 %s98, 1
        %s773 = scalar_lea.sflag [#allocation4], %s772
        %s774 = sand.u32 %s98, 1
        %s775 = smul.addr %s774, 64
        %s776 = scalar_lea.vmem [#allocation3], %s775
        // Predicated region
        $region33: #{first_cell_forward.11} parent=31 // pred_check
          %p777 = pneg %p108
        $region34: #{first_cell_forward.11} parent=31 // pred_check_branch
          %779 = sbr.rel (%p777) target = $region36
        $region35: #{first_cell_forward.11} parent=31 // pred_region
          %s781 = ssub.s32 1024, 1024
          %782 = vsyncadd %s773, %s781
          %s783 = smul.addr %s17, 8
          %s784 = smul.addr %s783, 128
          %s785 = scalar_lea.hbm %s3, %s784
          %s786 = sshll.u32 %s776, 4
          %s787 = int_to_ptr.vmem [resolvable:$true] %s786
          %792 = dma.vmem_to_hbm [thread:$0]  %s787, 1024, %s785, %s773, 128, 128, 8
        $region36: #{first_cell_forward.11} parent=31 // pred_fallthru
          _
      $region32: #{first_cell_forward.11} parent=5 // pred_fallthru
        _
      %p793 = scmp.le.s32.totalorder 2, %s12
      // Predicated region
      $region37: #{first_cell_forward.11} parent=5 // pred_check
        %p794 = pneg %p793
      $region38: #{first_cell_forward.11} parent=5 // pred_check_branch
        %796 = sbr.rel (%p794) target = $region40
      $region39: #{first_cell_forward.11} parent=5 // pred_region
        %s797 = ssub.s32 %s12, 2
        // Predicated region
        $region41: #{first_cell_forward.11} parent=39 // pred_check
          %p798 = pneg %p114
        $region42: #{first_cell_forward.11} parent=39 // pred_check_branch
          %800 = sbr.rel (%p798) target = $region44
        $region43: #{first_cell_forward.11} parent=39 // pred_region
          %s801 = sand.u32 %s99, 1
          %s802 = scalar_lea.sflag [#allocation4], %s801
          %s803 = sand.u32 %s99, 1
          %s804 = smul.addr %s803, 64
          %s805 = scalar_lea.vmem [#allocation3], %s804
          %806 = dma.done %s802, 1024
        $region44: #{first_cell_forward.11} parent=39 // pred_fallthru
          _
      $region40: #{first_cell_forward.11} parent=5 // pred_fallthru
        _
    $region6: #{first_cell_forward.11} parent=1 // loop_footer
      %s16 = sadd.s32 1, %s12
    $region7: #{first_cell_forward.11} parent=1 // loop_footer_branch
      %11 = sbr.rel target = $region3
    $region8: #{first_cell_forward.11} parent=1 // loop_exit
      _
    %807 = vsyncpa [#allocation4], 1
    %s808 = scalar_lea.sflag [#allocation4], 1
    %809 = vsyncpa %s808, 1

</llo_original>
